<compile_context>
chip_gen: v7x
topology: tpu7x:2x2x1
jax: 0.10.0
libtpu: 0.0.40
codegen_flags: <defaults>
</compile_context>

<pallas_src>
import math
import functools

import jax
import jax.numpy as jnp
from jax import lax
from jax.experimental import pallas as pl
from jax.experimental.pallas import tpu as pltpu


# ------------------------------ tiling helpers ------------------------------ #
_LANE_TILES = (512, 384, 256, 128)             # last-dim tiles (128-mult or full)
_SUB_TILES = (512, 256, 128, 64, 32, 16, 8)    # second-minor tiles (8-mult or full)
_Q_BLOCK_TILES = (512, 384, 256, 128, 64, 32, 16, 8)
_KV_BLOCK_TILES = (256, 128, 64, 32, 16, 8)

_NEG_INF = float("-inf")


def _pick_tile(dim, candidates, multiple_of=1):
    for c in candidates:
        if c <= dim and dim % c == 0 and c % multiple_of == 0:
            return c
    return dim  # fall back to the full (unblocked) dimension


def _vmem_budget():
    """Generation-aware scoped-VMEM limit: ~3/4 of physical, capped at 96MB.
    v5e/v6e (128MiB) -> 96MB; v7x (64MiB) -> 48MB; unknown -> 48MB."""
    cap = None
    try:
        info = pltpu.get_tpu_info()
        for name in ("vmem_capacity_bytes", "vmem_bytes", "vmem_size_bytes"):
            v = getattr(info, name, None)
            if isinstance(v, int) and v > 0:
                cap = v
                break
    except Exception:
        cap = None
    if cap is None:
        cap = 64 * 1024 * 1024  # conservative (v7x-sized) fallback
    return int(min(96 * 1024 * 1024, max(32 * 1024 * 1024, cap * 3 // 4)))


# --------------------------- output projection ------------------------------ #
def _matmul_kernel(x_ref, w_ref, o_ref, acc_ref):
    @pl.when(pl.program_id(2) == 0)
    def _init():
        acc_ref[...] = jnp.zeros_like(acc_ref)

    acc_ref[...] += jnp.dot(x_ref[...], w_ref[...],
                            preferred_element_type=jnp.float32)

    @pl.when(pl.program_id(2) == pl.num_programs(2) - 1)
    def _store():
        o_ref[...] = acc_ref[...].astype(o_ref.dtype)


def pallas_matmul(x2d, w, vmem_limit):
    """x2d: (M, K) @ w: (K, N) -> (M, N), tiled + pipelined."""
    M, K = x2d.shape
    K2, N = w.shape
    assert K == K2
    tm = _pick_tile(M, _SUB_TILES)
    tk = _pick_tile(K, _LANE_TILES)
    tn = _pick_tile(N, _LANE_TILES)
    return pl.pallas_call(
        _matmul_kernel,
        out_shape=jax.ShapeDtypeStruct((M, N), x2d.dtype),
        grid=(M // tm, N // tn, K // tk),
        in_specs=[
            pl.BlockSpec((tm, tk), lambda i, j, k: (i, k)),
            pl.BlockSpec((tk, tn), lambda i, j, k: (k, j)),
        ],
        out_specs=pl.BlockSpec((tm, tn), lambda i, j, k: (i, j)),
        scratch_shapes=[pltpu.VMEM((tm, tn), jnp.float32)],
        compiler_params=pltpu.CompilerParams(
            dimension_semantics=("parallel", "parallel", "arbitrary"),
            vmem_limit_bytes=vmem_limit),
        cost_estimate=pl.CostEstimate(
            flops=2 * M * N * K, transcendentals=0,
            bytes_accessed=(M * K + K * N + M * N) * x2d.dtype.itemsize),
    )(x2d, w)


# ------------------ QKV projection with fused rotary + scale ---------------- #
def _qkv_rope_kernel(x_ref, w_ref, cos_ref, sin_ref, o_ref, acc_ref,
                     *, head_dim, scale):
    s = pl.program_id(0)                 # 0 -> q, 1 -> k, 2 -> v
    last_k = pl.program_id(3) == pl.num_programs(3) - 1

    @pl.when(pl.program_id(3) == 0)
    def _init():
        acc_ref[...] = jnp.zeros_like(acc_ref)

    acc_ref[...] += jnp.dot(x_ref[...], w_ref[0],
                            preferred_element_type=jnp.float32)

    # v slab: plain store.
    @pl.when(jnp.logical_and(last_k, s == 2))
    def _store_v():
        o_ref[0] = acc_ref[...].astype(o_ref.dtype)

    # q / k slabs: apply rotary per head slab; fold 1/sqrt(Dh) into q only.
    @pl.when(jnp.logical_and(last_k, s < 2))
    def _store_qk():
        Dh = head_dim
        d2 = Dh // 2
        acc = acc_ref[...]                       # (tm, tn) f32
        cos = cos_ref[...]                       # (tm, d2) f32
        sin = sin_ref[...]
        qk_scale = jnp.where(s == 0, jnp.float32(scale), jnp.float32(1.0))
        parts = []
        for h in range(acc.shape[1] // Dh):      # heads within this N tile
            x1 = acc[:, h * Dh:h * Dh + d2]
            x2 = acc[:, h * Dh + d2:(h + 1) * Dh]
            parts.append(jnp.concatenate([x1 * cos + x2 * sin,
                                          x2 * cos - x1 * sin], axis=-1))
        rot = jnp.concatenate(parts, axis=-1) * qk_scale
        o_ref[0] = rot.astype(o_ref.dtype)


def qkv_rope_projection(x2d, w3, cos, sin, seq_len, head_dim, scale, vmem_limit):
    """x2d: (B*T, C), w3: (3, C, C) -> (3, B*T, C) = stacked [q_rot*scale, k_rot, v]."""
    M, K = x2d.shape
    three, K2, N = w3.shape
    assert three == 3 and K == K2 and M % seq_len == 0 and N % head_dim == 0
    d2 = head_dim // 2
    tm = _pick_tile(seq_len, _SUB_TILES)         # divides T (hence M = B*T)
    tk = _pick_tile(K, _LANE_TILES)
    tn = _pick_tile(N, _LANE_TILES, multiple_of=head_dim)   # head-slab aligned
    n_row_blocks = seq_len // tm                 # cos/sin row-block wraparound
    kernel = functools.partial(_qkv_rope_kernel, head_dim=head_dim, scale=scale)
    return pl.pallas_call(
        kernel,
        out_shape=jax.ShapeDtypeStruct((3, M, N), x2d.dtype),
        grid=(3, M // tm, N // tn, K // tk),
        in_specs=[
            pl.BlockSpec((tm, tk), lambda s, i, j, k: (i, k)),
            pl.BlockSpec((1, tk, tn), lambda s, i, j, k: (s, k, j)),
            pl.BlockSpec((tm, d2), lambda s, i, j, k: (i % n_row_blocks, 0)),
            pl.BlockSpec((tm, d2), lambda s, i, j, k: (i % n_row_blocks, 0)),
        ],
        out_specs=pl.BlockSpec((1, tm, tn), lambda s, i, j, k: (s, i, j)),
        scratch_shapes=[pltpu.VMEM((tm, tn), jnp.float32)],
        compiler_params=pltpu.CompilerParams(
            dimension_semantics=("parallel", "parallel", "parallel", "arbitrary"),
            vmem_limit_bytes=vmem_limit),
        cost_estimate=pl.CostEstimate(
            flops=2 * 3 * M * N * K, transcendentals=0,
            bytes_accessed=(3 * M * K + 3 * K * N + 3 * M * N) * x2d.dtype.itemsize),
    )(x2d, w3, cos, sin)


# ---------------- flash-style causal attention (triangular grid) ------------ #
def _flash_attn_kernel(qi_tab, ki_tab, q_ref, k_ref, v_ref, o_ref,
                       qh_sc, m_sc, l_sc, acc_sc,
                       *, n_head, head_dim, blk_q, blk_kv):
    H, Dh = n_head, head_dim
    t = pl.program_id(1)
    qi = qi_tab[t]
    ki = ki_tab[t]
    steps_per_q = blk_q // blk_kv

    # New q block: reset online-softmax state, stage per-head q slabs (rotary
    # and 1/sqrt(Dh) were already applied by the QKV projection epilogue).
    @pl.when(ki == 0)
    def _init():
        m_sc[...] = jnp.full(m_sc.shape, _NEG_INF, dtype=m_sc.dtype)
        l_sc[...] = jnp.zeros(l_sc.shape, dtype=l_sc.dtype)
        acc_sc[...] = jnp.zeros(acc_sc.shape, dtype=acc_sc.dtype)
        for h in range(H):
            qh_sc[h] = q_ref[0, 0, :, h * Dh:(h + 1) * Dh]

    def _online_update(masked):
        if masked:
            row = qi * blk_q + lax.broadcasted_iota(jnp.int32, (blk_q, blk_kv), 0)
            col = ki * blk_kv + lax.broadcasted_iota(jnp.int32, (blk_q, blk_kv), 1)
            keep = col <= row
        for h in range(H):
            kh = k_ref[0, 0, :, h * Dh:(h + 1) * Dh]          # (blk_kv, Dh)
            vh = v_ref[0, 0, :, h * Dh:(h + 1) * Dh]
            s = lax.dot_general(qh_sc[h], kh, (((1,), (1,)), ((), ())),
                                preferred_element_type=jnp.float32)  # (blk_q, blk_kv)
            if masked:
                s = jnp.where(keep, s, _NEG_INF)
            m_prev = m_sc[h]                                   # (blk_q, 1)
            m_new = jnp.maximum(m_prev, s.max(axis=-1, keepdims=True))
            alpha = jnp.exp(m_prev - m_new)
            p = jnp.exp(s - m_new)
            l_sc[h] = alpha * l_sc[h] + p.sum(axis=-1, keepdims=True)
            acc_sc[h] = alpha * acc_sc[h] + jnp.dot(
                p.astype(vh.dtype), vh, preferred_element_type=jnp.float32)
            m_sc[h] = m_new

    # Triangular schedule -> every step is live.  Only blocks that cross the
    # causal diagonal pay for the iota + select; interior blocks are unmasked.
    crosses_diag = (ki * blk_kv + blk_kv - 1) > (qi * blk_q)

    @pl.when(crosses_diag)
    def _masked():
        _online_update(True)

    @pl.when(jnp.logical_not(crosses_diag))
    def _unmasked():
        _online_update(False)

    # Last visible kv block for this q block: normalize + lane-dense store.
    @pl.when(ki == (qi + 1) * steps_per_q - 1)
    def _finalize():
        outs = []
        for h in range(H):
            # EUP reciprocal on (blk_q, 1); ~1e-3 rel. err (fine for training).
            inv_l = pl.reciprocal(l_sc[h], approx=True)
            outs.append((acc_sc[h] * inv_l).astype(o_ref.dtype))
        o_ref[0] = jnp.concatenate(outs, axis=-1)              # (blk_q, C)


def flash_attention(qkv3, n_head, vmem_limit):
    """qkv3: (3, B, T, C) with rotary + 1/sqrt(Dh) already folded into q/k."""
    _, B, T, C = qkv3.shape
    Dh = C // n_head

    blk_q = _pick_tile(T, _Q_BLOCK_TILES)
    kv_cands = [c for c in _KV_BLOCK_TILES
                if c <= blk_q and blk_q % c == 0 and T % c == 0]
    blk_kv = kv_cands[0] if kv_cands else blk_q
    nq = T // blk_q
    r = blk_q // blk_kv

    # Lower-triangular (qi, ki) schedule: causally-dead kv blocks are never
    # scheduled, never DMA'd, and there are no dead tail grid steps.
    qi_list, ki_list = [], []
    for qi in range(nq):
        for ki in range((qi + 1) * r):
            qi_list.append(qi)
            ki_list.append(ki)
    total_steps = len(qi_list)
    qi_tab = jnp.array(qi_list, dtype=jnp.int32)
    ki_tab = jnp.array(ki_list, dtype=jnp.int32)

    kernel = functools.partial(_flash_attn_kernel, n_head=n_head, head_dim=Dh,
                               blk_q=blk_q, blk_kv=blk_kv)

    q_spec = pl.BlockSpec((1, 1, blk_q, C), lambda b, t, qt, kt: (0, b, qt[t], 0))
    k_spec = pl.BlockSpec((1, 1, blk_kv, C), lambda b, t, qt, kt: (1, b, kt[t], 0))
    v_spec = pl.BlockSpec((1, 1, blk_kv, C), lambda b, t, qt, kt: (2, b, kt[t], 0))
    o_spec = pl.BlockSpec((1, blk_q, C), lambda b, t, qt, kt: (b, qt[t], 0))

    itemsize = qkv3.dtype.itemsize
    flops = 2 * B * n_head * T * T * Dh            # causal: ~half of dense 4BHT^2Dh
    trans = B * n_head * T * T // 2
    bytes_accessed = (2 * B * T * C + 2 * B * C * blk_kv * total_steps) * itemsize

    return pl.pallas_call(
        kernel,
        out_shape=jax.ShapeDtypeStruct((B, T, C), qkv3.dtype),
        grid_spec=pltpu.PrefetchScalarGridSpec(
            num_scalar_prefetch=2,
            grid=(B, total_steps),
            in_specs=[q_spec, k_spec, v_spec],
            out_specs=o_spec,
            scratch_shapes=[
                pltpu.VMEM((n_head, blk_q, Dh), qkv3.dtype),   # staged q slabs
                pltpu.VMEM((n_head, blk_q, 1), jnp.float32),   # running max m
                pltpu.VMEM((n_head, blk_q, 1), jnp.float32),   # running sum l
                pltpu.VMEM((n_head, blk_q, Dh), jnp.float32),  # output accum
            ]),
        compiler_params=pltpu.CompilerParams(
            dimension_semantics=("parallel", "arbitrary"),
            vmem_limit_bytes=vmem_limit),
        cost_estimate=pl.CostEstimate(flops=flops, transcendentals=trans,
                                      bytes_accessed=bytes_accessed),
    )(qi_tab, ki_tab, qkv3, qkv3, qkv3)


# -------------------------------- module glue -------------------------------- #
def rotary_tables(T, head_dim, base=10000.0):
    inv_freq = 1.0 / (base ** (jnp.arange(0, head_dim, 2, dtype=jnp.float32) / head_dim))
    t = jnp.arange(T, dtype=jnp.float32)
    freqs = jnp.outer(t, inv_freq)                 # (T, head_dim//2)
    return jnp.cos(freqs), jnp.sin(freqs)


def prepare_qkv_weight(w_attn):
    """One-time relayout (C, 3C) -> (3, C, C); do at init, NOT per forward."""
    C = w_attn.shape[0]
    return jnp.transpose(w_attn.reshape(C, 3, C), (1, 0, 2))


def causal_self_attention(x, w_qkv3, w_proj, n_head):
    """x: (B, T, C); w_qkv3: (3, C, C) from prepare_qkv_weight; w_proj: (C, C)."""
    B, T, C = x.shape
    Dh = C // n_head
    assert C % n_head == 0 and Dh % 2 == 0
    scale = 1.0 / math.sqrt(Dh)
    vmem_limit = _vmem_budget()

    cos, sin = rotary_tables(T, Dh)
    qkv3 = qkv_rope_projection(x.reshape(B * T, C), w_qkv3, cos, sin,
                               T, Dh, scale, vmem_limit)       # (3, B*T, C)
    qkv3 = qkv3.reshape(3, B, T, C)                            # free reshape
    y = flash_attention(qkv3, n_head, vmem_limit)              # (B, T, C)
    y = pallas_matmul(y.reshape(B * T, C), w_proj, vmem_limit)
    return y.reshape(B, T, C)


# ----------------------------- pure-JAX reference ----------------------------- #
def reference(x, w_attn, w_proj, n_head):
    B, T, C = x.shape
    Dh = C // n_head
    qkv = x @ w_attn
    q, k, v = jnp.split(qkv, 3, axis=-1)
    q = q.reshape(B, T, n_head, Dh)
    k = k.reshape(B, T, n_head, Dh)
    v = v.reshape(B, T, n_head, Dh)
    cos, sin = rotary_tables(T, Dh)
    cos = cos[None, :, None, :]
    sin = sin[None, :, None, :]
    d2 = Dh // 2

    def rot(u):
        u1, u2 = u[..., :d2], u[..., d2:]
        return jnp.concatenate([u1 * cos + u2 * sin, -u1 * sin + u2 * cos], axis=-1)

    q, k = rot(q), rot(k)
    q = q.transpose(0, 2, 1, 3)
    k = k.transpose(0, 2, 1, 3)
    v = v.transpose(0, 2, 1, 3)
    s = jnp.einsum('bhqd,bhkd->bhqk', q, k) / math.sqrt(Dh)
    mask = jnp.tril(jnp.ones((T, T), dtype=bool))
    s = jnp.where(mask, s, -jnp.inf)
    p = jax.nn.softmax(s, axis=-1)
    y = jnp.einsum('bhqk,bhkd->bhqd', p, v)
    y = y.transpose(0, 2, 1, 3).reshape(B, T, C)
    return y @ w_proj


# ------------------------------------ main ------------------------------------ #
if __name__ == "__main__":
    B, T, n_head, n_embd = 2, 8, 4, 32   # head_dim = 8

    key = jax.random.PRNGKey(0)
    kx, kw1, kw2 = jax.random.split(key, 3)
    x = jax.random.normal(kx, (B, T, n_embd), dtype=jnp.float32)
    # nn.Linear weights stored already transposed: (in, out)
    w_attn = 0.02 * jax.random.normal(kw1, (n_embd, 3 * n_embd), dtype=jnp.float32)
    w_proj = 0.02 * jax.random.normal(kw2, (n_embd, n_embd), dtype=jnp.float32)

    # One-time weight relayout, hoisted out of the forward (init-time cost).
    w_qkv3 = prepare_qkv_weight(w_attn)

    fwd = jax.jit(functools.partial(causal_self_attention, n_head=n_head))
    out = jax.block_until_ready(fwd(x, w_qkv3, w_proj))

    ref = reference(x, w_attn, w_proj, n_head)
    assert out.shape == (B, T, n_embd)
    assert jnp.allclose(out, ref, atol=1e-2, rtol=1e-2), "mismatch vs reference"

    print("KERNEL_OK")
</pallas_src>

<mosaic_0001>
module attributes {stable_mosaic.version = 11 : i64} {
  func.func @_qkv_rope_kernel(%arg0: i32, %arg1: i32, %arg2: i32, %arg3: i32, %arg4: memref<8x32xf32, #tpu.memory_space<vmem>>, %arg5: memref<1x32x32xf32, #tpu.memory_space<vmem>>, %arg6: memref<8x4xf32, #tpu.memory_space<vmem>>, %arg7: memref<8x4xf32, #tpu.memory_space<vmem>>, %arg8: memref<1x8x32xf32, #tpu.memory_space<vmem>>, %arg9: memref<8x32xf32, #tpu.memory_space<vmem>>) attributes {dimension_semantics = [#tpu.dimension_semantics<parallel>, #tpu.dimension_semantics<parallel>, #tpu.dimension_semantics<parallel>, #tpu.dimension_semantics<arbitrary>], iteration_bounds = array<i64: 3, 2, 1, 1>, scalar_prefetch = 0 : i64, scratch_operands = 1 : i64, tpu.core_type = #tpu.core_type<tc>, window_params = [{transform_indices = @transform_0, window_bounds = array<i64: 8, 32>}, {transform_indices = @transform_1, window_bounds = array<i64: 1, 32, 32>}, {transform_indices = @transform_2, window_bounds = array<i64: 8, 4>}, {transform_indices = @transform_3, window_bounds = array<i64: 8, 4>}, {transform_indices = @transform_4, window_bounds = array<i64: 1, 8, 32>}]} {
    %c0_i32 = arith.constant 0 : i32
    %0 = arith.cmpi eq, %arg3, %c0_i32 : i32
    %c0_i32_0 = arith.constant 0 : i32
    %1 = arith.cmpi eq, %arg3, %c0_i32_0 : i32
    %2 = arith.extui %1 : i1 to i32
    %c0_i32_1 = arith.constant 0 : i32
    %3 = arith.cmpi ne, %2, %c0_i32_1 : i32
    scf.if %3 {
      %cst_13 = arith.constant 0.000000e+00 : f32
      %19 = vector.broadcast %cst_13 : f32 to vector<8x32xf32>
      %c0_14 = arith.constant 0 : index
      %c0_15 = arith.constant 0 : index
      %20 = vector.load %arg9[%c0_14, %c0_15] : memref<8x32xf32, #tpu.memory_space<vmem>>, vector<8x32xf32>
      tpu.vector_store %arg9[%c0_14, %c0_15], %19 {strides = array<i32>} : memref<8x32xf32, #tpu.memory_space<vmem>>, vector<8x32xf32>,
    } else {
    }
    %c0 = arith.constant 0 : index
    %c0_2 = arith.constant 0 : index
    %4 = vector.load %arg9[%c0, %c0_2] : memref<8x32xf32, #tpu.memory_space<vmem>>, vector<8x32xf32>
    %c0_3 = arith.constant 0 : index
    %c0_4 = arith.constant 0 : index
    %5 = vector.load %arg4[%c0_3, %c0_4] : memref<8x32xf32, #tpu.memory_space<vmem>>, vector<8x32xf32>
    %c0_5 = arith.constant 0 : index
    %c0_6 = arith.constant 0 : index
    %c0_7 = arith.constant 0 : index
    %6 = vector.load %arg5[%c0_5, %c0_6, %c0_7] : memref<1x32x32xf32, #tpu.memory_space<vmem>>, vector<1x32x32xf32>
    %7 = vector.shape_cast %6 : vector<1x32x32xf32> to vector<32x32xf32>
    %cst = arith.constant dense<0.000000e+00> : vector<8x32xf32>
    %8 = tpu.matmul %5, %7, %cst {dimension_numbers = #tpu.dot_dimension_numbers<[1], [0], [0], [1], [0, 0, 1, 1], [], []>} : vector<8x32xf32>, vector<32x32xf32>, vector<8x32xf32> -> vector<8x32xf32>
    %9 = arith.addf %4, %8 : vector<8x32xf32>
    %c0_8 = arith.constant 0 : index
    %c0_9 = arith.constant 0 : index
    %10 = vector.load %arg9[%c0_8, %c0_9] : memref<8x32xf32, #tpu.memory_space<vmem>>, vector<8x32xf32>
    tpu.vector_store %arg9[%c0_8, %c0_9], %9 {strides = array<i32>} : memref<8x32xf32, #tpu.memory_space<vmem>>, vector<8x32xf32>,
    %c2_i32 = arith.constant 2 : i32
    %11 = arith.cmpi eq, %arg0, %c2_i32 : i32
    %12 = arith.andi %0, %11 : i1
    %13 = arith.extui %12 : i1 to i32
    %c0_i32_10 = arith.constant 0 : i32
    %14 = arith.cmpi ne, %13, %c0_i32_10 : i32
    scf.if %14 {
      %c0_13 = arith.constant 0 : index
      %c0_14 = arith.constant 0 : index
      %19 = vector.load %arg9[%c0_13, %c0_14] : memref<8x32xf32, #tpu.memory_space<vmem>>, vector<8x32xf32>
      %c0_15 = arith.constant 0 : index
      %c0_16 = arith.constant 0 : index
      %c0_17 = arith.constant 0 : index
      %20 = vector.load %arg8[%c0_15, %c0_16, %c0_17] : memref<1x8x32xf32, #tpu.memory_space<vmem>>, vector<1x8x32xf32>
      %21 = vector.shape_cast %20 : vector<1x8x32xf32> to vector<8x32xf32>
      %22 = vector.shape_cast %19 : vector<8x32xf32> to vector<1x8x32xf32>
      tpu.vector_store %arg8[%c0_15, %c0_16, %c0_17], %22 {strides = array<i32>} : memref<1x8x32xf32, #tpu.memory_space<vmem>>, vector<1x8x32xf32>,
    } else {
    }
    %c2_i32_11 = arith.constant 2 : i32
    %15 = arith.cmpi slt, %arg0, %c2_i32_11 : i32
    %16 = arith.andi %0, %15 : i1
    %17 = arith.extui %16 : i1 to i32
    %c0_i32_12 = arith.constant 0 : i32
    %18 = arith.cmpi ne, %17, %c0_i32_12 : i32
    scf.if %18 {
      %c0_13 = arith.constant 0 : index
      %c0_14 = arith.constant 0 : index
      %19 = vector.load %arg9[%c0_13, %c0_14] : memref<8x32xf32, #tpu.memory_space<vmem>>, vector<8x32xf32>
      %c0_15 = arith.constant 0 : index
      %c0_16 = arith.constant 0 : index
      %20 = vector.load %arg6[%c0_15, %c0_16] : memref<8x4xf32, #tpu.memory_space<vmem>>, vector<8x4xf32>
      %c0_17 = arith.constant 0 : index
      %c0_18 = arith.constant 0 : index
      %21 = vector.load %arg7[%c0_17, %c0_18] : memref<8x4xf32, #tpu.memory_space<vmem>>, vector<8x4xf32>
      %c0_i32_19 = arith.constant 0 : i32
      %22 = arith.cmpi eq, %arg0, %c0_i32_19 : i32
      %cst_20 = arith.constant 0.353553385 : f32
      %cst_21 = arith.constant 1.000000e+00 : f32
      %23 = arith.select %22, %cst_20, %cst_21 : f32
      %24 = vector.extract_strided_slice %19 {offsets = [0, 0], sizes = [8, 4], strides = [1, 1]} : vector<8x32xf32> to vector<8x4xf32>
      %25 = vector.extract_strided_slice %19 {offsets = [0, 4], sizes = [8, 4], strides = [1, 1]} : vector<8x32xf32> to vector<8x4xf32>
      %26 = arith.mulf %24, %20 : vector<8x4xf32>
      %27 = arith.mulf %25, %21 : vector<8x4xf32>
      %28 = arith.addf %26, %27 : vector<8x4xf32>
      %29 = arith.mulf %25, %20 : vector<8x4xf32>
      %30 = arith.mulf %24, %21 : vector<8x4xf32>
      %31 = arith.subf %29, %30 : vector<8x4xf32>
      %32 = tpu.concatenate %28, %31 in 1 : vector<8x4xf32>, vector<8x4xf32> -> vector<8x8xf32>
      %33 = vector.extract_strided_slice %19 {offsets = [0, 8], sizes = [8, 4], strides = [1, 1]} : vector<8x32xf32> to vector<8x4xf32>
      %34 = vector.extract_strided_slice %19 {offsets = [0, 12], sizes = [8, 4], strides = [1, 1]} : vector<8x32xf32> to vector<8x4xf32>
      %35 = arith.mulf %33, %20 : vector<8x4xf32>
      %36 = arith.mulf %34, %21 : vector<8x4xf32>
      %37 = arith.addf %35, %36 : vector<8x4xf32>
      %38 = arith.mulf %34, %20 : vector<8x4xf32>
      %39 = arith.mulf %33, %21 : vector<8x4xf32>
      %40 = arith.subf %38, %39 : vector<8x4xf32>
      %41 = tpu.concatenate %37, %40 in 1 : vector<8x4xf32>, vector<8x4xf32> -> vector<8x8xf32>
      %42 = vector.extract_strided_slice %19 {offsets = [0, 16], sizes = [8, 4], strides = [1, 1]} : vector<8x32xf32> to vector<8x4xf32>
      %43 = vector.extract_strided_slice %19 {offsets = [0, 20], sizes = [8, 4], strides = [1, 1]} : vector<8x32xf32> to vector<8x4xf32>
      %44 = arith.mulf %42, %20 : vector<8x4xf32>
      %45 = arith.mulf %43, %21 : vector<8x4xf32>
      %46 = arith.addf %44, %45 : vector<8x4xf32>
      %47 = arith.mulf %43, %20 : vector<8x4xf32>
      %48 = arith.mulf %42, %21 : vector<8x4xf32>
      %49 = arith.subf %47, %48 : vector<8x4xf32>
      %50 = tpu.concatenate %46, %49 in 1 : vector<8x4xf32>, vector<8x4xf32> -> vector<8x8xf32>
      %51 = vector.extract_strided_slice %19 {offsets = [0, 24], sizes = [8, 4], strides = [1, 1]} : vector<8x32xf32> to vector<8x4xf32>
      %52 = vector.extract_strided_slice %19 {offsets = [0, 28], sizes = [8, 4], strides = [1, 1]} : vector<8x32xf32> to vector<8x4xf32>
      %53 = arith.mulf %51, %20 : vector<8x4xf32>
      %54 = arith.mulf %52, %21 : vector<8x4xf32>
      %55 = arith.addf %53, %54 : vector<8x4xf32>
      %56 = arith.mulf %52, %20 : vector<8x4xf32>
      %57 = arith.mulf %51, %21 : vector<8x4xf32>
      %58 = arith.subf %56, %57 : vector<8x4xf32>
      %59 = tpu.concatenate %55, %58 in 1 : vector<8x4xf32>, vector<8x4xf32> -> vector<8x8xf32>
      %60 = tpu.concatenate %32, %41, %50, %59 in 1 : vector<8x8xf32>, vector<8x8xf32>, vector<8x8xf32>, vector<8x8xf32> -> vector<8x32xf32>
      %61 = vector.broadcast %23 : f32 to vector<8x32xf32>
      %62 = arith.mulf %60, %61 : vector<8x32xf32>
      %c0_22 = arith.constant 0 : index
      %c0_23 = arith.constant 0 : index
      %c0_24 = arith.constant 0 : index
      %63 = vector.load %arg8[%c0_22, %c0_23, %c0_24] : memref<1x8x32xf32, #tpu.memory_space<vmem>>, vector<1x8x32xf32>
      %64 = vector.shape_cast %63 : vector<1x8x32xf32> to vector<8x32xf32>
      %65 = vector.shape_cast %62 : vector<8x32xf32> to vector<1x8x32xf32>
      tpu.vector_store %arg8[%c0_22, %c0_23, %c0_24], %65 {strides = array<i32>} : memref<1x8x32xf32, #tpu.memory_space<vmem>>, vector<1x8x32xf32>,
    } else {
    }
    return
  }
  func.func @transform_0(%arg0: i32, %arg1: i32, %arg2: i32, %arg3: i32) -> (i32, i32) {
    %c0_i32 = arith.constant 0 : i32
    return %arg1, %arg3 : i32, i32
  }
  func.func @transform_1(%arg0: i32, %arg1: i32, %arg2: i32, %arg3: i32) -> (i32, i32, i32) {
    %c0_i32 = arith.constant 0 : i32
    return %arg0, %arg3, %arg2 : i32, i32, i32
  }
  func.func @transform_2(%arg0: i32, %arg1: i32, %arg2: i32, %arg3: i32) -> (i32, i32) {
    %c1_i32 = arith.constant 1 : i32
    %c0_i32 = arith.constant 0 : i32
    %0 = arith.cmpi eq, %c1_i32, %c0_i32 : i32
    %c1_i32_0 = arith.constant 1 : i32
    %1 = arith.select %0, %c1_i32_0, %c1_i32 : i32
    %2 = arith.remsi %arg1, %1 : i32
    %c0_i32_1 = arith.constant 0 : i32
    %3 = arith.cmpi ne, %2, %c0_i32_1 : i32
    %c0_i32_2 = arith.constant 0 : i32
    %4 = arith.cmpi slt, %2, %c0_i32_2 : i32
    %c0_i32_3 = arith.constant 0 : i32
    %5 = arith.cmpi slt, %1, %c0_i32_3 : i32
    %6 = arith.xori %4, %5 : i1
    %7 = arith.andi %6, %3 : i1
    %8 = arith.addi %2, %1 : i32
    %9 = arith.select %7, %8, %2 : i32
    %c0_i32_4 = arith.constant 0 : i32
    %c0_i32_5 = arith.constant 0 : i32
    return %9, %c0_i32_4 : i32, i32
  }
  func.func @transform_3(%arg0: i32, %arg1: i32, %arg2: i32, %arg3: i32) -> (i32, i32) {
    %c1_i32 = arith.constant 1 : i32
    %c0_i32 = arith.constant 0 : i32
    %0 = arith.cmpi eq, %c1_i32, %c0_i32 : i32
    %c1_i32_0 = arith.constant 1 : i32
    %1 = arith.select %0, %c1_i32_0, %c1_i32 : i32
    %2 = arith.remsi %arg1, %1 : i32
    %c0_i32_1 = arith.constant 0 : i32
    %3 = arith.cmpi ne, %2, %c0_i32_1 : i32
    %c0_i32_2 = arith.constant 0 : i32
    %4 = arith.cmpi slt, %2, %c0_i32_2 : i32
    %c0_i32_3 = arith.constant 0 : i32
    %5 = arith.cmpi slt, %1, %c0_i32_3 : i32
    %6 = arith.xori %4, %5 : i1
    %7 = arith.andi %6, %3 : i1
    %8 = arith.addi %2, %1 : i32
    %9 = arith.select %7, %8, %2 : i32
    %c0_i32_4 = arith.constant 0 : i32
    %c0_i32_5 = arith.constant 0 : i32
    return %9, %c0_i32_4 : i32, i32
  }
  func.func @transform_4(%arg0: i32, %arg1: i32, %arg2: i32, %arg3: i32) -> (i32, i32, i32) {
    %c0_i32 = arith.constant 0 : i32
    return %arg0, %arg1, %arg2 : i32, i32, i32
  }
}

module attributes {stable_mosaic.version = 11 : i64} {
  func.func @_flash_attn_kernel(%arg0: i32, %arg1: i32, %arg2: memref<1xi32, #tpu.memory_space<smem>>, %arg3: memref<1xi32, #tpu.memory_space<smem>>, %arg4: memref<1x1x8x32xf32, #tpu.memory_space<vmem>>, %arg5: memref<1x1x8x32xf32, #tpu.memory_space<vmem>>, %arg6: memref<1x1x8x32xf32, #tpu.memory_space<vmem>>, %arg7: memref<1x8x32xf32, #tpu.memory_space<vmem>>, %arg8: memref<4x8x8xf32, #tpu.memory_space<vmem>>, %arg9: memref<4x8x1xf32, #tpu.memory_space<vmem>>, %arg10: memref<4x8x1xf32, #tpu.memory_space<vmem>>, %arg11: memref<4x8x8xf32, #tpu.memory_space<vmem>>) attributes {dimension_semantics = [#tpu.dimension_semantics<parallel>, #tpu.dimension_semantics<arbitrary>], iteration_bounds = array<i64: 2, 1>, scalar_prefetch = 2 : i64, scratch_operands = 4 : i64, tpu.core_type = #tpu.core_type<tc>, window_params = [{transform_indices = @transform_0, window_bounds = array<i64: 1, 1, 8, 32>}, {transform_indices = @transform_1, window_bounds = array<i64: 1, 1, 8, 32>}, {transform_indices = @transform_2, window_bounds = array<i64: 1, 1, 8, 32>}, {transform_indices = @transform_3, window_bounds = array<i64: 1, 8, 32>}]} {
    %0 = arith.index_cast %arg1 : i32 to index
    %1 = memref.load %arg2[%0] : memref<1xi32, #tpu.memory_space<smem>>
    %2 = arith.index_cast %arg1 : i32 to index
    %3 = memref.load %arg3[%2] : memref<1xi32, #tpu.memory_space<smem>>
    %c0_i32 = arith.constant 0 : i32
    %4 = arith.cmpi eq, %3, %c0_i32 : i32
    %5 = arith.extui %4 : i1 to i32
    %c0_i32_0 = arith.constant 0 : i32
    %6 = arith.cmpi ne, %5, %c0_i32_0 : i32
    scf.if %6 {
      %cst = arith.constant 0xFF800000 : f32
      %23 = vector.broadcast %cst : f32 to vector<4x8x1xf32>
      %c0 = arith.constant 0 : index
      %c0_9 = arith.constant 0 : index
      %c0_10 = arith.constant 0 : index
      %24 = vector.load %arg9[%c0, %c0_9, %c0_10] : memref<4x8x1xf32, #tpu.memory_space<vmem>>, vector<4x8x1xf32>
      tpu.vector_store %arg9[%c0, %c0_9, %c0_10], %23 {strides = array<i32>} : memref<4x8x1xf32, #tpu.memory_space<vmem>>, vector<4x8x1xf32>,
      %cst_11 = arith.constant 0.000000e+00 : f32
      %25 = vector.broadcast %cst_11 : f32 to vector<4x8x1xf32>
      %c0_12 = arith.constant 0 : index
      %c0_13 = arith.constant 0 : index
      %c0_14 = arith.constant 0 : index
      %26 = vector.load %arg10[%c0_12, %c0_13, %c0_14] : memref<4x8x1xf32, #tpu.memory_space<vmem>>, vector<4x8x1xf32>
      tpu.vector_store %arg10[%c0_12, %c0_13, %c0_14], %25 {strides = array<i32>} : memref<4x8x1xf32, #tpu.memory_space<vmem>>, vector<4x8x1xf32>,
      %cst_15 = arith.constant 0.000000e+00 : f32
      %27 = vector.broadcast %cst_15 : f32 to vector<4x8x8xf32>
      %c0_16 = arith.constant 0 : index
      %c0_17 = arith.constant 0 : index
      %c0_18 = arith.constant 0 : index
      %28 = vector.load %arg11[%c0_16, %c0_17, %c0_18] : memref<4x8x8xf32, #tpu.memory_space<vmem>>, vector<4x8x8xf32>
      tpu.vector_store %arg11[%c0_16, %c0_17, %c0_18], %27 {strides = array<i32>} : memref<4x8x8xf32, #tpu.memory_space<vmem>>, vector<4x8x8xf32>,
      %c0_19 = arith.constant 0 : index
      %c0_20 = arith.constant 0 : index
      %c0_21 = arith.constant 0 : index
      %c0_22 = arith.constant 0 : index
      %29 = vector.load %arg4[%c0_19, %c0_20, %c0_21, %c0_22] : memref<1x1x8x32xf32, #tpu.memory_space<vmem>>, vector<1x1x8x8xf32>
      %30 = vector.shape_cast %29 : vector<1x1x8x8xf32> to vector<8x8xf32>
      %c0_23 = arith.constant 0 : index
      %c0_24 = arith.constant 0 : index
      %c0_25 = arith.constant 0 : index
      %31 = vector.load %arg8[%c0_23, %c0_24, %c0_25] : memref<4x8x8xf32, #tpu.memory_space<vmem>>, vector<1x8x8xf32>
      %32 = vector.shape_cast %31 : vector<1x8x8xf32> to vector<8x8xf32>
      %33 = vector.shape_cast %30 : vector<8x8xf32> to vector<1x8x8xf32>
      tpu.vector_store %arg8[%c0_23, %c0_24, %c0_25], %33 {strides = array<i32>} : memref<4x8x8xf32, #tpu.memory_space<vmem>>, vector<1x8x8xf32>,
      %c0_26 = arith.constant 0 : index
      %c0_27 = arith.constant 0 : index
      %c0_28 = arith.constant 0 : index
      %c8 = arith.constant 8 : index
      %34 = vector.load %arg4[%c0_26, %c0_27, %c0_28, %c8] : memref<1x1x8x32xf32, #tpu.memory_space<vmem>>, vector<1x1x8x8xf32>
      %35 = vector.shape_cast %34 : vector<1x1x8x8xf32> to vector<8x8xf32>
      %c1 = arith.constant 1 : index
      %c0_29 = arith.constant 0 : index
      %c0_30 = arith.constant 0 : index
      %36 = vector.load %arg8[%c1, %c0_29, %c0_30] : memref<4x8x8xf32, #tpu.memory_space<vmem>>, vector<1x8x8xf32>
      %37 = vector.shape_cast %36 : vector<1x8x8xf32> to vector<8x8xf32>
      %38 = vector.shape_cast %35 : vector<8x8xf32> to vector<1x8x8xf32>
      tpu.vector_store %arg8[%c1, %c0_29, %c0_30], %38 {strides = array<i32>} : memref<4x8x8xf32, #tpu.memory_space<vmem>>, vector<1x8x8xf32>,
      %c0_31 = arith.constant 0 : index
      %c0_32 = arith.constant 0 : index
      %c0_33 = arith.constant 0 : index
      %c16 = arith.constant 16 : index
      %39 = vector.load %arg4[%c0_31, %c0_32, %c0_33, %c16] : memref<1x1x8x32xf32, #tpu.memory_space<vmem>>, vector<1x1x8x8xf32>
      %40 = vector.shape_cast %39 : vector<1x1x8x8xf32> to vector<8x8xf32>
      %c2 = arith.constant 2 : index
      %c0_34 = arith.constant 0 : index
      %c0_35 = arith.constant 0 : index
      %41 = vector.load %arg8[%c2, %c0_34, %c0_35] : memref<4x8x8xf32, #tpu.memory_space<vmem>>, vector<1x8x8xf32>
      %42 = vector.shape_cast %41 : vector<1x8x8xf32> to vector<8x8xf32>
      %43 = vector.shape_cast %40 : vector<8x8xf32> to vector<1x8x8xf32>
      tpu.vector_store %arg8[%c2, %c0_34, %c0_35], %43 {strides = array<i32>} : memref<4x8x8xf32, #tpu.memory_space<vmem>>, vector<1x8x8xf32>,
      %c0_36 = arith.constant 0 : index
      %c0_37 = arith.constant 0 : index
      %c0_38 = arith.constant 0 : index
      %c24 = arith.constant 24 : index
      %44 = vector.load %arg4[%c0_36, %c0_37, %c0_38, %c24] : memref<1x1x8x32xf32, #tpu.memory_space<vmem>>, vector<1x1x8x8xf32>
      %45 = vector.shape_cast %44 : vector<1x1x8x8xf32> to vector<8x8xf32>
      %c3 = arith.constant 3 : index
      %c0_39 = arith.constant 0 : index
      %c0_40 = arith.constant 0 : index
      %46 = vector.load %arg8[%c3, %c0_39, %c0_40] : memref<4x8x8xf32, #tpu.memory_space<vmem>>, vector<1x8x8xf32>
      %47 = vector.shape_cast %46 : vector<1x8x8xf32> to vector<8x8xf32>
      %48 = vector.shape_cast %45 : vector<8x8xf32> to vector<1x8x8xf32>
      tpu.vector_store %arg8[%c3, %c0_39, %c0_40], %48 {strides = array<i32>} : memref<4x8x8xf32, #tpu.memory_space<vmem>>, vector<1x8x8xf32>,
    } else {
    }
    %c8_i32 = arith.constant 8 : i32
    %7 = arith.muli %3, %c8_i32 : i32
    %c8_i32_1 = arith.constant 8 : i32
    %8 = arith.addi %7, %c8_i32_1 : i32
    %c1_i32 = arith.constant 1 : i32
    %9 = arith.subi %8, %c1_i32 : i32
    %c8_i32_2 = arith.constant 8 : i32
    %10 = arith.muli %1, %c8_i32_2 : i32
    %11 = arith.cmpi sgt, %9, %10 : i32
    %12 = arith.extui %11 : i1 to i32
    %c0_i32_3 = arith.constant 0 : i32
    %13 = arith.cmpi ne, %12, %c0_i32_3 : i32
    scf.if %13 {
      %c8_i32_9 = arith.constant 8 : i32
      %23 = arith.muli %1, %c8_i32_9 : i32
      %24 = tpu.iota {dimensions = array<i32: 0>} : vector<8x8xi32>
      %25 = vector.broadcast %23 : i32 to vector<8x8xi32>
      %26 = arith.addi %25, %24 : vector<8x8xi32>
      %c8_i32_10 = arith.constant 8 : i32
      %27 = arith.muli %3, %c8_i32_10 : i32
      %28 = tpu.iota {dimensions = array<i32: 1>} : vector<8x8xi32>
      %29 = vector.broadcast %27 : i32 to vector<8x8xi32>
      %30 = arith.addi %29, %28 : vector<8x8xi32>
      %31 = arith.cmpi sle, %30, %26 : vector<8x8xi32>
      %c0 = arith.constant 0 : index
      %c0_11 = arith.constant 0 : index
      %c0_12 = arith.constant 0 : index
      %c0_13 = arith.constant 0 : index
      %32 = vector.load %arg5[%c0, %c0_11, %c0_12, %c0_13] : memref<1x1x8x32xf32, #tpu.memory_space<vmem>>, vector<1x1x8x8xf32>
      %33 = vector.shape_cast %32 : vector<1x1x8x8xf32> to vector<8x8xf32>
      %c0_14 = arith.constant 0 : index
      %c0_15 = arith.constant 0 : index
      %c0_16 = arith.constant 0 : index
      %c0_17 = arith.constant 0 : index
      %34 = vector.load %arg6[%c0_14, %c0_15, %c0_16, %c0_17] : memref<1x1x8x32xf32, #tpu.memory_space<vmem>>, vector<1x1x8x8xf32>
      %35 = vector.shape_cast %34 : vector<1x1x8x8xf32> to vector<8x8xf32>
      %c0_18 = arith.constant 0 : index
      %c0_19 = arith.constant 0 : index
      %c0_20 = arith.constant 0 : index
      %36 = vector.load %arg8[%c0_18, %c0_19, %c0_20] : memref<4x8x8xf32, #tpu.memory_space<vmem>>, vector<1x8x8xf32>
      %37 = vector.shape_cast %36 : vector<1x8x8xf32> to vector<8x8xf32>
      %cst = arith.constant dense<0.000000e+00> : vector<8x8xf32>
      %38 = tpu.matmul %37, %33, %cst {dimension_numbers = #tpu.dot_dimension_numbers<[1], [1], [0], [0], [0, 0, 1, 0], [], []>} : vector<8x8xf32>, vector<8x8xf32>, vector<8x8xf32> -> vector<8x8xf32>
      %cst_21 = arith.constant 0xFF800000 : f32
      %39 = vector.broadcast %cst_21 : f32 to vector<8x8xf32>
      %40 = arith.select %31, %38, %39 : vector<8x8xi1>, vector<8x8xf32>
      %c0_22 = arith.constant 0 : index
      %c0_23 = arith.constant 0 : index
      %c0_24 = arith.constant 0 : index
      %41 = vector.load %arg9[%c0_22, %c0_23, %c0_24] : memref<4x8x1xf32, #tpu.memory_space<vmem>>, vector<1x8x1xf32>
      %42 = vector.shape_cast %41 : vector<1x8x1xf32> to vector<8x1xf32>
      %cst_25 = arith.constant dense<0xFF800000> : vector<8xf32>
      %43 = vector.multi_reduction <maximumf>, %40, %cst_25 [1] : vector<8x8xf32> to vector<8xf32>
      %44 = vector.shape_cast %43 : vector<8xf32> to vector<8x1xf32>
      %45 = arith.maximumf %42, %44 : vector<8x1xf32>
      %46 = arith.subf %42, %45 : vector<8x1xf32>
      %47 = math.exp %46 : vector<8x1xf32>
      %48 = vector.broadcast %45 : vector<8x1xf32> to vector<8x8xf32>
      %49 = arith.subf %40, %48 : vector<8x8xf32>
      %50 = math.exp %49 : vector<8x8xf32>
      %c0_26 = arith.constant 0 : index
      %c0_27 = arith.constant 0 : index
      %c0_28 = arith.constant 0 : index
      %51 = vector.load %arg10[%c0_26, %c0_27, %c0_28] : memref<4x8x1xf32, #tpu.memory_space<vmem>>, vector<1x8x1xf32>
      %52 = vector.shape_cast %51 : vector<1x8x1xf32> to vector<8x1xf32>
      %53 = arith.mulf %47, %52 : vector<8x1xf32>
      %cst_29 = arith.constant dense<0.000000e+00> : vector<8xf32>
      %54 = vector.multi_reduction <add>, %50, %cst_29 [1] : vector<8x8xf32> to vector<8xf32>
      %55 = vector.shape_cast %54 : vector<8xf32> to vector<8x1xf32>
      %56 = arith.addf %53, %55 : vector<8x1xf32>
      %c0_30 = arith.constant 0 : index
      %c0_31 = arith.constant 0 : index
      %c0_32 = arith.constant 0 : index
      %57 = vector.load %arg10[%c0_30, %c0_31, %c0_32] : memref<4x8x1xf32, #tpu.memory_space<vmem>>, vector<1x8x1xf32>
      %58 = vector.shape_cast %57 : vector<1x8x1xf32> to vector<8x1xf32>
      %59 = vector.shape_cast %56 : vector<8x1xf32> to vector<1x8x1xf32>
      tpu.vector_store %arg10[%c0_30, %c0_31, %c0_32], %59 {strides = array<i32>} : memref<4x8x1xf32, #tpu.memory_space<vmem>>, vector<1x8x1xf32>,
      %c0_33 = arith.constant 0 : index
      %c0_34 = arith.constant 0 : index
      %c0_35 = arith.constant 0 : index
      %60 = vector.load %arg11[%c0_33, %c0_34, %c0_35] : memref<4x8x8xf32, #tpu.memory_space<vmem>>, vector<1x8x8xf32>
      %61 = vector.shape_cast %60 : vector<1x8x8xf32> to vector<8x8xf32>
      %62 = vector.broadcast %47 : vector<8x1xf32> to vector<8x8xf32>
      %63 = arith.mulf %62, %61 : vector<8x8xf32>
      %cst_36 = arith.constant dense<0.000000e+00> : vector<8x8xf32>
      %64 = tpu.matmul %50, %35, %cst_36 {dimension_numbers = #tpu.dot_dimension_numbers<[1], [0], [0], [1], [0, 0, 1, 1], [], []>} : vector<8x8xf32>, vector<8x8xf32>, vector<8x8xf32> -> vector<8x8xf32>
      %65 = arith.addf %63, %64 : vector<8x8xf32>
      %c0_37 = arith.constant 0 : index
      %c0_38 = arith.constant 0 : index
      %c0_39 = arith.constant 0 : index
      %66 = vector.load %arg11[%c0_37, %c0_38, %c0_39] : memref<4x8x8xf32, #tpu.memory_space<vmem>>, vector<1x8x8xf32>
      %67 = vector.shape_cast %66 : vector<1x8x8xf32> to vector<8x8xf32>
      %68 = vector.shape_cast %65 : vector<8x8xf32> to vector<1x8x8xf32>
      tpu.vector_store %arg11[%c0_37, %c0_38, %c0_39], %68 {strides = array<i32>} : memref<4x8x8xf32, #tpu.memory_space<vmem>>, vector<1x8x8xf32>,
      %c0_40 = arith.constant 0 : index
      %c0_41 = arith.constant 0 : index
      %c0_42 = arith.constant 0 : index
      %69 = vector.load %arg9[%c0_40, %c0_41, %c0_42] : memref<4x8x1xf32, #tpu.memory_space<vmem>>, vector<1x8x1xf32>
      %70 = vector.shape_cast %69 : vector<1x8x1xf32> to vector<8x1xf32>
      %71 = vector.shape_cast %45 : vector<8x1xf32> to vector<1x8x1xf32>
      tpu.vector_store %arg9[%c0_40, %c0_41, %c0_42], %71 {strides = array<i32>} : memref<4x8x1xf32, #tpu.memory_space<vmem>>, vector<1x8x1xf32>,
      %c0_43 = arith.constant 0 : index
      %c0_44 = arith.constant 0 : index
      %c0_45 = arith.constant 0 : index
      %c8 = arith.constant 8 : index
      %72 = vector.load %arg5[%c0_43, %c0_44, %c0_45, %c8] : memref<1x1x8x32xf32, #tpu.memory_space<vmem>>, vector<1x1x8x8xf32>
      %73 = vector.shape_cast %72 : vector<1x1x8x8xf32> to vector<8x8xf32>
      %c0_46 = arith.constant 0 : index
      %c0_47 = arith.constant 0 : index
      %c0_48 = arith.constant 0 : index
      %c8_49 = arith.constant 8 : index
      %74 = vector.load %arg6[%c0_46, %c0_47, %c0_48, %c8_49] : memref<1x1x8x32xf32, #tpu.memory_space<vmem>>, vector<1x1x8x8xf32>
      %75 = vector.shape_cast %74 : vector<1x1x8x8xf32> to vector<8x8xf32>
      %c1 = arith.constant 1 : index
      %c0_50 = arith.constant 0 : index
      %c0_51 = arith.constant 0 : index
      %76 = vector.load %arg8[%c1, %c0_50, %c0_51] : memref<4x8x8xf32, #tpu.memory_space<vmem>>, vector<1x8x8xf32>
      %77 = vector.shape_cast %76 : vector<1x8x8xf32> to vector<8x8xf32>
      %cst_52 = arith.constant dense<0.000000e+00> : vector<8x8xf32>
      %78 = tpu.matmul %77, %73, %cst_52 {dimension_numbers = #tpu.dot_dimension_numbers<[1], [1], [0], [0], [0, 0, 1, 0], [], []>} : vector<8x8xf32>, vector<8x8xf32>, vector<8x8xf32> -> vector<8x8xf32>
      %cst_53 = arith.constant 0xFF800000 : f32
      %79 = vector.broadcast %cst_53 : f32 to vector<8x8xf32>
      %80 = arith.select %31, %78, %79 : vector<8x8xi1>, vector<8x8xf32>
      %c1_54 = arith.constant 1 : index
      %c0_55 = arith.constant 0 : index
      %c0_56 = arith.constant 0 : index
      %81 = vector.load %arg9[%c1_54, %c0_55, %c0_56] : memref<4x8x1xf32, #tpu.memory_space<vmem>>, vector<1x8x1xf32>
      %82 = vector.shape_cast %81 : vector<1x8x1xf32> to vector<8x1xf32>
      %cst_57 = arith.constant dense<0xFF800000> : vector<8xf32>
      %83 = vector.multi_reduction <maximumf>, %80, %cst_57 [1] : vector<8x8xf32> to vector<8xf32>
      %84 = vector.shape_cast %83 : vector<8xf32> to vector<8x1xf32>
      %85 = arith.maximumf %82, %84 : vector<8x1xf32>
      %86 = arith.subf %82, %85 : vector<8x1xf32>
      %87 = math.exp %86 : vector<8x1xf32>
      %88 = vector.broadcast %85 : vector<8x1xf32> to vector<8x8xf32>
      %89 = arith.subf %80, %88 : vector<8x8xf32>
      %90 = math.exp %89 : vector<8x8xf32>
      %c1_58 = arith.constant 1 : index
      %c0_59 = arith.constant 0 : index
      %c0_60 = arith.constant 0 : index
      %91 = vector.load %arg10[%c1_58, %c0_59, %c0_60] : memref<4x8x1xf32, #tpu.memory_space<vmem>>, vector<1x8x1xf32>
      %92 = vector.shape_cast %91 : vector<1x8x1xf32> to vector<8x1xf32>
      %93 = arith.mulf %87, %92 : vector<8x1xf32>
      %cst_61 = arith.constant dense<0.000000e+00> : vector<8xf32>
      %94 = vector.multi_reduction <add>, %90, %cst_61 [1] : vector<8x8xf32> to vector<8xf32>
      %95 = vector.shape_cast %94 : vector<8xf32> to vector<8x1xf32>
      %96 = arith.addf %93, %95 : vector<8x1xf32>
      %c1_62 = arith.constant 1 : index
      %c0_63 = arith.constant 0 : index
      %c0_64 = arith.constant 0 : index
      %97 = vector.load %arg10[%c1_62, %c0_63, %c0_64] : memref<4x8x1xf32, #tpu.memory_space<vmem>>, vector<1x8x1xf32>
      %98 = vector.shape_cast %97 : vector<1x8x1xf32> to vector<8x1xf32>
      %99 = vector.shape_cast %96 : vector<8x1xf32> to vector<1x8x1xf32>
      tpu.vector_store %arg10[%c1_62, %c0_63, %c0_64], %99 {strides = array<i32>} : memref<4x8x1xf32, #tpu.memory_space<vmem>>, vector<1x8x1xf32>,
      %c1_65 = arith.constant 1 : index
      %c0_66 = arith.constant 0 : index
      %c0_67 = arith.constant 0 : index
      %100 = vector.load %arg11[%c1_65, %c0_66, %c0_67] : memref<4x8x8xf32, #tpu.memory_space<vmem>>, vector<1x8x8xf32>
      %101 = vector.shape_cast %100 : vector<1x8x8xf32> to vector<8x8xf32>
      %102 = vector.broadcast %87 : vector<8x1xf32> to vector<8x8xf32>
      %103 = arith.mulf %102, %101 : vector<8x8xf32>
      %cst_68 = arith.constant dense<0.000000e+00> : vector<8x8xf32>
      %104 = tpu.matmul %90, %75, %cst_68 {dimension_numbers = #tpu.dot_dimension_numbers<[1], [0], [0], [1], [0, 0, 1, 1], [], []>} : vector<8x8xf32>, vector<8x8xf32>, vector<8x8xf32> -> vector<8x8xf32>
      %105 = arith.addf %103, %104 : vector<8x8xf32>
      %c1_69 = arith.constant 1 : index
      %c0_70 = arith.constant 0 : index
      %c0_71 = arith.constant 0 : index
      %106 = vector.load %arg11[%c1_69, %c0_70, %c0_71] : memref<4x8x8xf32, #tpu.memory_space<vmem>>, vector<1x8x8xf32>
      %107 = vector.shape_cast %106 : vector<1x8x8xf32> to vector<8x8xf32>
      %108 = vector.shape_cast %105 : vector<8x8xf32> to vector<1x8x8xf32>
      tpu.vector_store %arg11[%c1_69, %c0_70, %c0_71], %108 {strides = array<i32>} : memref<4x8x8xf32, #tpu.memory_space<vmem>>, vector<1x8x8xf32>,
      %c1_72 = arith.constant 1 : index
      %c0_73 = arith.constant 0 : index
      %c0_74 = arith.constant 0 : index
      %109 = vector.load %arg9[%c1_72, %c0_73, %c0_74] : memref<4x8x1xf32, #tpu.memory_space<vmem>>, vector<1x8x1xf32>
      %110 = vector.shape_cast %109 : vector<1x8x1xf32> to vector<8x1xf32>
      %111 = vector.shape_cast %85 : vector<8x1xf32> to vector<1x8x1xf32>
      tpu.vector_store %arg9[%c1_72, %c0_73, %c0_74], %111 {strides = array<i32>} : memref<4x8x1xf32, #tpu.memory_space<vmem>>, vector<1x8x1xf32>,
      %c0_75 = arith.constant 0 : index
      %c0_76 = arith.constant 0 : index
      %c0_77 = arith.constant 0 : index
      %c16 = arith.constant 16 : index
      %112 = vector.load %arg5[%c0_75, %c0_76, %c0_77, %c16] : memref<1x1x8x32xf32, #tpu.memory_space<vmem>>, vector<1x1x8x8xf32>
      %113 = vector.shape_cast %112 : vector<1x1x8x8xf32> to vector<8x8xf32>
      %c0_78 = arith.constant 0 : index
      %c0_79 = arith.constant 0 : index
      %c0_80 = arith.constant 0 : index
      %c16_81 = arith.constant 16 : index
      %114 = vector.load %arg6[%c0_78, %c0_79, %c0_80, %c16_81] : memref<1x1x8x32xf32, #tpu.memory_space<vmem>>, vector<1x1x8x8xf32>
      %115 = vector.shape_cast %114 : vector<1x1x8x8xf32> to vector<8x8xf32>
      %c2 = arith.constant 2 : index
      %c0_82 = arith.constant 0 : index
      %c0_83 = arith.constant 0 : index
      %116 = vector.load %arg8[%c2, %c0_82, %c0_83] : memref<4x8x8xf32, #tpu.memory_space<vmem>>, vector<1x8x8xf32>
      %117 = vector.shape_cast %116 : vector<1x8x8xf32> to vector<8x8xf32>
      %cst_84 = arith.constant dense<0.000000e+00> : vector<8x8xf32>
      %118 = tpu.matmul %117, %113, %cst_84 {dimension_numbers = #tpu.dot_dimension_numbers<[1], [1], [0], [0], [0, 0, 1, 0], [], []>} : vector<8x8xf32>, vector<8x8xf32>, vector<8x8xf32> -> vector<8x8xf32>
      %cst_85 = arith.constant 0xFF800000 : f32
      %119 = vector.broadcast %cst_85 : f32 to vector<8x8xf32>
      %120 = arith.select %31, %118, %119 : vector<8x8xi1>, vector<8x8xf32>
      %c2_86 = arith.constant 2 : index
      %c0_87 = arith.constant 0 : index
      %c0_88 = arith.constant 0 : index
      %121 = vector.load %arg9[%c2_86, %c0_87, %c0_88] : memref<4x8x1xf32, #tpu.memory_space<vmem>>, vector<1x8x1xf32>
      %122 = vector.shape_cast %121 : vector<1x8x1xf32> to vector<8x1xf32>
      %cst_89 = arith.constant dense<0xFF800000> : vector<8xf32>
      %123 = vector.multi_reduction <maximumf>, %120, %cst_89 [1] : vector<8x8xf32> to vector<8xf32>
      %124 = vector.shape_cast %123 : vector<8xf32> to vector<8x1xf32>
      %125 = arith.maximumf %122, %124 : vector<8x1xf32>
      %126 = arith.subf %122, %125 : vector<8x1xf32>
      %127 = math.exp %126 : vector<8x1xf32>
      %128 = vector.broadcast %125 : vector<8x1xf32> to vector<8x8xf32>
      %129 = arith.subf %120, %128 : vector<8x8xf32>
      %130 = math.exp %129 : vector<8x8xf32>
      %c2_90 = arith.constant 2 : index
      %c0_91 = arith.constant 0 : index
      %c0_92 = arith.constant 0 : index
      %131 = vector.load %arg10[%c2_90, %c0_91, %c0_92] : memref<4x8x1xf32, #tpu.memory_space<vmem>>, vector<1x8x1xf32>
      %132 = vector.shape_cast %131 : vector<1x8x1xf32> to vector<8x1xf32>
      %133 = arith.mulf %127, %132 : vector<8x1xf32>
      %cst_93 = arith.constant dense<0.000000e+00> : vector<8xf32>
      %134 = vector.multi_reduction <add>, %130, %cst_93 [1] : vector<8x8xf32> to vector<8xf32>
      %135 = vector.shape_cast %134 : vector<8xf32> to vector<8x1xf32>
      %136 = arith.addf %133, %135 : vector<8x1xf32>
      %c2_94 = arith.constant 2 : index
      %c0_95 = arith.constant 0 : index
      %c0_96 = arith.constant 0 : index
      %137 = vector.load %arg10[%c2_94, %c0_95, %c0_96] : memref<4x8x1xf32, #tpu.memory_space<vmem>>, vector<1x8x1xf32>
      %138 = vector.shape_cast %137 : vector<1x8x1xf32> to vector<8x1xf32>
      %139 = vector.shape_cast %136 : vector<8x1xf32> to vector<1x8x1xf32>
      tpu.vector_store %arg10[%c2_94, %c0_95, %c0_96], %139 {strides = array<i32>} : memref<4x8x1xf32, #tpu.memory_space<vmem>>, vector<1x8x1xf32>,
      %c2_97 = arith.constant 2 : index
      %c0_98 = arith.constant 0 : index
      %c0_99 = arith.constant 0 : index
      %140 = vector.load %arg11[%c2_97, %c0_98, %c0_99] : memref<4x8x8xf32, #tpu.memory_space<vmem>>, vector<1x8x8xf32>
      %141 = vector.shape_cast %140 : vector<1x8x8xf32> to vector<8x8xf32>
      %142 = vector.broadcast %127 : vector<8x1xf32> to vector<8x8xf32>
      %143 = arith.mulf %142, %141 : vector<8x8xf32>
      %cst_100 = arith.constant dense<0.000000e+00> : vector<8x8xf32>
      %144 = tpu.matmul %130, %115, %cst_100 {dimension_numbers = #tpu.dot_dimension_numbers<[1], [0], [0], [1], [0, 0, 1, 1], [], []>} : vector<8x8xf32>, vector<8x8xf32>, vector<8x8xf32> -> vector<8x8xf32>
      %145 = arith.addf %143, %144 : vector<8x8xf32>
      %c2_101 = arith.constant 2 : index
      %c0_102 = arith.constant 0 : index
      %c0_103 = arith.constant 0 : index
      %146 = vector.load %arg11[%c2_101, %c0_102, %c0_103] : memref<4x8x8xf32, #tpu.memory_space<vmem>>, vector<1x8x8xf32>
      %147 = vector.shape_cast %146 : vector<1x8x8xf32> to vector<8x8xf32>
      %148 = vector.shape_cast %145 : vector<8x8xf32> to vector<1x8x8xf32>
      tpu.vector_store %arg11[%c2_101, %c0_102, %c0_103], %148 {strides = array<i32>} : memref<4x8x8xf32, #tpu.memory_space<vmem>>, vector<1x8x8xf32>,
      %c2_104 = arith.constant 2 : index
      %c0_105 = arith.constant 0 : index
      %c0_106 = arith.constant 0 : index
      %149 = vector.load %arg9[%c2_104, %c0_105, %c0_106] : memref<4x8x1xf32, #tpu.memory_space<vmem>>, vector<1x8x1xf32>
      %150 = vector.shape_cast %149 : vector<1x8x1xf32> to vector<8x1xf32>
      %151 = vector.shape_cast %125 : vector<8x1xf32> to vector<1x8x1xf32>
      tpu.vector_store %arg9[%c2_104, %c0_105, %c0_106], %151 {strides = array<i32>} : memref<4x8x1xf32, #tpu.memory_space<vmem>>, vector<1x8x1xf32>,
      %c0_107 = arith.constant 0 : index
      %c0_108 = arith.constant 0 : index
      %c0_109 = arith.constant 0 : index
      %c24 = arith.constant 24 : index
      %152 = vector.load %arg5[%c0_107, %c0_108, %c0_109, %c24] : memref<1x1x8x32xf32, #tpu.memory_space<vmem>>, vector<1x1x8x8xf32>
      %153 = vector.shape_cast %152 : vector<1x1x8x8xf32> to vector<8x8xf32>
      %c0_110 = arith.constant 0 : index
      %c0_111 = arith.constant 0 : index
      %c0_112 = arith.constant 0 : index
      %c24_113 = arith.constant 24 : index
      %154 = vector.load %arg6[%c0_110, %c0_111, %c0_112, %c24_113] : memref<1x1x8x32xf32, #tpu.memory_space<vmem>>, vector<1x1x8x8xf32>
      %155 = vector.shape_cast %154 : vector<1x1x8x8xf32> to vector<8x8xf32>
      %c3 = arith.constant 3 : index
      %c0_114 = arith.constant 0 : index
      %c0_115 = arith.constant 0 : index
      %156 = vector.load %arg8[%c3, %c0_114, %c0_115] : memref<4x8x8xf32, #tpu.memory_space<vmem>>, vector<1x8x8xf32>
      %157 = vector.shape_cast %156 : vector<1x8x8xf32> to vector<8x8xf32>
      %cst_116 = arith.constant dense<0.000000e+00> : vector<8x8xf32>
      %158 = tpu.matmul %157, %153, %cst_116 {dimension_numbers = #tpu.dot_dimension_numbers<[1], [1], [0], [0], [0, 0, 1, 0], [], []>} : vector<8x8xf32>, vector<8x8xf32>, vector<8x8xf32> -> vector<8x8xf32>
      %cst_117 = arith.constant 0xFF800000 : f32
      %159 = vector.broadcast %cst_117 : f32 to vector<8x8xf32>
      %160 = arith.select %31, %158, %159 : vector<8x8xi1>, vector<8x8xf32>
      %c3_118 = arith.constant 3 : index
      %c0_119 = arith.constant 0 : index
      %c0_120 = arith.constant 0 : index
      %161 = vector.load %arg9[%c3_118, %c0_119, %c0_120] : memref<4x8x1xf32, #tpu.memory_space<vmem>>, vector<1x8x1xf32>
      %162 = vector.shape_cast %161 : vector<1x8x1xf32> to vector<8x1xf32>
      %cst_121 = arith.constant dense<0xFF800000> : vector<8xf32>
      %163 = vector.multi_reduction <maximumf>, %160, %cst_121 [1] : vector<8x8xf32> to vector<8xf32>
      %164 = vector.shape_cast %163 : vector<8xf32> to vector<8x1xf32>
      %165 = arith.maximumf %162, %164 : vector<8x1xf32>
      %166 = arith.subf %162, %165 : vector<8x1xf32>
      %167 = math.exp %166 : vector<8x1xf32>
      %168 = vector.broadcast %165 : vector<8x1xf32> to vector<8x8xf32>
      %169 = arith.subf %160, %168 : vector<8x8xf32>
      %170 = math.exp %169 : vector<8x8xf32>
      %c3_122 = arith.constant 3 : index
      %c0_123 = arith.constant 0 : index
      %c0_124 = arith.constant 0 : index
      %171 = vector.load %arg10[%c3_122, %c0_123, %c0_124] : memref<4x8x1xf32, #tpu.memory_space<vmem>>, vector<1x8x1xf32>
      %172 = vector.shape_cast %171 : vector<1x8x1xf32> to vector<8x1xf32>
      %173 = arith.mulf %167, %172 : vector<8x1xf32>
      %cst_125 = arith.constant dense<0.000000e+00> : vector<8xf32>
      %174 = vector.multi_reduction <add>, %170, %cst_125 [1] : vector<8x8xf32> to vector<8xf32>
      %175 = vector.shape_cast %174 : vector<8xf32> to vector<8x1xf32>
      %176 = arith.addf %173, %175 : vector<8x1xf32>
      %c3_126 = arith.constant 3 : index
      %c0_127 = arith.constant 0 : index
      %c0_128 = arith.constant 0 : index
      %177 = vector.load %arg10[%c3_126, %c0_127, %c0_128] : memref<4x8x1xf32, #tpu.memory_space<vmem>>, vector<1x8x1xf32>
      %178 = vector.shape_cast %177 : vector<1x8x1xf32> to vector<8x1xf32>
      %179 = vector.shape_cast %176 : vector<8x1xf32> to vector<1x8x1xf32>
      tpu.vector_store %arg10[%c3_126, %c0_127, %c0_128], %179 {strides = array<i32>} : memref<4x8x1xf32, #tpu.memory_space<vmem>>, vector<1x8x1xf32>,
      %c3_129 = arith.constant 3 : index
      %c0_130 = arith.constant 0 : index
      %c0_131 = arith.constant 0 : index
      %180 = vector.load %arg11[%c3_129, %c0_130, %c0_131] : memref<4x8x8xf32, #tpu.memory_space<vmem>>, vector<1x8x8xf32>
      %181 = vector.shape_cast %180 : vector<1x8x8xf32> to vector<8x8xf32>
      %182 = vector.broadcast %167 : vector<8x1xf32> to vector<8x8xf32>
      %183 = arith.mulf %182, %181 : vector<8x8xf32>
      %cst_132 = arith.constant dense<0.000000e+00> : vector<8x8xf32>
      %184 = tpu.matmul %170, %155, %cst_132 {dimension_numbers = #tpu.dot_dimension_numbers<[1], [0], [0], [1], [0, 0, 1, 1], [], []>} : vector<8x8xf32>, vector<8x8xf32>, vector<8x8xf32> -> vector<8x8xf32>
      %185 = arith.addf %183, %184 : vector<8x8xf32>
      %c3_133 = arith.constant 3 : index
      %c0_134 = arith.constant 0 : index
      %c0_135 = arith.constant 0 : index
      %186 = vector.load %arg11[%c3_133, %c0_134, %c0_135] : memref<4x8x8xf32, #tpu.memory_space<vmem>>, vector<1x8x8xf32>
      %187 = vector.shape_cast %186 : vector<1x8x8xf32> to vector<8x8xf32>
      %188 = vector.shape_cast %185 : vector<8x8xf32> to vector<1x8x8xf32>
      tpu.vector_store %arg11[%c3_133, %c0_134, %c0_135], %188 {strides = array<i32>} : memref<4x8x8xf32, #tpu.memory_space<vmem>>, vector<1x8x8xf32>,
      %c3_136 = arith.constant 3 : index
      %c0_137 = arith.constant 0 : index
      %c0_138 = arith.constant 0 : index
      %189 = vector.load %arg9[%c3_136, %c0_137, %c0_138] : memref<4x8x1xf32, #tpu.memory_space<vmem>>, vector<1x8x1xf32>
      %190 = vector.shape_cast %189 : vector<1x8x1xf32> to vector<8x1xf32>
      %191 = vector.shape_cast %165 : vector<8x1xf32> to vector<1x8x1xf32>
      tpu.vector_store %arg9[%c3_136, %c0_137, %c0_138], %191 {strides = array<i32>} : memref<4x8x1xf32, #tpu.memory_space<vmem>>, vector<1x8x1xf32>,
    } else {
    }
    %true = arith.constant true
    %14 = arith.xori %11, %true : i1
    %15 = arith.extui %14 : i1 to i32
    %c0_i32_4 = arith.constant 0 : i32
    %16 = arith.cmpi ne, %15, %c0_i32_4 : i32
    scf.if %16 {
      %c0 = arith.constant 0 : index
      %c0_9 = arith.constant 0 : index
      %c0_10 = arith.constant 0 : index
      %c0_11 = arith.constant 0 : index
      %23 = vector.load %arg5[%c0, %c0_9, %c0_10, %c0_11] : memref<1x1x8x32xf32, #tpu.memory_space<vmem>>, vector<1x1x8x8xf32>
      %24 = vector.shape_cast %23 : vector<1x1x8x8xf32> to vector<8x8xf32>
      %c0_12 = arith.constant 0 : index
      %c0_13 = arith.constant 0 : index
      %c0_14 = arith.constant 0 : index
      %c0_15 = arith.constant 0 : index
      %25 = vector.load %arg6[%c0_12, %c0_13, %c0_14, %c0_15] : memref<1x1x8x32xf32, #tpu.memory_space<vmem>>, vector<1x1x8x8xf32>
      %26 = vector.shape_cast %25 : vector<1x1x8x8xf32> to vector<8x8xf32>
      %c0_16 = arith.constant 0 : index
      %c0_17 = arith.constant 0 : index
      %c0_18 = arith.constant 0 : index
      %27 = vector.load %arg8[%c0_16, %c0_17, %c0_18] : memref<4x8x8xf32, #tpu.memory_space<vmem>>, vector<1x8x8xf32>
      %28 = vector.shape_cast %27 : vector<1x8x8xf32> to vector<8x8xf32>
      %cst = arith.constant dense<0.000000e+00> : vector<8x8xf32>
      %29 = tpu.matmul %28, %24, %cst {dimension_numbers = #tpu.dot_dimension_numbers<[1], [1], [0], [0], [0, 0, 1, 0], [], []>} : vector<8x8xf32>, vector<8x8xf32>, vector<8x8xf32> -> vector<8x8xf32>
      %c0_19 = arith.constant 0 : index
      %c0_20 = arith.constant 0 : index
      %c0_21 = arith.constant 0 : index
      %30 = vector.load %arg9[%c0_19, %c0_20, %c0_21] : memref<4x8x1xf32, #tpu.memory_space<vmem>>, vector<1x8x1xf32>
      %31 = vector.shape_cast %30 : vector<1x8x1xf32> to vector<8x1xf32>
      %cst_22 = arith.constant dense<0xFF800000> : vector<8xf32>
      %32 = vector.multi_reduction <maximumf>, %29, %cst_22 [1] : vector<8x8xf32> to vector<8xf32>
      %33 = vector.shape_cast %32 : vector<8xf32> to vector<8x1xf32>
      %34 = arith.maximumf %31, %33 : vector<8x1xf32>
      %35 = arith.subf %31, %34 : vector<8x1xf32>
      %36 = math.exp %35 : vector<8x1xf32>
      %37 = vector.broadcast %34 : vector<8x1xf32> to vector<8x8xf32>
      %38 = arith.subf %29, %37 : vector<8x8xf32>
      %39 = math.exp %38 : vector<8x8xf32>
      %c0_23 = arith.constant 0 : index
      %c0_24 = arith.constant 0 : index
      %c0_25 = arith.constant 0 : index
      %40 = vector.load %arg10[%c0_23, %c0_24, %c0_25] : memref<4x8x1xf32, #tpu.memory_space<vmem>>, vector<1x8x1xf32>
      %41 = vector.shape_cast %40 : vector<1x8x1xf32> to vector<8x1xf32>
      %42 = arith.mulf %36, %41 : vector<8x1xf32>
      %cst_26 = arith.constant dense<0.000000e+00> : vector<8xf32>
      %43 = vector.multi_reduction <add>, %39, %cst_26 [1] : vector<8x8xf32> to vector<8xf32>
      %44 = vector.shape_cast %43 : vector<8xf32> to vector<8x1xf32>
      %45 = arith.addf %42, %44 : vector<8x1xf32>
      %c0_27 = arith.constant 0 : index
      %c0_28 = arith.constant 0 : index
      %c0_29 = arith.constant 0 : index
      %46 = vector.load %arg10[%c0_27, %c0_28, %c0_29] : memref<4x8x1xf32, #tpu.memory_space<vmem>>, vector<1x8x1xf32>
      %47 = vector.shape_cast %46 : vector<1x8x1xf32> to vector<8x1xf32>
      %48 = vector.shape_cast %45 : vector<8x1xf32> to vector<1x8x1xf32>
      tpu.vector_store %arg10[%c0_27, %c0_28, %c0_29], %48 {strides = array<i32>} : memref<4x8x1xf32, #tpu.memory_space<vmem>>, vector<1x8x1xf32>,
      %c0_30 = arith.constant 0 : index
      %c0_31 = arith.constant 0 : index
      %c0_32 = arith.constant 0 : index
      %49 = vector.load %arg11[%c0_30, %c0_31, %c0_32] : memref<4x8x8xf32, #tpu.memory_space<vmem>>, vector<1x8x8xf32>
      %50 = vector.shape_cast %49 : vector<1x8x8xf32> to vector<8x8xf32>
      %51 = vector.broadcast %36 : vector<8x1xf32> to vector<8x8xf32>
      %52 = arith.mulf %51, %50 : vector<8x8xf32>
      %cst_33 = arith.constant dense<0.000000e+00> : vector<8x8xf32>
      %53 = tpu.matmul %39, %26, %cst_33 {dimension_numbers = #tpu.dot_dimension_numbers<[1], [0], [0], [1], [0, 0, 1, 1], [], []>} : vector<8x8xf32>, vector<8x8xf32>, vector<8x8xf32> -> vector<8x8xf32>
      %54 = arith.addf %52, %53 : vector<8x8xf32>
      %c0_34 = arith.constant 0 : index
      %c0_35 = arith.constant 0 : index
      %c0_36 = arith.constant 0 : index
      %55 = vector.load %arg11[%c0_34, %c0_35, %c0_36] : memref<4x8x8xf32, #tpu.memory_space<vmem>>, vector<1x8x8xf32>
      %56 = vector.shape_cast %55 : vector<1x8x8xf32> to vector<8x8xf32>
      %57 = vector.shape_cast %54 : vector<8x8xf32> to vector<1x8x8xf32>
      tpu.vector_store %arg11[%c0_34, %c0_35, %c0_36], %57 {strides = array<i32>} : memref<4x8x8xf32, #tpu.memory_space<vmem>>, vector<1x8x8xf32>,
      %c0_37 = arith.constant 0 : index
      %c0_38 = arith.constant 0 : index
      %c0_39 = arith.constant 0 : index
      %58 = vector.load %arg9[%c0_37, %c0_38, %c0_39] : memref<4x8x1xf32, #tpu.memory_space<vmem>>, vector<1x8x1xf32>
      %59 = vector.shape_cast %58 : vector<1x8x1xf32> to vector<8x1xf32>
      %60 = vector.shape_cast %34 : vector<8x1xf32> to vector<1x8x1xf32>
      tpu.vector_store %arg9[%c0_37, %c0_38, %c0_39], %60 {strides = array<i32>} : memref<4x8x1xf32, #tpu.memory_space<vmem>>, vector<1x8x1xf32>,
      %c0_40 = arith.constant 0 : index
      %c0_41 = arith.constant 0 : index
      %c0_42 = arith.constant 0 : index
      %c8 = arith.constant 8 : index
      %61 = vector.load %arg5[%c0_40, %c0_41, %c0_42, %c8] : memref<1x1x8x32xf32, #tpu.memory_space<vmem>>, vector<1x1x8x8xf32>
      %62 = vector.shape_cast %61 : vector<1x1x8x8xf32> to vector<8x8xf32>
      %c0_43 = arith.constant 0 : index
      %c0_44 = arith.constant 0 : index
      %c0_45 = arith.constant 0 : index
      %c8_46 = arith.constant 8 : index
      %63 = vector.load %arg6[%c0_43, %c0_44, %c0_45, %c8_46] : memref<1x1x8x32xf32, #tpu.memory_space<vmem>>, vector<1x1x8x8xf32>
      %64 = vector.shape_cast %63 : vector<1x1x8x8xf32> to vector<8x8xf32>
      %c1 = arith.constant 1 : index
      %c0_47 = arith.constant 0 : index
      %c0_48 = arith.constant 0 : index
      %65 = vector.load %arg8[%c1, %c0_47, %c0_48] : memref<4x8x8xf32, #tpu.memory_space<vmem>>, vector<1x8x8xf32>
      %66 = vector.shape_cast %65 : vector<1x8x8xf32> to vector<8x8xf32>
      %cst_49 = arith.constant dense<0.000000e+00> : vector<8x8xf32>
      %67 = tpu.matmul %66, %62, %cst_49 {dimension_numbers = #tpu.dot_dimension_numbers<[1], [1], [0], [0], [0, 0, 1, 0], [], []>} : vector<8x8xf32>, vector<8x8xf32>, vector<8x8xf32> -> vector<8x8xf32>
      %c1_50 = arith.constant 1 : index
      %c0_51 = arith.constant 0 : index
      %c0_52 = arith.constant 0 : index
      %68 = vector.load %arg9[%c1_50, %c0_51, %c0_52] : memref<4x8x1xf32, #tpu.memory_space<vmem>>, vector<1x8x1xf32>
      %69 = vector.shape_cast %68 : vector<1x8x1xf32> to vector<8x1xf32>
      %cst_53 = arith.constant dense<0xFF800000> : vector<8xf32>
      %70 = vector.multi_reduction <maximumf>, %67, %cst_53 [1] : vector<8x8xf32> to vector<8xf32>
      %71 = vector.shape_cast %70 : vector<8xf32> to vector<8x1xf32>
      %72 = arith.maximumf %69, %71 : vector<8x1xf32>
      %73 = arith.subf %69, %72 : vector<8x1xf32>
      %74 = math.exp %73 : vector<8x1xf32>
      %75 = vector.broadcast %72 : vector<8x1xf32> to vector<8x8xf32>
      %76 = arith.subf %67, %75 : vector<8x8xf32>
      %77 = math.exp %76 : vector<8x8xf32>
      %c1_54 = arith.constant 1 : index
      %c0_55 = arith.constant 0 : index
      %c0_56 = arith.constant 0 : index
      %78 = vector.load %arg10[%c1_54, %c0_55, %c0_56] : memref<4x8x1xf32, #tpu.memory_space<vmem>>, vector<1x8x1xf32>
      %79 = vector.shape_cast %78 : vector<1x8x1xf32> to vector<8x1xf32>
      %80 = arith.mulf %74, %79 : vector<8x1xf32>
      %cst_57 = arith.constant dense<0.000000e+00> : vector<8xf32>
      %81 = vector.multi_reduction <add>, %77, %cst_57 [1] : vector<8x8xf32> to vector<8xf32>
      %82 = vector.shape_cast %81 : vector<8xf32> to vector<8x1xf32>
      %83 = arith.addf %80, %82 : vector<8x1xf32>
      %c1_58 = arith.constant 1 : index
      %c0_59 = arith.constant 0 : index
      %c0_60 = arith.constant 0 : index
      %84 = vector.load %arg10[%c1_58, %c0_59, %c0_60] : memref<4x8x1xf32, #tpu.memory_space<vmem>>, vector<1x8x1xf32>
      %85 = vector.shape_cast %84 : vector<1x8x1xf32> to vector<8x1xf32>
      %86 = vector.shape_cast %83 : vector<8x1xf32> to vector<1x8x1xf32>
      tpu.vector_store %arg10[%c1_58, %c0_59, %c0_60], %86 {strides = array<i32>} : memref<4x8x1xf32, #tpu.memory_space<vmem>>, vector<1x8x1xf32>,
      %c1_61 = arith.constant 1 : index
      %c0_62 = arith.constant 0 : index
      %c0_63 = arith.constant 0 : index
      %87 = vector.load %arg11[%c1_61, %c0_62, %c0_63] : memref<4x8x8xf32, #tpu.memory_space<vmem>>, vector<1x8x8xf32>
      %88 = vector.shape_cast %87 : vector<1x8x8xf32> to vector<8x8xf32>
      %89 = vector.broadcast %74 : vector<8x1xf32> to vector<8x8xf32>
      %90 = arith.mulf %89, %88 : vector<8x8xf32>
      %cst_64 = arith.constant dense<0.000000e+00> : vector<8x8xf32>
      %91 = tpu.matmul %77, %64, %cst_64 {dimension_numbers = #tpu.dot_dimension_numbers<[1], [0], [0], [1], [0, 0, 1, 1], [], []>} : vector<8x8xf32>, vector<8x8xf32>, vector<8x8xf32> -> vector<8x8xf32>
      %92 = arith.addf %90, %91 : vector<8x8xf32>
      %c1_65 = arith.constant 1 : index
      %c0_66 = arith.constant 0 : index
      %c0_67 = arith.constant 0 : index
      %93 = vector.load %arg11[%c1_65, %c0_66, %c0_67] : memref<4x8x8xf32, #tpu.memory_space<vmem>>, vector<1x8x8xf32>
      %94 = vector.shape_cast %93 : vector<1x8x8xf32> to vector<8x8xf32>
      %95 = vector.shape_cast %92 : vector<8x8xf32> to vector<1x8x8xf32>
      tpu.vector_store %arg11[%c1_65, %c0_66, %c0_67], %95 {strides = array<i32>} : memref<4x8x8xf32, #tpu.memory_space<vmem>>, vector<1x8x8xf32>,
      %c1_68 = arith.constant 1 : index
      %c0_69 = arith.constant 0 : index
      %c0_70 = arith.constant 0 : index
      %96 = vector.load %arg9[%c1_68, %c0_69, %c0_70] : memref<4x8x1xf32, #tpu.memory_space<vmem>>, vector<1x8x1xf32>
      %97 = vector.shape_cast %96 : vector<1x8x1xf32> to vector<8x1xf32>
      %98 = vector.shape_cast %72 : vector<8x1xf32> to vector<1x8x1xf32>
      tpu.vector_store %arg9[%c1_68, %c0_69, %c0_70], %98 {strides = array<i32>} : memref<4x8x1xf32, #tpu.memory_space<vmem>>, vector<1x8x1xf32>,
      %c0_71 = arith.constant 0 : index
      %c0_72 = arith.constant 0 : index
      %c0_73 = arith.constant 0 : index
      %c16 = arith.constant 16 : index
      %99 = vector.load %arg5[%c0_71, %c0_72, %c0_73, %c16] : memref<1x1x8x32xf32, #tpu.memory_space<vmem>>, vector<1x1x8x8xf32>
      %100 = vector.shape_cast %99 : vector<1x1x8x8xf32> to vector<8x8xf32>
      %c0_74 = arith.constant 0 : index
      %c0_75 = arith.constant 0 : index
      %c0_76 = arith.constant 0 : index
      %c16_77 = arith.constant 16 : index
      %101 = vector.load %arg6[%c0_74, %c0_75, %c0_76, %c16_77] : memref<1x1x8x32xf32, #tpu.memory_space<vmem>>, vector<1x1x8x8xf32>
      %102 = vector.shape_cast %101 : vector<1x1x8x8xf32> to vector<8x8xf32>
      %c2 = arith.constant 2 : index
      %c0_78 = arith.constant 0 : index
      %c0_79 = arith.constant 0 : index
      %103 = vector.load %arg8[%c2, %c0_78, %c0_79] : memref<4x8x8xf32, #tpu.memory_space<vmem>>, vector<1x8x8xf32>
      %104 = vector.shape_cast %103 : vector<1x8x8xf32> to vector<8x8xf32>
      %cst_80 = arith.constant dense<0.000000e+00> : vector<8x8xf32>
      %105 = tpu.matmul %104, %100, %cst_80 {dimension_numbers = #tpu.dot_dimension_numbers<[1], [1], [0], [0], [0, 0, 1, 0], [], []>} : vector<8x8xf32>, vector<8x8xf32>, vector<8x8xf32> -> vector<8x8xf32>
      %c2_81 = arith.constant 2 : index
      %c0_82 = arith.constant 0 : index
      %c0_83 = arith.constant 0 : index
      %106 = vector.load %arg9[%c2_81, %c0_82, %c0_83] : memref<4x8x1xf32, #tpu.memory_space<vmem>>, vector<1x8x1xf32>
      %107 = vector.shape_cast %106 : vector<1x8x1xf32> to vector<8x1xf32>
      %cst_84 = arith.constant dense<0xFF800000> : vector<8xf32>
      %108 = vector.multi_reduction <maximumf>, %105, %cst_84 [1] : vector<8x8xf32> to vector<8xf32>
      %109 = vector.shape_cast %108 : vector<8xf32> to vector<8x1xf32>
      %110 = arith.maximumf %107, %109 : vector<8x1xf32>
      %111 = arith.subf %107, %110 : vector<8x1xf32>
      %112 = math.exp %111 : vector<8x1xf32>
      %113 = vector.broadcast %110 : vector<8x1xf32> to vector<8x8xf32>
      %114 = arith.subf %105, %113 : vector<8x8xf32>
      %115 = math.exp %114 : vector<8x8xf32>
      %c2_85 = arith.constant 2 : index
      %c0_86 = arith.constant 0 : index
      %c0_87 = arith.constant 0 : index
      %116 = vector.load %arg10[%c2_85, %c0_86, %c0_87] : memref<4x8x1xf32, #tpu.memory_space<vmem>>, vector<1x8x1xf32>
      %117 = vector.shape_cast %116 : vector<1x8x1xf32> to vector<8x1xf32>
      %118 = arith.mulf %112, %117 : vector<8x1xf32>
      %cst_88 = arith.constant dense<0.000000e+00> : vector<8xf32>
      %119 = vector.multi_reduction <add>, %115, %cst_88 [1] : vector<8x8xf32> to vector<8xf32>
      %120 = vector.shape_cast %119 : vector<8xf32> to vector<8x1xf32>
      %121 = arith.addf %118, %120 : vector<8x1xf32>
      %c2_89 = arith.constant 2 : index
      %c0_90 = arith.constant 0 : index
      %c0_91 = arith.constant 0 : index
      %122 = vector.load %arg10[%c2_89, %c0_90, %c0_91] : memref<4x8x1xf32, #tpu.memory_space<vmem>>, vector<1x8x1xf32>
      %123 = vector.shape_cast %122 : vector<1x8x1xf32> to vector<8x1xf32>
      %124 = vector.shape_cast %121 : vector<8x1xf32> to vector<1x8x1xf32>
      tpu.vector_store %arg10[%c2_89, %c0_90, %c0_91], %124 {strides = array<i32>} : memref<4x8x1xf32, #tpu.memory_space<vmem>>, vector<1x8x1xf32>,
      %c2_92 = arith.constant 2 : index
      %c0_93 = arith.constant 0 : index
      %c0_94 = arith.constant 0 : index
      %125 = vector.load %arg11[%c2_92, %c0_93, %c0_94] : memref<4x8x8xf32, #tpu.memory_space<vmem>>, vector<1x8x8xf32>
      %126 = vector.shape_cast %125 : vector<1x8x8xf32> to vector<8x8xf32>
      %127 = vector.broadcast %112 : vector<8x1xf32> to vector<8x8xf32>
      %128 = arith.mulf %127, %126 : vector<8x8xf32>
      %cst_95 = arith.constant dense<0.000000e+00> : vector<8x8xf32>
      %129 = tpu.matmul %115, %102, %cst_95 {dimension_numbers = #tpu.dot_dimension_numbers<[1], [0], [0], [1], [0, 0, 1, 1], [], []>} : vector<8x8xf32>, vector<8x8xf32>, vector<8x8xf32> -> vector<8x8xf32>
      %130 = arith.addf %128, %129 : vector<8x8xf32>
      %c2_96 = arith.constant 2 : index
      %c0_97 = arith.constant 0 : index
      %c0_98 = arith.constant 0 : index
      %131 = vector.load %arg11[%c2_96, %c0_97, %c0_98] : memref<4x8x8xf32, #tpu.memory_space<vmem>>, vector<1x8x8xf32>
      %132 = vector.shape_cast %131 : vector<1x8x8xf32> to vector<8x8xf32>
      %133 = vector.shape_cast %130 : vector<8x8xf32> to vector<1x8x8xf32>
      tpu.vector_store %arg11[%c2_96, %c0_97, %c0_98], %133 {strides = array<i32>} : memref<4x8x8xf32, #tpu.memory_space<vmem>>, vector<1x8x8xf32>,
      %c2_99 = arith.constant 2 : index
      %c0_100 = arith.constant 0 : index
      %c0_101 = arith.constant 0 : index
      %134 = vector.load %arg9[%c2_99, %c0_100, %c0_101] : memref<4x8x1xf32, #tpu.memory_space<vmem>>, vector<1x8x1xf32>
      %135 = vector.shape_cast %134 : vector<1x8x1xf32> to vector<8x1xf32>
      %136 = vector.shape_cast %110 : vector<8x1xf32> to vector<1x8x1xf32>
      tpu.vector_store %arg9[%c2_99, %c0_100, %c0_101], %136 {strides = array<i32>} : memref<4x8x1xf32, #tpu.memory_space<vmem>>, vector<1x8x1xf32>,
      %c0_102 = arith.constant 0 : index
      %c0_103 = arith.constant 0 : index
      %c0_104 = arith.constant 0 : index
      %c24 = arith.constant 24 : index
      %137 = vector.load %arg5[%c0_102, %c0_103, %c0_104, %c24] : memref<1x1x8x32xf32, #tpu.memory_space<vmem>>, vector<1x1x8x8xf32>
      %138 = vector.shape_cast %137 : vector<1x1x8x8xf32> to vector<8x8xf32>
      %c0_105 = arith.constant 0 : index
      %c0_106 = arith.constant 0 : index
      %c0_107 = arith.constant 0 : index
      %c24_108 = arith.constant 24 : index
      %139 = vector.load %arg6[%c0_105, %c0_106, %c0_107, %c24_108] : memref<1x1x8x32xf32, #tpu.memory_space<vmem>>, vector<1x1x8x8xf32>
      %140 = vector.shape_cast %139 : vector<1x1x8x8xf32> to vector<8x8xf32>
      %c3 = arith.constant 3 : index
      %c0_109 = arith.constant 0 : index
      %c0_110 = arith.constant 0 : index
      %141 = vector.load %arg8[%c3, %c0_109, %c0_110] : memref<4x8x8xf32, #tpu.memory_space<vmem>>, vector<1x8x8xf32>
      %142 = vector.shape_cast %141 : vector<1x8x8xf32> to vector<8x8xf32>
      %cst_111 = arith.constant dense<0.000000e+00> : vector<8x8xf32>
      %143 = tpu.matmul %142, %138, %cst_111 {dimension_numbers = #tpu.dot_dimension_numbers<[1], [1], [0], [0], [0, 0, 1, 0], [], []>} : vector<8x8xf32>, vector<8x8xf32>, vector<8x8xf32> -> vector<8x8xf32>
      %c3_112 = arith.constant 3 : index
      %c0_113 = arith.constant 0 : index
      %c0_114 = arith.constant 0 : index
      %144 = vector.load %arg9[%c3_112, %c0_113, %c0_114] : memref<4x8x1xf32, #tpu.memory_space<vmem>>, vector<1x8x1xf32>
      %145 = vector.shape_cast %144 : vector<1x8x1xf32> to vector<8x1xf32>
      %cst_115 = arith.constant dense<0xFF800000> : vector<8xf32>
      %146 = vector.multi_reduction <maximumf>, %143, %cst_115 [1] : vector<8x8xf32> to vector<8xf32>
      %147 = vector.shape_cast %146 : vector<8xf32> to vector<8x1xf32>
      %148 = arith.maximumf %145, %147 : vector<8x1xf32>
      %149 = arith.subf %145, %148 : vector<8x1xf32>
      %150 = math.exp %149 : vector<8x1xf32>
      %151 = vector.broadcast %148 : vector<8x1xf32> to vector<8x8xf32>
      %152 = arith.subf %143, %151 : vector<8x8xf32>
      %153 = math.exp %152 : vector<8x8xf32>
      %c3_116 = arith.constant 3 : index
      %c0_117 = arith.constant 0 : index
      %c0_118 = arith.constant 0 : index
      %154 = vector.load %arg10[%c3_116, %c0_117, %c0_118] : memref<4x8x1xf32, #tpu.memory_space<vmem>>, vector<1x8x1xf32>
      %155 = vector.shape_cast %154 : vector<1x8x1xf32> to vector<8x1xf32>
      %156 = arith.mulf %150, %155 : vector<8x1xf32>
      %cst_119 = arith.constant dense<0.000000e+00> : vector<8xf32>
      %157 = vector.multi_reduction <add>, %153, %cst_119 [1] : vector<8x8xf32> to vector<8xf32>
      %158 = vector.shape_cast %157 : vector<8xf32> to vector<8x1xf32>
      %159 = arith.addf %156, %158 : vector<8x1xf32>
      %c3_120 = arith.constant 3 : index
      %c0_121 = arith.constant 0 : index
      %c0_122 = arith.constant 0 : index
      %160 = vector.load %arg10[%c3_120, %c0_121, %c0_122] : memref<4x8x1xf32, #tpu.memory_space<vmem>>, vector<1x8x1xf32>
      %161 = vector.shape_cast %160 : vector<1x8x1xf32> to vector<8x1xf32>
      %162 = vector.shape_cast %159 : vector<8x1xf32> to vector<1x8x1xf32>
      tpu.vector_store %arg10[%c3_120, %c0_121, %c0_122], %162 {strides = array<i32>} : memref<4x8x1xf32, #tpu.memory_space<vmem>>, vector<1x8x1xf32>,
      %c3_123 = arith.constant 3 : index
      %c0_124 = arith.constant 0 : index
      %c0_125 = arith.constant 0 : index
      %163 = vector.load %arg11[%c3_123, %c0_124, %c0_125] : memref<4x8x8xf32, #tpu.memory_space<vmem>>, vector<1x8x8xf32>
      %164 = vector.shape_cast %163 : vector<1x8x8xf32> to vector<8x8xf32>
      %165 = vector.broadcast %150 : vector<8x1xf32> to vector<8x8xf32>
      %166 = arith.mulf %165, %164 : vector<8x8xf32>
      %cst_126 = arith.constant dense<0.000000e+00> : vector<8x8xf32>
      %167 = tpu.matmul %153, %140, %cst_126 {dimension_numbers = #tpu.dot_dimension_numbers<[1], [0], [0], [1], [0, 0, 1, 1], [], []>} : vector<8x8xf32>, vector<8x8xf32>, vector<8x8xf32> -> vector<8x8xf32>
      %168 = arith.addf %166, %167 : vector<8x8xf32>
      %c3_127 = arith.constant 3 : index
      %c0_128 = arith.constant 0 : index
      %c0_129 = arith.constant 0 : index
      %169 = vector.load %arg11[%c3_127, %c0_128, %c0_129] : memref<4x8x8xf32, #tpu.memory_space<vmem>>, vector<1x8x8xf32>
      %170 = vector.shape_cast %169 : vector<1x8x8xf32> to vector<8x8xf32>
      %171 = vector.shape_cast %168 : vector<8x8xf32> to vector<1x8x8xf32>
      tpu.vector_store %arg11[%c3_127, %c0_128, %c0_129], %171 {strides = array<i32>} : memref<4x8x8xf32, #tpu.memory_space<vmem>>, vector<1x8x8xf32>,
      %c3_130 = arith.constant 3 : index
      %c0_131 = arith.constant 0 : index
      %c0_132 = arith.constant 0 : index
      %172 = vector.load %arg9[%c3_130, %c0_131, %c0_132] : memref<4x8x1xf32, #tpu.memory_space<vmem>>, vector<1x8x1xf32>
      %173 = vector.shape_cast %172 : vector<1x8x1xf32> to vector<8x1xf32>
      %174 = vector.shape_cast %148 : vector<8x1xf32> to vector<1x8x1xf32>
      tpu.vector_store %arg9[%c3_130, %c0_131, %c0_132], %174 {strides = array<i32>} : memref<4x8x1xf32, #tpu.memory_space<vmem>>, vector<1x8x1xf32>,
    } else {
    }
    %c1_i32_5 = arith.constant 1 : i32
    %17 = arith.addi %1, %c1_i32_5 : i32
    %c1_i32_6 = arith.constant 1 : i32
    %18 = arith.muli %17, %c1_i32_6 : i32
    %c1_i32_7 = arith.constant 1 : i32
    %19 = arith.subi %18, %c1_i32_7 : i32
    %20 = arith.cmpi eq, %3, %19 : i32
    %21 = arith.extui %20 : i1 to i32
    %c0_i32_8 = arith.constant 0 : i32
    %22 = arith.cmpi ne, %21, %c0_i32_8 : i32
    scf.if %22 {
      %c0 = arith.constant 0 : index
      %c0_9 = arith.constant 0 : index
      %c0_10 = arith.constant 0 : index
      %23 = vector.load %arg10[%c0, %c0_9, %c0_10] : memref<4x8x1xf32, #tpu.memory_space<vmem>>, vector<1x8x1xf32>
      %24 = vector.shape_cast %23 : vector<1x8x1xf32> to vector<8x1xf32>
      %25 = tpu.reciprocal %24 {approx = true} : vector<8x1xf32> -> vector<8x1xf32>
      %c0_11 = arith.constant 0 : index
      %c0_12 = arith.constant 0 : index
      %c0_13 = arith.constant 0 : index
      %26 = vector.load %arg11[%c0_11, %c0_12, %c0_13] : memref<4x8x8xf32, #tpu.memory_space<vmem>>, vector<1x8x8xf32>
      %27 = vector.shape_cast %26 : vector<1x8x8xf32> to vector<8x8xf32>
      %28 = vector.broadcast %25 : vector<8x1xf32> to vector<8x8xf32>
      %29 = arith.mulf %27, %28 : vector<8x8xf32>
      %c1 = arith.constant 1 : index
      %c0_14 = arith.constant 0 : index
      %c0_15 = arith.constant 0 : index
      %30 = vector.load %arg10[%c1, %c0_14, %c0_15] : memref<4x8x1xf32, #tpu.memory_space<vmem>>, vector<1x8x1xf32>
      %31 = vector.shape_cast %30 : vector<1x8x1xf32> to vector<8x1xf32>
      %32 = tpu.reciprocal %31 {approx = true} : vector<8x1xf32> -> vector<8x1xf32>
      %c1_16 = arith.constant 1 : index
      %c0_17 = arith.constant 0 : index
      %c0_18 = arith.constant 0 : index
      %33 = vector.load %arg11[%c1_16, %c0_17, %c0_18] : memref<4x8x8xf32, #tpu.memory_space<vmem>>, vector<1x8x8xf32>
      %34 = vector.shape_cast %33 : vector<1x8x8xf32> to vector<8x8xf32>
      %35 = vector.broadcast %32 : vector<8x1xf32> to vector<8x8xf32>
      %36 = arith.mulf %34, %35 : vector<8x8xf32>
      %c2 = arith.constant 2 : index
      %c0_19 = arith.constant 0 : index
      %c0_20 = arith.constant 0 : index
      %37 = vector.load %arg10[%c2, %c0_19, %c0_20] : memref<4x8x1xf32, #tpu.memory_space<vmem>>, vector<1x8x1xf32>
      %38 = vector.shape_cast %37 : vector<1x8x1xf32> to vector<8x1xf32>
      %39 = tpu.reciprocal %38 {approx = true} : vector<8x1xf32> -> vector<8x1xf32>
      %c2_21 = arith.constant 2 : index
      %c0_22 = arith.constant 0 : index
      %c0_23 = arith.constant 0 : index
      %40 = vector.load %arg11[%c2_21, %c0_22, %c0_23] : memref<4x8x8xf32, #tpu.memory_space<vmem>>, vector<1x8x8xf32>
      %41 = vector.shape_cast %40 : vector<1x8x8xf32> to vector<8x8xf32>
      %42 = vector.broadcast %39 : vector<8x1xf32> to vector<8x8xf32>
      %43 = arith.mulf %41, %42 : vector<8x8xf32>
      %c3 = arith.constant 3 : index
      %c0_24 = arith.constant 0 : index
      %c0_25 = arith.constant 0 : index
      %44 = vector.load %arg10[%c3, %c0_24, %c0_25] : memref<4x8x1xf32, #tpu.memory_space<vmem>>, vector<1x8x1xf32>
      %45 = vector.shape_cast %44 : vector<1x8x1xf32> to vector<8x1xf32>
      %46 = tpu.reciprocal %45 {approx = true} : vector<8x1xf32> -> vector<8x1xf32>
      %c3_26 = arith.constant 3 : index
      %c0_27 = arith.constant 0 : index
      %c0_28 = arith.constant 0 : index
      %47 = vector.load %arg11[%c3_26, %c0_27, %c0_28] : memref<4x8x8xf32, #tpu.memory_space<vmem>>, vector<1x8x8xf32>
      %48 = vector.shape_cast %47 : vector<1x8x8xf32> to vector<8x8xf32>
      %49 = vector.broadcast %46 : vector<8x1xf32> to vector<8x8xf32>
      %50 = arith.mulf %48, %49 : vector<8x8xf32>
      %51 = tpu.concatenate %29, %36, %43, %50 in 1 : vector<8x8xf32>, vector<8x8xf32>, vector<8x8xf32>, vector<8x8xf32> -> vector<8x32xf32>
      %c0_29 = arith.constant 0 : index
      %c0_30 = arith.constant 0 : index
      %c0_31 = arith.constant 0 : index
      %52 = vector.load %arg7[%c0_29, %c0_30, %c0_31] : memref<1x8x32xf32, #tpu.memory_space<vmem>>, vector<1x8x32xf32>
      %53 = vector.shape_cast %52 : vector<1x8x32xf32> to vector<8x32xf32>
      %54 = vector.shape_cast %51 : vector<8x32xf32> to vector<1x8x32xf32>
      tpu.vector_store %arg7[%c0_29, %c0_30, %c0_31], %54 {strides = array<i32>} : memref<1x8x32xf32, #tpu.memory_space<vmem>>, vector<1x8x32xf32>,
    } else {
    }
    return
  }
  func.func @transform_0(%arg0: i32, %arg1: i32, %arg2: memref<1xi32, #tpu.memory_space<smem>>, %arg3: memref<1xi32, #tpu.memory_space<smem>>) -> (i32, i32, i32, i32) {
    %0 = arith.index_cast %arg1 : i32 to index
    %1 = memref.load %arg2[%0] : memref<1xi32, #tpu.memory_space<smem>>
    %c0_i32 = arith.constant 0 : i32
    %c0_i32_0 = arith.constant 0 : i32
    %c0_i32_1 = arith.constant 0 : i32
    return %c0_i32, %arg0, %1, %c0_i32_0 : i32, i32, i32, i32
  }
  func.func @transform_1(%arg0: i32, %arg1: i32, %arg2: memref<1xi32, #tpu.memory_space<smem>>, %arg3: memref<1xi32, #tpu.memory_space<smem>>) -> (i32, i32, i32, i32) {
    %0 = arith.index_cast %arg1 : i32 to index
    %1 = memref.load %arg3[%0] : memref<1xi32, #tpu.memory_space<smem>>
    %c1_i32 = arith.constant 1 : i32
    %c0_i32 = arith.constant 0 : i32
    %c0_i32_0 = arith.constant 0 : i32
    return %c1_i32, %arg0, %1, %c0_i32 : i32, i32, i32, i32
  }
  func.func @transform_2(%arg0: i32, %arg1: i32, %arg2: memref<1xi32, #tpu.memory_space<smem>>, %arg3: memref<1xi32, #tpu.memory_space<smem>>) -> (i32, i32, i32, i32) {
    %0 = arith.index_cast %arg1 : i32 to index
    %1 = memref.load %arg3[%0] : memref<1xi32, #tpu.memory_space<smem>>
    %c2_i32 = arith.constant 2 : i32
    %c0_i32 = arith.constant 0 : i32
    %c0_i32_0 = arith.constant 0 : i32
    return %c2_i32, %arg0, %1, %c0_i32 : i32, i32, i32, i32
  }
  func.func @transform_3(%arg0: i32, %arg1: i32, %arg2: memref<1xi32, #tpu.memory_space<smem>>, %arg3: memref<1xi32, #tpu.memory_space<smem>>) -> (i32, i32, i32) {
    %0 = arith.index_cast %arg1 : i32 to index
    %1 = memref.load %arg2[%0] : memref<1xi32, #tpu.memory_space<smem>>
    %c0_i32 = arith.constant 0 : i32
    %c0_i32_0 = arith.constant 0 : i32
    return %arg0, %1, %c0_i32 : i32, i32, i32
  }
}

module attributes {stable_mosaic.version = 11 : i64} {
  func.func @_matmul_kernel(%arg0: i32, %arg1: i32, %arg2: i32, %arg3: memref<16x32xf32, #tpu.memory_space<vmem>>, %arg4: memref<32x32xf32, #tpu.memory_space<vmem>>, %arg5: memref<16x32xf32, #tpu.memory_space<vmem>>, %arg6: memref<16x32xf32, #tpu.memory_space<vmem>>) attributes {dimension_semantics = [#tpu.dimension_semantics<parallel>, #tpu.dimension_semantics<parallel>, #tpu.dimension_semantics<arbitrary>], iteration_bounds = array<i64: 1, 1, 1>, scalar_prefetch = 0 : i64, scratch_operands = 1 : i64, tpu.core_type = #tpu.core_type<tc>, window_params = [{transform_indices = @transform_0, window_bounds = array<i64: 16, 32>}, {transform_indices = @transform_1, window_bounds = array<i64: 32, 32>}, {transform_indices = @transform_2, window_bounds = array<i64: 16, 32>}]} {
    %c0_i32 = arith.constant 0 : i32
    %0 = arith.cmpi eq, %arg2, %c0_i32 : i32
    %1 = arith.extui %0 : i1 to i32
    %c0_i32_0 = arith.constant 0 : i32
    %2 = arith.cmpi ne, %1, %c0_i32_0 : i32
    scf.if %2 {
      %cst_10 = arith.constant 0.000000e+00 : f32
      %12 = vector.broadcast %cst_10 : f32 to vector<16x32xf32>
      %c0_11 = arith.constant 0 : index
      %c0_12 = arith.constant 0 : index
      %13 = vector.load %arg6[%c0_11, %c0_12] : memref<16x32xf32, #tpu.memory_space<vmem>>, vector<16x32xf32>
      tpu.vector_store %arg6[%c0_11, %c0_12], %12 {strides = array<i32>} : memref<16x32xf32, #tpu.memory_space<vmem>>, vector<16x32xf32>,
    } else {
    }
    %c0 = arith.constant 0 : index
    %c0_1 = arith.constant 0 : index
    %3 = vector.load %arg6[%c0, %c0_1] : memref<16x32xf32, #tpu.memory_space<vmem>>, vector<16x32xf32>
    %c0_2 = arith.constant 0 : index
    %c0_3 = arith.constant 0 : index
    %4 = vector.load %arg3[%c0_2, %c0_3] : memref<16x32xf32, #tpu.memory_space<vmem>>, vector<16x32xf32>
    %c0_4 = arith.constant 0 : index
    %c0_5 = arith.constant 0 : index
    %5 = vector.load %arg4[%c0_4, %c0_5] : memref<32x32xf32, #tpu.memory_space<vmem>>, vector<32x32xf32>
    %cst = arith.constant dense<0.000000e+00> : vector<16x32xf32>
    %6 = tpu.matmul %4, %5, %cst {dimension_numbers = #tpu.dot_dimension_numbers<[1], [0], [0], [1], [0, 0, 1, 1], [], []>} : vector<16x32xf32>, vector<32x32xf32>, vector<16x32xf32> -> vector<16x32xf32>
    %7 = arith.addf %3, %6 : vector<16x32xf32>
    %c0_6 = arith.constant 0 : index
    %c0_7 = arith.constant 0 : index
    %8 = vector.load %arg6[%c0_6, %c0_7] : memref<16x32xf32, #tpu.memory_space<vmem>>, vector<16x32xf32>
    tpu.vector_store %arg6[%c0_6, %c0_7], %7 {strides = array<i32>} : memref<16x32xf32, #tpu.memory_space<vmem>>, vector<16x32xf32>,
    %c0_i32_8 = arith.constant 0 : i32
    %9 = arith.cmpi eq, %arg2, %c0_i32_8 : i32
    %10 = arith.extui %9 : i1 to i32
    %c0_i32_9 = arith.constant 0 : i32
    %11 = arith.cmpi ne, %10, %c0_i32_9 : i32
    scf.if %11 {
      %c0_10 = arith.constant 0 : index
      %c0_11 = arith.constant 0 : index
      %12 = vector.load %arg6[%c0_10, %c0_11] : memref<16x32xf32, #tpu.memory_space<vmem>>, vector<16x32xf32>
      %c0_12 = arith.constant 0 : index
      %c0_13 = arith.constant 0 : index
      %13 = vector.load %arg5[%c0_12, %c0_13] : memref<16x32xf32, #tpu.memory_space<vmem>>, vector<16x32xf32>
      tpu.vector_store %arg5[%c0_12, %c0_13], %12 {strides = array<i32>} : memref<16x32xf32, #tpu.memory_space<vmem>>, vector<16x32xf32>,
    } else {
    }
    return
  }
  func.func @transform_0(%arg0: i32, %arg1: i32, %arg2: i32) -> (i32, i32) {
    %c0_i32 = arith.constant 0 : i32
    return %arg0, %arg2 : i32, i32
  }
  func.func @transform_1(%arg0: i32, %arg1: i32, %arg2: i32) -> (i32, i32) {
    %c0_i32 = arith.constant 0 : i32
    return %arg2, %arg1 : i32, i32
  }
  func.func @transform_2(%arg0: i32, %arg1: i32, %arg2: i32) -> (i32, i32) {
    %c0_i32 = arith.constant 0 : i32
    return %arg0, %arg1 : i32, i32
  }
}

</mosaic_0001>

<llo_original>
// kernel: causal_self_attention.5
$region0: #{causal_self_attention.5}
  #allocation0 [shape = 'u32[]', space=smem, size = 0x4, offset = 0x4, fixed_abs, tag = 'smem constant byte address 0x4 - core index']
  #allocation1 [shape = 'u32[144,128]{1,0:T(1,128)}', space=vmem, size = 0x12000, scoped, tag = 'internal scratch']
  #allocation2 [shape = 'f32[16,32]{1,0:T(8,128)}', space=vmem, size = 0x2000, scoped, tag = 'scratch operand']
  %s0 = inlined_call_operand.vmem [shape: f32[16,32], index: 0, kind: input, shape index: {}]
  %s1 = inlined_call_operand.vmem [shape: f32[32,32], index: 1, kind: input, shape index: {}]
  %s2 = inlined_call_operand.hbm [shape: f32[16,32], index: 2, kind: output, shape index: {}]
  %s3 = sld [smem:[#allocation0]]
  $region26: #{causal_self_attention.5} parent=0
    _
  %s5 = ssub.s32 1, %s3
  %s6 = scalar_select 0, %s5, %s3
  $region1: #{causal_self_attention.5} parent=0
    #allocation3 [shape = 'u8[8192]{0}', space=vmem, size = 0x2000, scoped, tag = 'output window, operand 0, single buffered']
    #allocation4 [shape = 's32[1]{0}', space=sflag, size = 0x4, scoped, tag = 'scoped memory for causal_self_attention.5']
    %7 = vsyncpa [#allocation4], 0
    // Predicated region
    $region2: #{causal_self_attention.5} parent=1 // pred_check
      _
    $region3: #{causal_self_attention.5} parent=1 // pred_check_branch
      %9 = sbr.rel (0) target = $region5
    $region4: #{causal_self_attention.5} parent=1 // pred_region
      _
    $region5: #{causal_self_attention.5} parent=1 // pred_fallthru
      _
    // Predicated region
    $region6: #{causal_self_attention.5} parent=1 // pred_check
      _
    $region7: #{causal_self_attention.5} parent=1 // pred_check_branch
      %11 = sbr.rel (0) target = $region9
    $region8: #{causal_self_attention.5} parent=1 // pred_region
      _
    $region9: #{causal_self_attention.5} parent=1 // pred_fallthru
      _
    %p12 = scmp.eq.s32.totalorder 0, 0
    // Predicated region
    $region10: #{causal_self_attention.5} parent=1 // pred_check
      %p13 = pneg %p12
    $region11: #{causal_self_attention.5} parent=1 // pred_check_branch
      %15 = sbr.rel (%p13) target = $region13
    $region12: #{causal_self_attention.5} parent=1 // pred_region
      %vm16 = vcmask 261120
      %17 = vst.msk [vmem:[#allocation2] sm:$0xff] %vm16, 0.0
      %18 = vst.msk [vmem:[#allocation2 + $0x8] sm:$0xff] %vm16, 0.0
    $region13: #{causal_self_attention.5} parent=1 // pred_fallthru
      _
    %v19 = vld [vmem:[#allocation2] sm:$0xff]
    %v20 = vld [vmem:[#allocation2 + $0x8] sm:$0xff]
    %v21 = vld [vmem:[%s0] sm:$0xff]
    %v22 = vld [vmem:[%s0 + $0x8] sm:$0xff]
    %v23 = vld [vmem:[%s1] sm:$0xff]
    %v24 = vld [vmem:[%s1 + $0x8] sm:$0xff]
    %v25 = vld [vmem:[%s1 + $0x10] sm:$0xff]
    %v26 = vld [vmem:[%s1 + $0x18] sm:$0xff]
    %vm27 = vcmask 261120
    %v29 = vsel %vm27, %v21, 0
    %v32 = vsel %vm27, %v22, 0
    %34 = vmatprep.subr.mxu0 0.0
    %35 = vmatpush1.msra.mxu0 %v23
    %36 = vmatprep.subr.mxu0 0.0
    %37 = vmatpush1.msra.mxu0 %v24
    %38 = vmatprep.subr.mxu0 0.0
    %39 = vmatpush1.msra.mxu0 %v25
    %40 = vmatprep.subr.mxu0 0.0
    %41 = vmatpush1.msra.mxu0 %v26
    %42 = vmatprep.subr.mxu0 0.0
    %43 = vmatpush1.msra.mxu0 0.0
    %44 = vmatprep.subr.mxu0 0.0
    %45 = vmatpush1.msra.mxu0 0.0
    %46 = vmatprep.subr.mxu0 0.0
    %47 = vmatpush1.msra.mxu0 0.0
    %48 = vmatprep.subr.mxu0 0.0
    %49 = vmatpush1.msra.mxu0 0.0
    %50 = vmatprep.subr.mxu0 0.0
    %51 = vmatpush1.msra.mxu0 0.0
    %52 = vmatprep.subr.mxu0 0.0
    %53 = vmatpush1.msra.mxu0 0.0
    %54 = vmatprep.subr.mxu0 0.0
    %55 = vmatpush1.msra.mxu0 0.0
    %56 = vmatprep.subr.mxu0 0.0
    %57 = vmatpush1.msra.mxu0 0.0
    %58 = vmatprep.subr.mxu0 0.0
    %59 = vmatpush1.msra.mxu0 0.0
    %60 = vmatprep.subr.mxu0 0.0
    %61 = vmatpush1.msra.mxu0 0.0
    %62 = vmatprep.subr.mxu0 0.0
    %63 = vmatpush1.msra.mxu0 0.0
    %64 = vmatprep.subr.mxu0 0.0
    %65 = vmatpush1.msra.mxu0 0.0
    %66 = vmatprep.subr.mxu0 0.0
    %67 = vmatpush1.msra.mxu0 0.0
    %68 = vmatprep.subr.mxu0 0.0
    %69 = vmatpush1.msra.mxu0 0.0
    %70 = vmatprep.subr.mxu0 0.0
    %71 = vmatpush1.msra.mxu0 0.0
    %72 = vmatprep.subr.mxu0 0.0
    %73 = vmatpush1.msra.mxu0 0.0
    %74 = vmatprep.subr.mxu0 0.0
    %75 = vmatpush1.msra.mxu0 0.0
    %76 = vmatprep.subr.mxu0 0.0
    %77 = vmatpush1.msra.mxu0 0.0
    %78 = vmatprep.subr.mxu0 0.0
    %79 = vmatpush1.msra.mxu0 0.0
    %80 = vmatprep.subr.mxu0 0.0
    %81 = vmatpush1.msra.mxu0 0.0
    %82 = vmatprep.subr.mxu0 0.0
    %83 = vmatpush1.msra.mxu0 0.0
    %84 = vmatprep.subr.mxu0 0.0
    %85 = vmatpush1.msra.mxu0 0.0
    %86 = vmatprep.subr.mxu0 0.0
    %87 = vmatpush1.msra.mxu0 0.0
    %88 = vmatprep.subr.mxu0 0.0
    %89 = vmatpush1.msra.mxu0 0.0
    %90 = vmatprep.subr.mxu0 0.0
    %91 = vmatpush1.msra.mxu0 0.0
    %92 = vmatprep.subr.mxu0 0.0
    %93 = vmatpush1.msra.mxu0 0.0
    %94 = vmatprep.subr.mxu0 0.0
    %95 = vmatpush1.msra.mxu0 0.0
    %96 = vmatprep.subr.mxu0 0.0
    %97 = vmatpush1.msra.mxu0 0.0
    %98 = vmatprep.mubr.f32.mxu0 0.0
    %99 = vmatmul.mubr.f32.gmra.mrb[0].mxu0 %v29
    %v100 = vpop.f32.mrb[0].mxu0
    %v101 = vadd.f32 0.0, %v100
    %v102 = vpop.f32.mrb[0].mxu0
    %103 = vmatprep.mubr.f32.mxu0 0.0
    %104 = vmatmul.mubr.f32.gmra.mrb[0].mxu0 %v32
    %v105 = vpop.f32.mrb[0].mxu0
    %v106 = vadd.f32 0.0, %v105
    %v107 = vpop.f32.mrb[0].mxu0
    %108 = vdwg.mxu0
    %v109 = vadd.f32 %v19, %v101
    %v110 = vadd.f32 %v20, %v106
    %111 = vst.msk [vmem:[#allocation2] sm:$0xff] %vm27, %v109
    %112 = vst.msk [vmem:[#allocation2 + $0x8] sm:$0xff] %vm27, %v110
    // Predicated region
    $region14: #{causal_self_attention.5} parent=1 // pred_check
      %p113 = pneg %p12
    $region15: #{causal_self_attention.5} parent=1 // pred_check_branch
      %115 = sbr.rel (%p113) target = $region17
    $region16: #{causal_self_attention.5} parent=1 // pred_region
      %v116 = vld [vmem:[#allocation2] sm:$0xff]
      %v117 = vld [vmem:[#allocation2 + $0x8] sm:$0xff]
      %118 = vst.msk [vmem:[#allocation3] sm:$0xff] %vm27, %v116
      %119 = vst.msk [vmem:[#allocation3 + $0x8] sm:$0xff] %vm27, %v117
    $region17: #{causal_self_attention.5} parent=1 // pred_fallthru
      _
    // Predicated region
    $region18: #{causal_self_attention.5} parent=1 // pred_check
      _
    $region19: #{causal_self_attention.5} parent=1 // pred_check_branch
      %121 = sbr.rel (0) target = $region21
    $region20: #{causal_self_attention.5} parent=1 // pred_region
      %s123 = ssub.s32 256, 256
      %124 = vsyncadd [#allocation4], %s123
      %s125 = sshll.u32 [#allocation3], 4
      %s126 = int_to_ptr.vmem [resolvable:$true] %s125
      %131 = dma.vmem_to_hbm [thread:$0]  %s126, 256, %s2, [#allocation4], 128, 128, 8
    $region21: #{causal_self_attention.5} parent=1 // pred_fallthru
      _
    // Predicated region
    $region22: #{causal_self_attention.5} parent=1 // pred_check
      _
    $region23: #{causal_self_attention.5} parent=1 // pred_check_branch
      %133 = sbr.rel (0) target = $region25
    $region24: #{causal_self_attention.5} parent=1 // pred_region
      %134 = dma.done [#allocation4], 256
    $region25: #{causal_self_attention.5} parent=1 // pred_fallthru
      _
    %135 = vsyncpa [#allocation4], 1

// kernel: causal_self_attention.3
$region0: #{causal_self_attention.3}
  #allocation0 [shape = 'u32[]', space=smem, size = 0x4, offset = 0x4, fixed_abs, tag = 'smem constant byte address 0x4 - core index']
  #allocation1 [shape = 'u32[144,128]{1,0:T(1,128)}', space=vmem, size = 0x12000, scoped, tag = 'internal scratch']
  #allocation2 [shape = 'f32[8,32]{1,0:T(8,128)}', space=vmem, size = 0x1000, scoped, tag = 'scratch operand']
  %s0 = inlined_call_operand.vmem [shape: f32[16,32], index: 0, kind: input, shape index: {}]
  %s1 = inlined_call_operand.hbm [shape: f32[3,32,32], index: 1, kind: input, shape index: {}]
  %s2 = inlined_call_operand.vmem [shape: f32[8,4], index: 2, kind: input, shape index: {}]
  %s3 = inlined_call_operand.vmem [shape: f32[8,4], index: 3, kind: input, shape index: {}]
  %s4 = inlined_call_operand.vmem [shape: f32[3,16,32], index: 4, kind: output, shape index: {}]
  %s5 = sld [smem:[#allocation0]]
  $region65: #{causal_self_attention.3} parent=0
    _
  %s7 = ssub.s32 1, %s5
  %s8 = scalar_select 0, %s7, %s5
  $region1: #{causal_self_attention.3} parent=0
    #allocation3 [shape = 'u8[32768]{0}', space=vmem, size = 0x8000, scoped, tag = 'input window, operand 1']
    #allocation4 [shape = 's32[2]{0}', space=sflag, size = 0x8, scoped, tag = 'scoped memory for causal_self_attention.3']
    %9 = vsyncpa [#allocation4], 0
    %s10 = scalar_lea.sflag [#allocation4], 1
    %11 = vsyncpa %s10, 0
    loop: start=0, step=1, limit=8
    $region2: #{causal_self_attention.3} parent=1 // loop_pre_header
      _
    $region3: #{causal_self_attention.3} parent=1 // loop_header
      %s13 = sphi 0, %s17
      %p14 = scmp.ge.s32.totalorder %s13, 8
      %s20 = sphi 0, %s46
      %s21 = sphi 0, %s42
      %s22 = sphi 0, %s38
      %s23 = sphi 0, %s34
      %s24 = sphi 0, %s20
      %s25 = sphi 0, %s21
      %s26 = sphi 0, %s22
      %s27 = sphi 0, %s23
      %s28 = sphi 0, %s24
      %s29 = sphi 0, %s25
      %s30 = sphi 0, %s26
      %s31 = sphi 0, %s27
      %s51 = sphi 0, %s53
      %s54 = sphi 0, %s51
      %s55 = sphi 0, %s54
      %s71 = sphi 0, %s55
      %s81 = sphi 0, %s83
      %s84 = sphi 0, %s81
      %s85 = sphi 0, %s84
      %s101 = sphi 0, %s85
      %s105 = sphi 0, %s105
      %s107 = sphi 0, %s105
      %s108 = sphi 0, %s107
      %s122 = sphi 0, %s108
      %s126 = sphi 0, %s126
      %s128 = sphi 0, %s126
      %s129 = sphi 0, %s128
      %s143 = sphi 0, %s129
      %s153 = sphi 0, %s155
      %s156 = sphi 0, %s153
      %s157 = sphi 0, %s156
      %s173 = sphi 0, %s157
    $region4: #{causal_self_attention.3} parent=1 // loop_header_branch
      %16 = sbr.rel (%p14) target = $region8
    $region5: #{causal_self_attention.3} parent=1 // loop_body
      %s18 = ssub.s32 %s13, 1
      %s19 = ssub.s32 %s13, 2
      %s32 = sadd.s32 1, %s23
      %p33 = scmp.ge.s32.totalorder %s32, 1
      %s34 = scalar_select %p33, 0, %s32
      %s35 = sadd.s32 1, %s22
      %s36 = scalar_select %p33, %s35, %s22
      %p37 = scmp.ge.s32.totalorder %s36, 1
      %s38 = scalar_select %p37, 0, %s36
      %s39 = sadd.s32 1, %s21
      %s40 = scalar_select %p37, %s39, %s21
      %p41 = scmp.ge.s32.totalorder %s40, 2
      %s42 = scalar_select %p41, 0, %s40
      %s43 = sadd.s32 1, %s20
      %s44 = scalar_select %p41, %s43, %s20
      %p45 = scmp.ge.s32.totalorder %s44, 3
      %s46 = scalar_select %p45, 0, %s44
      %s47 = ssub.s32 %s21, %s42
      %s48 = ssub.s32 %s23, %s34
      %s49 = sor.u32 %s47, %s48
      %p50 = scmp.eq.s32.totalorder %s49, 0
      %s52 = sadd.s32 %s51, 1
      %s53 = scalar_select %p50, %s51, %s52
      %p56 = pneg %p50
      %p57 = scmp.eq.s32.totalorder %s13, 5
      %p58 = por %p56, %p57
      %p59 = scmp.ne.s32.totalorder %s51, %s54
      %p60 = scmp.eq.s32.totalorder %s13, 0
      %p61 = por %p59, %p60
      %p62 = scmp.ne.s32.totalorder %s51, %s54
      %p63 = scmp.eq.s32.totalorder %s18, 5
      %p64 = por %p62, %p63
      %p65 = scmp.ne.s32.totalorder %s54, %s55
      %p66 = scmp.eq.s32.totalorder %s18, 0
      %p67 = por %p65, %p66
      %p68 = scmp.ne.s32.totalorder %s54, %s55
      %p69 = scmp.eq.s32.totalorder %s19, 5
      %p70 = por %p68, %p69
      %p72 = scmp.ne.s32.totalorder %s55, %s71
      %p73 = scmp.eq.s32.totalorder %s19, 0
      %p74 = por %p72, %p73
      %s75 = ssub.s32 %s20, %s46
      %s76 = ssub.s32 %s23, %s34
      %s77 = sor.u32 %s75, %s76
      %s78 = ssub.s32 %s22, %s38
      %s79 = sor.u32 %s77, %s78
      %p80 = scmp.eq.s32.totalorder %s79, 0
      %s82 = sadd.s32 %s81, 1
      %s83 = scalar_select %p80, %s81, %s82
      %p86 = pneg %p80
      %p87 = scmp.eq.s32.totalorder %s13, 5
      %p88 = por %p86, %p87
      %p89 = scmp.ne.s32.totalorder %s81, %s84
      %p90 = scmp.eq.s32.totalorder %s13, 0
      %p91 = por %p89, %p90
      %p92 = scmp.ne.s32.totalorder %s81, %s84
      %p93 = scmp.eq.s32.totalorder %s18, 5
      %p94 = por %p92, %p93
      %p95 = scmp.ne.s32.totalorder %s84, %s85
      %p96 = scmp.eq.s32.totalorder %s18, 0
      %p97 = por %p95, %p96
      %p98 = scmp.ne.s32.totalorder %s84, %s85
      %p99 = scmp.eq.s32.totalorder %s19, 5
      %p100 = por %p98, %p99
      %p102 = scmp.ne.s32.totalorder %s85, %s101
      %p103 = scmp.eq.s32.totalorder %s19, 0
      %p104 = por %p102, %p103
      %s106 = sadd.s32 %s105, 1
      %p109 = scmp.eq.s32.totalorder %s13, 5
      %p110 = scmp.ne.s32.totalorder %s105, %s107
      %p111 = scmp.eq.s32.totalorder %s13, 0
      %p112 = por %p110, %p111
      %p113 = scmp.ne.s32.totalorder %s105, %s107
      %p114 = scmp.eq.s32.totalorder %s18, 5
      %p115 = por %p113, %p114
      %p116 = scmp.ne.s32.totalorder %s107, %s108
      %p117 = scmp.eq.s32.totalorder %s18, 0
      %p118 = por %p116, %p117
      %p119 = scmp.ne.s32.totalorder %s107, %s108
      %p120 = scmp.eq.s32.totalorder %s19, 5
      %p121 = por %p119, %p120
      %p123 = scmp.ne.s32.totalorder %s108, %s122
      %p124 = scmp.eq.s32.totalorder %s19, 0
      %p125 = por %p123, %p124
      %s127 = sadd.s32 %s126, 1
      %p130 = scmp.eq.s32.totalorder %s13, 5
      %p131 = scmp.ne.s32.totalorder %s126, %s128
      %p132 = scmp.eq.s32.totalorder %s13, 0
      %p133 = por %p131, %p132
      %p134 = scmp.ne.s32.totalorder %s126, %s128
      %p135 = scmp.eq.s32.totalorder %s18, 5
      %p136 = por %p134, %p135
      %p137 = scmp.ne.s32.totalorder %s128, %s129
      %p138 = scmp.eq.s32.totalorder %s18, 0
      %p139 = por %p137, %p138
      %p140 = scmp.ne.s32.totalorder %s128, %s129
      %p141 = scmp.eq.s32.totalorder %s19, 5
      %p142 = por %p140, %p141
      %p144 = scmp.ne.s32.totalorder %s129, %s143
      %p145 = scmp.eq.s32.totalorder %s19, 0
      %p146 = por %p144, %p145
      %s147 = ssub.s32 %s20, %s46
      %s148 = ssub.s32 %s21, %s42
      %s149 = sor.u32 %s147, %s148
      %s150 = ssub.s32 %s22, %s38
      %s151 = sor.u32 %s149, %s150
      %p152 = scmp.eq.s32.totalorder %s151, 0
      %s154 = sadd.s32 %s153, 1
      %s155 = scalar_select %p152, %s153, %s154
      %p158 = pneg %p152
      %p159 = scmp.eq.s32.totalorder %s13, 5
      %p160 = por %p158, %p159
      %p161 = scmp.ne.s32.totalorder %s153, %s156
      %p162 = scmp.eq.s32.totalorder %s13, 0
      %p163 = por %p161, %p162
      %p164 = scmp.ne.s32.totalorder %s153, %s156
      %p165 = scmp.eq.s32.totalorder %s18, 5
      %p166 = por %p164, %p165
      %p167 = scmp.ne.s32.totalorder %s156, %s157
      %p168 = scmp.eq.s32.totalorder %s18, 0
      %p169 = por %p167, %p168
      %p170 = scmp.ne.s32.totalorder %s156, %s157
      %p171 = scmp.eq.s32.totalorder %s19, 5
      %p172 = por %p170, %p171
      %p174 = scmp.ne.s32.totalorder %s157, %s173
      %p175 = scmp.eq.s32.totalorder %s19, 0
      %p176 = por %p174, %p175
      %p177 = scmp.le.s32.totalorder 1, %s13
      %p178 = scmp.lt.s32.totalorder %s13, 7
      %p179 = pnand %p177, %p178
      %p180 = pneg %p179
      // Predicated region
      $region9: #{causal_self_attention.3} parent=5 // pred_check
        _
      $region10: #{causal_self_attention.3} parent=5 // pred_check_branch
        %182 = sbr.rel (%p179) target = $region12
      $region11: #{causal_self_attention.3} parent=5 // pred_region
        %s183 = ssub.s32 %s13, 1
        // Predicated region
        $region13: #{causal_self_attention.3} parent=11 // pred_check
          %p184 = pneg %p118
        $region14: #{causal_self_attention.3} parent=11 // pred_check_branch
          %186 = sbr.rel (%p184) target = $region16
        $region15: #{causal_self_attention.3} parent=11 // pred_region
          _
        $region16: #{causal_self_attention.3} parent=11 // pred_fallthru
          _
        // Predicated region
        $region17: #{causal_self_attention.3} parent=11 // pred_check
          %p187 = pneg %p139
        $region18: #{causal_self_attention.3} parent=11 // pred_check_branch
          %189 = sbr.rel (%p187) target = $region20
        $region19: #{causal_self_attention.3} parent=11 // pred_region
          _
        $region20: #{causal_self_attention.3} parent=11 // pred_fallthru
          _
      $region12: #{causal_self_attention.3} parent=5 // pred_fallthru
        _
      %p190 = scmp.lt.s32.totalorder %s13, 6
      // Predicated region
      $region21: #{causal_self_attention.3} parent=5 // pred_check
        %p191 = pneg %p190
      $region22: #{causal_self_attention.3} parent=5 // pred_check_branch
        %193 = sbr.rel (%p191) target = $region24
      $region23: #{causal_self_attention.3} parent=5 // pred_region
        // Predicated region
        $region25: #{causal_self_attention.3} parent=23 // pred_check
          %p194 = pneg %p61
        $region26: #{causal_self_attention.3} parent=23 // pred_check_branch
          %196 = sbr.rel (%p194) target = $region28
        $region27: #{causal_self_attention.3} parent=23 // pred_region
          %p197 = scmp.lt.s32.totalorder %s21, 1
          %s198 = scalar_select %p197, %s21, 1
          %p199 = scmp.lt.s32.totalorder %s23, 0
          %s200 = scalar_select %p199, %s23, 0
          %s201 = sadd.s32 %s200, %s198
          %s202 = smul.addr %s201, 8
          %s203 = scalar_lea.vmem %s0, %s202
        $region28: #{causal_self_attention.3} parent=23 // pred_fallthru
          _
        // Predicated region
        $region29: #{causal_self_attention.3} parent=23 // pred_check
          %p204 = pneg %p91
        $region30: #{causal_self_attention.3} parent=23 // pred_check_branch
          %206 = sbr.rel (%p204) target = $region32
        $region31: #{causal_self_attention.3} parent=23 // pred_region
          %s207 = sand.u32 %s81, 1
          %s208 = scalar_lea.sflag [#allocation4], %s207
          %s209 = sand.u32 %s81, 1
          %s210 = smul.addr %s209, 32
          %s211 = scalar_lea.vmem [#allocation3], %s210
          %s212 = smul.u32 4, %s23
          %s214 = ssub.s32 512, 512
          %215 = vsyncadd %s208, %s214
          %s216 = sadd.s32 %s22, %s212
          %s217 = smul.addr %s20, 4
          %s218 = sadd.s32 %s216, %s217
          %s219 = smul.addr %s218, 128
          %s220 = scalar_lea.hbm %s1, %s219
          %s221 = sshll.u32 %s211, 4
          %s222 = int_to_ptr.vmem [resolvable:$true] %s221
          %227 = dma.hbm_to_vmem [thread:$0]  %s220, 512, %s222, %s208, 128, 128, 8
        $region32: #{causal_self_attention.3} parent=23 // pred_fallthru
          _
      $region24: #{causal_self_attention.3} parent=5 // pred_fallthru
        _
      %p228 = scmp.le.s32.totalorder 1, %s13
      %p229 = scmp.lt.s32.totalorder %s13, 7
      %p230 = pnand %p228, %p229
      %p231 = pneg %p230
      // Predicated region
      $region33: #{causal_self_attention.3} parent=5 // pred_check
        _
      $region34: #{causal_self_attention.3} parent=5 // pred_check_branch
        %233 = sbr.rel (%p230) target = $region36
      $region35: #{causal_self_attention.3} parent=5 // pred_region
        %s234 = ssub.s32 %s13, 1
        %s235 = sand.u32 %s84, 1
        %s236 = scalar_lea.sflag [#allocation4], %s235
        %s237 = sand.u32 %s84, 1
        %s238 = smul.addr %s237, 32
        %s239 = scalar_lea.vmem [#allocation3], %s238
        // Predicated region
        $region37: #{causal_self_attention.3} parent=35 // pred_check
          %p240 = pneg %p97
        $region38: #{causal_self_attention.3} parent=35 // pred_check_branch
          %242 = sbr.rel (%p240) target = $region40
        $region39: #{causal_self_attention.3} parent=35 // pred_region
          %243 = dma.done %s236, 512
        $region40: #{causal_self_attention.3} parent=35 // pred_fallthru
          _
        %p244 = scmp.lt.s32.totalorder %s25, 1
        %s245 = scalar_select %p244, %s25, 1
        %p246 = scmp.lt.s32.totalorder %s27, 0
        %s247 = scalar_select %p246, %s27, 0
        %s248 = sadd.s32 %s247, %s245
        %s249 = smul.addr %s248, 8
        %s250 = scalar_lea.vmem %s0, %s249
        %p251 = pneg %p67
        %p252 = pneg %p64
        %s253 = sand.u32 %s84, 1
        %s254 = scalar_lea.sflag [#allocation4], %s253
        %s255 = sand.u32 %s84, 1
        %s256 = smul.addr %s255, 32
        %s257 = scalar_lea.vmem [#allocation3], %s256
        %p258 = pneg %p97
        %p259 = pneg %p94
        %p260 = pneg %p118
        %p261 = pneg %p115
        %p262 = pneg %p139
        %p263 = pneg %p136
        %p264 = pneg %p169
        %p265 = pneg %p166
        %p266 = scmp.lt.s32.totalorder %s24, 2
        %s267 = scalar_select %p266, %s24, 2
        %p268 = scmp.lt.s32.totalorder %s25, 1
        %s269 = scalar_select %p268, %s25, 1
        %p270 = scmp.lt.s32.totalorder %s26, 0
        %s271 = scalar_select %p270, %s26, 0
        %s272 = sadd.s32 %s271, %s269
        %s273 = smul.addr %s267, 2
        %s274 = sadd.s32 %s272, %s273
        %s275 = smul.addr %s274, 8
        %s276 = scalar_lea.vmem %s4, %s275
        %p277 = scmp.lt.s32.totalorder %s25, 1
        %s278 = scalar_select %p277, %s25, 1
        %p279 = scmp.lt.s32.totalorder %s27, 0
        %s280 = scalar_select %p279, %s27, 0
        %s281 = sadd.s32 %s280, %s278
        %s282 = smul.addr %s281, 8
        %s283 = scalar_lea.vmem %s0, %s282
        %s284 = smul.u32 4, %s27
        %p285 = scmp.lt.s32.totalorder %s24, 2
        %s286 = scalar_select %p285, %s24, 2
        %p287 = scmp.lt.s32.totalorder %s25, 1
        %s288 = scalar_select %p287, %s25, 1
        %p289 = scmp.lt.s32.totalorder %s26, 0
        %s290 = scalar_select %p289, %s26, 0
        %s291 = sadd.s32 %s290, %s288
        %s292 = smul.addr %s286, 2
        %s293 = sadd.s32 %s291, %s292
        %s294 = smul.addr %s293, 8
        %s295 = scalar_lea.vmem %s4, %s294
        %p296 = scmp.eq.s32.totalorder %s27, 0
        // Predicated region
        $region41: #{causal_self_attention.3} parent=35 // pred_check
          %p297 = pneg %p296
        $region42: #{causal_self_attention.3} parent=35 // pred_check_branch
          %299 = sbr.rel (%p297) target = $region44
        $region43: #{causal_self_attention.3} parent=35 // pred_region
          %vm300 = vcmask 261120
          %301 = vst.msk [vmem:[#allocation2] sm:$0xff] %vm300, 0.0
        $region44: #{causal_self_attention.3} parent=35 // pred_fallthru
          _
        %v302 = vld [vmem:[#allocation2] sm:$0xff]
        %v303 = vld [vmem:[%s283] sm:$0xff]
        %v304 = vld [vmem:[%s239] sm:$0xff]
        %v305 = vld [vmem:[%s239 + $0x8] sm:$0xff]
        %v306 = vld [vmem:[%s239 + $0x10] sm:$0xff]
        %v307 = vld [vmem:[%s239 + $0x18] sm:$0xff]
        %vm308 = vcmask 261120
        %v310 = vsel %vm308, %v303, 0
        %312 = vmatprep.subr.mxu0 0.0
        %313 = vmatpush1.msra.mxu0 %v304
        %314 = vmatprep.subr.mxu0 0.0
        %315 = vmatpush1.msra.mxu0 %v305
        %316 = vmatprep.subr.mxu0 0.0
        %317 = vmatpush1.msra.mxu0 %v306
        %318 = vmatprep.subr.mxu0 0.0
        %319 = vmatpush1.msra.mxu0 %v307
        %320 = vmatprep.subr.mxu0 0.0
        %321 = vmatpush1.msra.mxu0 0.0
        %322 = vmatprep.subr.mxu0 0.0
        %323 = vmatpush1.msra.mxu0 0.0
        %324 = vmatprep.subr.mxu0 0.0
        %325 = vmatpush1.msra.mxu0 0.0
        %326 = vmatprep.subr.mxu0 0.0
        %327 = vmatpush1.msra.mxu0 0.0
        %328 = vmatprep.subr.mxu0 0.0
        %329 = vmatpush1.msra.mxu0 0.0
        %330 = vmatprep.subr.mxu0 0.0
        %331 = vmatpush1.msra.mxu0 0.0
        %332 = vmatprep.subr.mxu0 0.0
        %333 = vmatpush1.msra.mxu0 0.0
        %334 = vmatprep.subr.mxu0 0.0
        %335 = vmatpush1.msra.mxu0 0.0
        %336 = vmatprep.subr.mxu0 0.0
        %337 = vmatpush1.msra.mxu0 0.0
        %338 = vmatprep.subr.mxu0 0.0
        %339 = vmatpush1.msra.mxu0 0.0
        %340 = vmatprep.subr.mxu0 0.0
        %341 = vmatpush1.msra.mxu0 0.0
        %342 = vmatprep.subr.mxu0 0.0
        %343 = vmatpush1.msra.mxu0 0.0
        %344 = vmatprep.subr.mxu0 0.0
        %345 = vmatpush1.msra.mxu0 0.0
        %346 = vmatprep.subr.mxu0 0.0
        %347 = vmatpush1.msra.mxu0 0.0
        %348 = vmatprep.subr.mxu0 0.0
        %349 = vmatpush1.msra.mxu0 0.0
        %350 = vmatprep.subr.mxu0 0.0
        %351 = vmatpush1.msra.mxu0 0.0
        %352 = vmatprep.subr.mxu0 0.0
        %353 = vmatpush1.msra.mxu0 0.0
        %354 = vmatprep.subr.mxu0 0.0
        %355 = vmatpush1.msra.mxu0 0.0
        %356 = vmatprep.subr.mxu0 0.0
        %357 = vmatpush1.msra.mxu0 0.0
        %358 = vmatprep.subr.mxu0 0.0
        %359 = vmatpush1.msra.mxu0 0.0
        %360 = vmatprep.subr.mxu0 0.0
        %361 = vmatpush1.msra.mxu0 0.0
        %362 = vmatprep.subr.mxu0 0.0
        %363 = vmatpush1.msra.mxu0 0.0
        %364 = vmatprep.subr.mxu0 0.0
        %365 = vmatpush1.msra.mxu0 0.0
        %366 = vmatprep.subr.mxu0 0.0
        %367 = vmatpush1.msra.mxu0 0.0
        %368 = vmatprep.subr.mxu0 0.0
        %369 = vmatpush1.msra.mxu0 0.0
        %370 = vmatprep.subr.mxu0 0.0
        %371 = vmatpush1.msra.mxu0 0.0
        %372 = vmatprep.subr.mxu0 0.0
        %373 = vmatpush1.msra.mxu0 0.0
        %374 = vmatprep.subr.mxu0 0.0
        %375 = vmatpush1.msra.mxu0 0.0
        %376 = vmatprep.mubr.f32.mxu0 0.0
        %377 = vmatmul.mubr.f32.gmra.mrb[0].mxu0 %v310
        %v378 = vpop.f32.mrb[0].mxu0
        %v379 = vadd.f32 0.0, %v378
        %v380 = vpop.f32.mrb[0].mxu0
        %381 = vdwg.mxu0
        %v382 = vadd.f32 %v302, %v379
        %383 = vst.msk [vmem:[#allocation2] sm:$0xff] %vm308, %v382
        %p384 = scmp.eq.s32.totalorder %s24, 2
        %p385 = pnand %p296, %p384
        %p386 = pneg %p385
        // Predicated region
        $region45: #{causal_self_attention.3} parent=35 // pred_check
          _
        $region46: #{causal_self_attention.3} parent=35 // pred_check_branch
          %388 = sbr.rel (%p385) target = $region48
        $region47: #{causal_self_attention.3} parent=35 // pred_region
          %v389 = vld [vmem:[#allocation2] sm:$0xff]
          %390 = vst.msk [vmem:[%s295] sm:$0xff] %vm308, %v389
        $region48: #{causal_self_attention.3} parent=35 // pred_fallthru
          _
        %p391 = scmp.lt.s32.totalorder %s24, 2
        %p392 = pnand %p296, %p391
        %p393 = pneg %p392
        // Predicated region
        $region49: #{causal_self_attention.3} parent=35 // pred_check
          _
        $region50: #{causal_self_attention.3} parent=35 // pred_check_branch
          %395 = sbr.rel (%p392) target = $region52
        $region51: #{causal_self_attention.3} parent=35 // pred_region
          %v396 = vld [vmem:[#allocation2] sm:$0xff]
          %v397 = vld [vmem:[%s2] sm:$0xff]
          %v398 = vld [vmem:[%s3] sm:$0xff]
          %p399 = scmp.eq.s32.totalorder %s24, 0
          %s400 = scalar_select %p399, 0.35355338, 1.0
          %v401 = vmul.f32 %v396, %v397
          %403 = vrot.lane.b32.xlu0 %v398, 4
          %v404 = vpop.permute.xlu0 %403
          %v406 = vmul.f32 %v396, %v404
          %408 = vrot.lane.b32.xlu0 %v406, 124
          %v409 = vpop.permute.xlu0 %408
          %v411 = vadd.f32 %v401, %v409
          %413 = vrot.lane.b32.xlu0 %v397, 4
          %v414 = vpop.permute.xlu0 %413
          %v416 = vmul.f32 %v396, %v414
          %v417 = vmul.f32 %v396, %v398
          %419 = vrot.lane.b32.xlu0 %v417, 4
          %v420 = vpop.permute.xlu0 %419
          %v422 = vsub.f32 %v416, %v420
          %vm423 = vcmask 31744
          %v424 = vsel %vm423, %v411, %v422
          %425 = vrot.lane.b32.xlu0 %v397, 8
          %v426 = vpop.permute.xlu0 %425
          %v428 = vmul.f32 %v396, %v426
          %429 = vrot.lane.b32.xlu0 %v398, 12
          %v430 = vpop.permute.xlu0 %429
          %v432 = vmul.f32 %v396, %v430
          %434 = vrot.lane.b32.xlu0 %v432, 124
          %v435 = vpop.permute.xlu0 %434
          %v437 = vadd.f32 %v428, %v435
          %438 = vrot.lane.b32.xlu0 %v397, 12
          %v439 = vpop.permute.xlu0 %438
          %v441 = vmul.f32 %v396, %v439
          %442 = vrot.lane.b32.xlu0 %v398, 8
          %v443 = vpop.permute.xlu0 %442
          %v445 = vmul.f32 %v396, %v443
          %447 = vrot.lane.b32.xlu0 %v445, 4
          %v448 = vpop.permute.xlu0 %447
          %v450 = vsub.f32 %v441, %v448
          %452 = vrot.lane.b32.xlu0 %v437, 120
          %v453 = vpop.permute.xlu0 %452
          %456 = vrot.lane.b32.xlu0 %v450, 120
          %v457 = vpop.permute.xlu0 %456
          %v459 = vsel %vm423, %v453, %v457
          %460 = vrot.lane.b32.xlu0 %v397, 16
          %v461 = vpop.permute.xlu0 %460
          %v463 = vmul.f32 %v396, %v461
          %464 = vrot.lane.b32.xlu0 %v398, 20
          %v465 = vpop.permute.xlu0 %464
          %v467 = vmul.f32 %v396, %v465
          %469 = vrot.lane.b32.xlu0 %v467, 124
          %v470 = vpop.permute.xlu0 %469
          %v472 = vadd.f32 %v463, %v470
          %473 = vrot.lane.b32.xlu0 %v397, 20
          %v474 = vpop.permute.xlu0 %473
          %v476 = vmul.f32 %v396, %v474
          %477 = vrot.lane.b32.xlu0 %v398, 16
          %v478 = vpop.permute.xlu0 %477
          %v480 = vmul.f32 %v396, %v478
          %482 = vrot.lane.b32.xlu0 %v480, 4
          %v483 = vpop.permute.xlu0 %482
          %v485 = vsub.f32 %v476, %v483
          %487 = vrot.lane.b32.xlu0 %v472, 112
          %v488 = vpop.permute.xlu0 %487
          %491 = vrot.lane.b32.xlu0 %v485, 112
          %v492 = vpop.permute.xlu0 %491
          %v494 = vsel %vm423, %v488, %v492
          %495 = vrot.lane.b32.xlu0 %v397, 24
          %v496 = vpop.permute.xlu0 %495
          %v498 = vmul.f32 %v396, %v496
          %499 = vrot.lane.b32.xlu0 %v398, 28
          %v500 = vpop.permute.xlu0 %499
          %v502 = vmul.f32 %v396, %v500
          %504 = vrot.lane.b32.xlu0 %v502, 124
          %v505 = vpop.permute.xlu0 %504
          %v507 = vadd.f32 %v498, %v505
          %508 = vrot.lane.b32.xlu0 %v397, 28
          %v509 = vpop.permute.xlu0 %508
          %v511 = vmul.f32 %v396, %v509
          %512 = vrot.lane.b32.xlu0 %v398, 24
          %v513 = vpop.permute.xlu0 %512
          %v515 = vmul.f32 %v396, %v513
          %517 = vrot.lane.b32.xlu0 %v515, 4
          %v518 = vpop.permute.xlu0 %517
          %v520 = vsub.f32 %v511, %v518
          %522 = vrot.lane.b32.xlu0 %v507, 104
          %v523 = vpop.permute.xlu0 %522
          %526 = vrot.lane.b32.xlu0 %v520, 104
          %v527 = vpop.permute.xlu0 %526
          %v529 = vsel %vm423, %v523, %v527
          %531 = vrot.lane.b32.xlu0 %v459, 8
          %v532 = vpop.permute.xlu0 %531
          %535 = vrot.lane.b32.xlu0 %v494, 16
          %v536 = vpop.permute.xlu0 %535
          %539 = vrot.lane.b32.xlu0 %v529, 24
          %v540 = vpop.permute.xlu0 %539
          %vm542 = vcmask 64512
          %v543 = vsel %vm542, %v424, %v532
          %vm544 = vcmask 130048
          %v545 = vsel %vm544, %v543, %v536
          %vm546 = vcmask 195584
          %v547 = vsel %vm546, %v545, %v540
          %v548 = vstv %s400
          %v549 = vmul.f32 %v547, %v548
          %550 = vst.msk [vmem:[%s295] sm:$0xff] %vm308, %v549
        $region52: #{causal_self_attention.3} parent=35 // pred_fallthru
          _
        %p551 = scmp.lt.s32.totalorder %s24, 2
        %s552 = scalar_select %p551, %s24, 2
        %p553 = scmp.lt.s32.totalorder %s25, 1
        %s554 = scalar_select %p553, %s25, 1
        %p555 = scmp.lt.s32.totalorder %s26, 0
        %s556 = scalar_select %p555, %s26, 0
        %s557 = sadd.s32 %s556, %s554
        %s558 = smul.addr %s552, 2
        %s559 = sadd.s32 %s557, %s558
        %s560 = smul.addr %s559, 8
        %s561 = scalar_lea.vmem %s4, %s560
        // Predicated region
        $region53: #{causal_self_attention.3} parent=35 // pred_check
          %p562 = pneg %p166
        $region54: #{causal_self_attention.3} parent=35 // pred_check_branch
          %564 = sbr.rel (%p562) target = $region56
        $region55: #{causal_self_attention.3} parent=35 // pred_region
          _
        $region56: #{causal_self_attention.3} parent=35 // pred_fallthru
          _
      $region36: #{causal_self_attention.3} parent=5 // pred_fallthru
        _
      %p565 = scmp.le.s32.totalorder 2, %s13
      // Predicated region
      $region57: #{causal_self_attention.3} parent=5 // pred_check
        %p566 = pneg %p565
      $region58: #{causal_self_attention.3} parent=5 // pred_check_branch
        %568 = sbr.rel (%p566) target = $region60
      $region59: #{causal_self_attention.3} parent=5 // pred_region
        %s569 = ssub.s32 %s13, 2
        // Predicated region
        $region61: #{causal_self_attention.3} parent=59 // pred_check
          %p570 = pneg %p172
        $region62: #{causal_self_attention.3} parent=59 // pred_check_branch
          %572 = sbr.rel (%p570) target = $region64
        $region63: #{causal_self_attention.3} parent=59 // pred_region
          %p573 = scmp.lt.s32.totalorder %s28, 2
          %s574 = scalar_select %p573, %s28, 2
          %p575 = scmp.lt.s32.totalorder %s29, 1
          %s576 = scalar_select %p575, %s29, 1
          %p577 = scmp.lt.s32.totalorder %s30, 0
          %s578 = scalar_select %p577, %s30, 0
          %s579 = sadd.s32 %s578, %s576
          %s580 = smul.addr %s574, 2
          %s581 = sadd.s32 %s579, %s580
          %s582 = smul.addr %s581, 8
          %s583 = scalar_lea.vmem %s4, %s582
        $region64: #{causal_self_attention.3} parent=59 // pred_fallthru
          _
      $region60: #{causal_self_attention.3} parent=5 // pred_fallthru
        _
    $region6: #{causal_self_attention.3} parent=1 // loop_footer
      %s17 = sadd.s32 1, %s13
    $region7: #{causal_self_attention.3} parent=1 // loop_footer_branch
      %12 = sbr.rel target = $region3
    $region8: #{causal_self_attention.3} parent=1 // loop_exit
      _
    %584 = vsyncpa [#allocation4], 1
    %s585 = scalar_lea.sflag [#allocation4], 1
    %586 = vsyncpa %s585, 1

// kernel: causal_self_attention.4
$region0: #{causal_self_attention.4}
  #allocation0 [shape = 'u32[]', space=smem, size = 0x4, offset = 0x4, fixed_abs, tag = 'smem constant byte address 0x4 - core index']
  #allocation1 [shape = 'u32[144,128]{1,0:T(1,128)}', space=vmem, size = 0x12000, scoped, tag = 'internal scratch']
  #allocation2 [shape = 'f32[4,8,8]{2,1,0:T(8,128)}', space=vmem, size = 0x4000, scoped, tag = 'scratch operand']
  #allocation3 [shape = 'f32[4,8,1]{2,1,0:T(8,128)}', space=vmem, size = 0x4000, scoped, tag = 'scratch operand']
  #allocation4 [shape = 'f32[4,8,1]{2,1,0:T(8,128)}', space=vmem, size = 0x4000, scoped, tag = 'scratch operand']
  #allocation5 [shape = 'f32[4,8,8]{2,1,0:T(8,128)}', space=vmem, size = 0x4000, scoped, tag = 'scratch operand']
  #allocation6 [shape = 's32[1]{0}', space=sflag, size = 0x4, scoped, tag = 'scoped memory for causal_self_attention.4']
  #allocation7 [shape = 's32[1]{0:T(128)S(6)}', space=smem, size = 0x200, scoped, tag = 'prefetched SMEM operand 0']
  #allocation8 [shape = 's32[1]{0:T(128)S(6)}', space=smem, size = 0x200, scoped, tag = 'prefetched SMEM operand 1']
  %s0 = inlined_call_operand.<no memory space> [shape: s32[1], index: 0, kind: input, shape index: {}, may-alias: {0,1}]
  %s1 = inlined_call_operand.<no memory space> [shape: s32[1], index: 1, kind: input, shape index: {}, may-alias: {0,1}]
  %s2 = inlined_call_operand.vmem [shape: f32[3,2,8,32], index: 2, kind: input, shape index: {}, may-alias: {2,3,4}]
  %s3 = inlined_call_operand.vmem [shape: f32[3,2,8,32], index: 3, kind: input, shape index: {}, may-alias: {2,3,4}]
  %s4 = inlined_call_operand.vmem [shape: f32[3,2,8,32], index: 4, kind: input, shape index: {}, may-alias: {2,3,4}]
  %s5 = inlined_call_operand.vmem [shape: f32[2,8,32], index: 5, kind: output, shape index: {}]
  %s6 = sld [smem:[#allocation0]]
  $region61: #{causal_self_attention.4} parent=0
    _
  %s8 = ssub.s32 1, %s6
  %s9 = scalar_select 0, %s8, %s6
  %10 = sst [smem:[#allocation7]] %s0
  %11 = sst [smem:[#allocation8]] %s1
  loop: start=0, step=1, limit=4
  $region2: #{causal_self_attention.4} parent=0 // loop_pre_header
    _
  $region3: #{causal_self_attention.4} parent=0 // loop_header
    %s13 = sphi 0, %s17
    %p14 = scmp.ge.s32.totalorder %s13, 4
    %s20 = sphi 0, %s32
    %s21 = sphi 0, %s28
    %s22 = sphi 0, %s20
    %s23 = sphi 0, %s21
    %s24 = sphi 0, %s22
    %s25 = sphi 0, %s23
    %s39 = sphi 0, %s41
    %s42 = sphi 0, %s39
    %s43 = sphi 0, %s42
    %s59 = sphi 0, %s43
    %s69 = sphi 0, %s71
    %s72 = sphi 0, %s69
    %s73 = sphi 0, %s72
    %s89 = sphi 0, %s73
    %s99 = sphi 0, %s101
    %s102 = sphi 0, %s99
    %s103 = sphi 0, %s102
    %s119 = sphi 0, %s103
    %s129 = sphi 0, %s131
    %s132 = sphi 0, %s129
    %s133 = sphi 0, %s132
    %s149 = sphi 0, %s133
  $region4: #{causal_self_attention.4} parent=0 // loop_header_branch
    %16 = sbr.rel (%p14) target = $region8
  $region5: #{causal_self_attention.4} parent=0 // loop_body
    %s18 = ssub.s32 %s13, 1
    %s19 = ssub.s32 %s13, 2
    %s26 = sadd.s32 1, %s21
    %p27 = scmp.ge.s32.totalorder %s26, 1
    %s28 = scalar_select %p27, 0, %s26
    %s29 = sadd.s32 1, %s20
    %s30 = scalar_select %p27, %s29, %s20
    %p31 = scmp.ge.s32.totalorder %s30, 2
    %s32 = scalar_select %p31, 0, %s30
    %s33 = sld [smem:[#allocation7 + %s21]]
    %s34 = sld [smem:[#allocation7 + %s28]]
    %s35 = ssub.s32 %s20, %s32
    %s36 = ssub.s32 %s33, %s34
    %s37 = sor.u32 %s35, %s36
    %p38 = scmp.eq.s32.totalorder %s37, 0
    %s40 = sadd.s32 %s39, 1
    %s41 = scalar_select %p38, %s39, %s40
    %p44 = pneg %p38
    %p45 = scmp.eq.s32.totalorder %s13, 1
    %p46 = por %p44, %p45
    %p47 = scmp.ne.s32.totalorder %s39, %s42
    %p48 = scmp.eq.s32.totalorder %s13, 0
    %p49 = por %p47, %p48
    %p50 = scmp.ne.s32.totalorder %s39, %s42
    %p51 = scmp.eq.s32.totalorder %s18, 1
    %p52 = por %p50, %p51
    %p53 = scmp.ne.s32.totalorder %s42, %s43
    %p54 = scmp.eq.s32.totalorder %s18, 0
    %p55 = por %p53, %p54
    %p56 = scmp.ne.s32.totalorder %s42, %s43
    %p57 = scmp.eq.s32.totalorder %s19, 1
    %p58 = por %p56, %p57
    %p60 = scmp.ne.s32.totalorder %s43, %s59
    %p61 = scmp.eq.s32.totalorder %s19, 0
    %p62 = por %p60, %p61
    %s63 = sld [smem:[#allocation8 + %s21]]
    %s64 = sld [smem:[#allocation8 + %s28]]
    %s65 = ssub.s32 %s20, %s32
    %s66 = ssub.s32 %s63, %s64
    %s67 = sor.u32 %s65, %s66
    %p68 = scmp.eq.s32.totalorder %s67, 0
    %s70 = sadd.s32 %s69, 1
    %s71 = scalar_select %p68, %s69, %s70
    %p74 = pneg %p68
    %p75 = scmp.eq.s32.totalorder %s13, 1
    %p76 = por %p74, %p75
    %p77 = scmp.ne.s32.totalorder %s69, %s72
    %p78 = scmp.eq.s32.totalorder %s13, 0
    %p79 = por %p77, %p78
    %p80 = scmp.ne.s32.totalorder %s69, %s72
    %p81 = scmp.eq.s32.totalorder %s18, 1
    %p82 = por %p80, %p81
    %p83 = scmp.ne.s32.totalorder %s72, %s73
    %p84 = scmp.eq.s32.totalorder %s18, 0
    %p85 = por %p83, %p84
    %p86 = scmp.ne.s32.totalorder %s72, %s73
    %p87 = scmp.eq.s32.totalorder %s19, 1
    %p88 = por %p86, %p87
    %p90 = scmp.ne.s32.totalorder %s73, %s89
    %p91 = scmp.eq.s32.totalorder %s19, 0
    %p92 = por %p90, %p91
    %s93 = sld [smem:[#allocation8 + %s21]]
    %s94 = sld [smem:[#allocation8 + %s28]]
    %s95 = ssub.s32 %s20, %s32
    %s96 = ssub.s32 %s93, %s94
    %s97 = sor.u32 %s95, %s96
    %p98 = scmp.eq.s32.totalorder %s97, 0
    %s100 = sadd.s32 %s99, 1
    %s101 = scalar_select %p98, %s99, %s100
    %p104 = pneg %p98
    %p105 = scmp.eq.s32.totalorder %s13, 1
    %p106 = por %p104, %p105
    %p107 = scmp.ne.s32.totalorder %s99, %s102
    %p108 = scmp.eq.s32.totalorder %s13, 0
    %p109 = por %p107, %p108
    %p110 = scmp.ne.s32.totalorder %s99, %s102
    %p111 = scmp.eq.s32.totalorder %s18, 1
    %p112 = por %p110, %p111
    %p113 = scmp.ne.s32.totalorder %s102, %s103
    %p114 = scmp.eq.s32.totalorder %s18, 0
    %p115 = por %p113, %p114
    %p116 = scmp.ne.s32.totalorder %s102, %s103
    %p117 = scmp.eq.s32.totalorder %s19, 1
    %p118 = por %p116, %p117
    %p120 = scmp.ne.s32.totalorder %s103, %s119
    %p121 = scmp.eq.s32.totalorder %s19, 0
    %p122 = por %p120, %p121
    %s123 = sld [smem:[#allocation7 + %s21]]
    %s124 = sld [smem:[#allocation7 + %s28]]
    %s125 = ssub.s32 %s20, %s32
    %s126 = ssub.s32 %s123, %s124
    %s127 = sor.u32 %s125, %s126
    %p128 = scmp.eq.s32.totalorder %s127, 0
    %s130 = sadd.s32 %s129, 1
    %s131 = scalar_select %p128, %s129, %s130
    %p134 = pneg %p128
    %p135 = scmp.eq.s32.totalorder %s13, 1
    %p136 = por %p134, %p135
    %p137 = scmp.ne.s32.totalorder %s129, %s132
    %p138 = scmp.eq.s32.totalorder %s13, 0
    %p139 = por %p137, %p138
    %p140 = scmp.ne.s32.totalorder %s129, %s132
    %p141 = scmp.eq.s32.totalorder %s18, 1
    %p142 = por %p140, %p141
    %p143 = scmp.ne.s32.totalorder %s132, %s133
    %p144 = scmp.eq.s32.totalorder %s18, 0
    %p145 = por %p143, %p144
    %p146 = scmp.ne.s32.totalorder %s132, %s133
    %p147 = scmp.eq.s32.totalorder %s19, 1
    %p148 = por %p146, %p147
    %p150 = scmp.ne.s32.totalorder %s133, %s149
    %p151 = scmp.eq.s32.totalorder %s19, 0
    %p152 = por %p150, %p151
    %p153 = scmp.le.s32.totalorder 1, %s13
    %p154 = scmp.lt.s32.totalorder %s13, 3
    %p155 = pnand %p153, %p154
    %p156 = pneg %p155
    // Predicated region
    $region9: #{causal_self_attention.4} parent=5 // pred_check
      _
    $region10: #{causal_self_attention.4} parent=5 // pred_check_branch
      %158 = sbr.rel (%p155) target = $region12
    $region11: #{causal_self_attention.4} parent=5 // pred_region
      %s159 = ssub.s32 %s13, 1
    $region12: #{causal_self_attention.4} parent=5 // pred_fallthru
      _
    %p160 = scmp.lt.s32.totalorder %s13, 2
    // Predicated region
    $region13: #{causal_self_attention.4} parent=5 // pred_check
      %p161 = pneg %p160
    $region14: #{causal_self_attention.4} parent=5 // pred_check_branch
      %163 = sbr.rel (%p161) target = $region16
    $region15: #{causal_self_attention.4} parent=5 // pred_region
      // Predicated region
      $region17: #{causal_self_attention.4} parent=15 // pred_check
        %p164 = pneg %p49
      $region18: #{causal_self_attention.4} parent=15 // pred_check_branch
        %166 = sbr.rel (%p164) target = $region20
      $region19: #{causal_self_attention.4} parent=15 // pred_region
        %s167 = sld [smem:[#allocation7 + %s21]]
        %p168 = scmp.lt.s32.totalorder %s20, 1
        %s169 = scalar_select %p168, %s20, 1
        %p170 = scmp.lt.s32.totalorder %s167, 0
        %s171 = scalar_select %p170, %s167, 0
        %s172 = sadd.s32 %s171, %s169
        %s173 = smul.addr %s172, 8
        %s174 = scalar_lea.vmem %s2, %s173
        %s175 = sld [smem:[#allocation7 + %s21]]
      $region20: #{causal_self_attention.4} parent=15 // pred_fallthru
        _
      // Predicated region
      $region21: #{causal_self_attention.4} parent=15 // pred_check
        %p176 = pneg %p79
      $region22: #{causal_self_attention.4} parent=15 // pred_check_branch
        %178 = sbr.rel (%p176) target = $region24
      $region23: #{causal_self_attention.4} parent=15 // pred_region
        %s179 = sld [smem:[#allocation8 + %s21]]
        %p180 = scmp.lt.s32.totalorder %s20, 1
        %s181 = scalar_select %p180, %s20, 1
        %p182 = scmp.lt.s32.totalorder %s179, 0
        %s183 = scalar_select %p182, %s179, 0
        %s184 = sadd.s32 %s183, %s181
        %s185 = sadd.s32 %s184, 2
        %s186 = smul.addr %s185, 8
        %s187 = scalar_lea.vmem %s3, %s186
        %s188 = sld [smem:[#allocation8 + %s21]]
      $region24: #{causal_self_attention.4} parent=15 // pred_fallthru
        _
      // Predicated region
      $region25: #{causal_self_attention.4} parent=15 // pred_check
        %p189 = pneg %p109
      $region26: #{causal_self_attention.4} parent=15 // pred_check_branch
        %191 = sbr.rel (%p189) target = $region28
      $region27: #{causal_self_attention.4} parent=15 // pred_region
        %s192 = sld [smem:[#allocation8 + %s21]]
        %p193 = scmp.lt.s32.totalorder %s20, 1
        %s194 = scalar_select %p193, %s20, 1
        %p195 = scmp.lt.s32.totalorder %s192, 0
        %s196 = scalar_select %p195, %s192, 0
        %s197 = sadd.s32 %s196, %s194
        %s198 = sadd.s32 %s197, 4
        %s199 = smul.addr %s198, 8
        %s200 = scalar_lea.vmem %s4, %s199
        %s201 = sld [smem:[#allocation8 + %s21]]
      $region28: #{causal_self_attention.4} parent=15 // pred_fallthru
        _
    $region16: #{causal_self_attention.4} parent=5 // pred_fallthru
      _
    %p202 = scmp.le.s32.totalorder 1, %s13
    %p203 = scmp.lt.s32.totalorder %s13, 3
    %p204 = pnand %p202, %p203
    %p205 = pneg %p204
    // Predicated region
    $region29: #{causal_self_attention.4} parent=5 // pred_check
      _
    $region30: #{causal_self_attention.4} parent=5 // pred_check_branch
      %207 = sbr.rel (%p204) target = $region32
    $region31: #{causal_self_attention.4} parent=5 // pred_region
      %s208 = ssub.s32 %s13, 1
      %s209 = sld [smem:[#allocation7 + %s23]]
      %p210 = scmp.lt.s32.totalorder %s22, 1
      %s211 = scalar_select %p210, %s22, 1
      %p212 = scmp.lt.s32.totalorder %s209, 0
      %s213 = scalar_select %p212, %s209, 0
      %s214 = sadd.s32 %s213, %s211
      %s215 = smul.addr %s214, 8
      %s216 = scalar_lea.vmem %s2, %s215
      %p217 = pneg %p55
      %p218 = pneg %p52
      %s219 = sld [smem:[#allocation8 + %s23]]
      %p220 = scmp.lt.s32.totalorder %s22, 1
      %s221 = scalar_select %p220, %s22, 1
      %p222 = scmp.lt.s32.totalorder %s219, 0
      %s223 = scalar_select %p222, %s219, 0
      %s224 = sadd.s32 %s223, %s221
      %s225 = sadd.s32 %s224, 2
      %s226 = smul.addr %s225, 8
      %s227 = scalar_lea.vmem %s3, %s226
      %p228 = pneg %p85
      %p229 = pneg %p82
      %s230 = sld [smem:[#allocation8 + %s23]]
      %p231 = scmp.lt.s32.totalorder %s22, 1
      %s232 = scalar_select %p231, %s22, 1
      %p233 = scmp.lt.s32.totalorder %s230, 0
      %s234 = scalar_select %p233, %s230, 0
      %s235 = sadd.s32 %s234, %s232
      %s236 = sadd.s32 %s235, 4
      %s237 = smul.addr %s236, 8
      %s238 = scalar_lea.vmem %s4, %s237
      %p239 = pneg %p115
      %p240 = pneg %p112
      %p241 = pneg %p145
      %p242 = pneg %p142
      %s243 = sld [smem:[#allocation7 + %s23]]
      %p244 = scmp.lt.s32.totalorder %s22, 1
      %s245 = scalar_select %p244, %s22, 1
      %p246 = scmp.lt.s32.totalorder %s243, 0
      %s247 = scalar_select %p246, %s243, 0
      %s248 = sadd.s32 %s247, %s245
      %s249 = smul.addr %s248, 8
      %s250 = scalar_lea.vmem %s5, %s249
      %s251 = sld [smem:[#allocation7 + %s23]]
      %p252 = scmp.lt.s32.totalorder %s22, 1
      %s253 = scalar_select %p252, %s22, 1
      %p254 = scmp.lt.s32.totalorder %s251, 0
      %s255 = scalar_select %p254, %s251, 0
      %s256 = sadd.s32 %s255, %s253
      %s257 = smul.addr %s256, 8
      %s258 = scalar_lea.vmem %s2, %s257
      %s259 = sld [smem:[#allocation7 + %s23]]
      %s260 = sld [smem:[#allocation8 + %s23]]
      %p261 = scmp.lt.s32.totalorder %s22, 1
      %s262 = scalar_select %p261, %s22, 1
      %p263 = scmp.lt.s32.totalorder %s260, 0
      %s264 = scalar_select %p263, %s260, 0
      %s265 = sadd.s32 %s264, %s262
      %s266 = sadd.s32 %s265, 2
      %s267 = smul.addr %s266, 8
      %s268 = scalar_lea.vmem %s3, %s267
      %s269 = sld [smem:[#allocation8 + %s23]]
      %s270 = sld [smem:[#allocation8 + %s23]]
      %p271 = scmp.lt.s32.totalorder %s22, 1
      %s272 = scalar_select %p271, %s22, 1
      %p273 = scmp.lt.s32.totalorder %s270, 0
      %s274 = scalar_select %p273, %s270, 0
      %s275 = sadd.s32 %s274, %s272
      %s276 = sadd.s32 %s275, 4
      %s277 = smul.addr %s276, 8
      %s278 = scalar_lea.vmem %s4, %s277
      %s279 = sld [smem:[#allocation8 + %s23]]
      %s280 = sld [smem:[#allocation7 + %s23]]
      %p281 = scmp.lt.s32.totalorder %s22, 1
      %s282 = scalar_select %p281, %s22, 1
      %p283 = scmp.lt.s32.totalorder %s280, 0
      %s284 = scalar_select %p283, %s280, 0
      %s285 = sadd.s32 %s284, %s282
      %s286 = smul.addr %s285, 8
      %s287 = scalar_lea.vmem %s5, %s286
      %s288 = sld [smem:[#allocation7 + %s23]]
      %s289 = sld [smem:[#allocation7 + %s23]]
      %s290 = sld [smem:[#allocation8 + %s23]]
      %p291 = scmp.eq.s32.totalorder %s290, 0
      // Predicated region
      $region33: #{causal_self_attention.4} parent=31 // pred_check
        %p292 = pneg %p291
      $region34: #{causal_self_attention.4} parent=31 // pred_check_branch
        %294 = sbr.rel (%p292) target = $region36
      $region35: #{causal_self_attention.4} parent=31 // pred_region
        %vm295 = vcmask 7168
        %296 = vst.msk [vmem:[#allocation3] sm:$0xff] %vm295, -inf
        %297 = vst.msk [vmem:[#allocation3 + $0x8] sm:$0xff] %vm295, -inf
        %298 = vst.msk [vmem:[#allocation3 + $0x10] sm:$0xff] %vm295, -inf
        %299 = vst.msk [vmem:[#allocation3 + $0x18] sm:$0xff] %vm295, -inf
        %300 = vst.msk [vmem:[#allocation4] sm:$0xff] %vm295, 0.0
        %301 = vst.msk [vmem:[#allocation4 + $0x8] sm:$0xff] %vm295, 0.0
        %302 = vst.msk [vmem:[#allocation4 + $0x10] sm:$0xff] %vm295, 0.0
        %303 = vst.msk [vmem:[#allocation4 + $0x18] sm:$0xff] %vm295, 0.0
        %vm304 = vcmask 64512
        %305 = vst.msk [vmem:[#allocation5] sm:$0xff] %vm304, 0.0
        %306 = vst.msk [vmem:[#allocation5 + $0x8] sm:$0xff] %vm304, 0.0
        %307 = vst.msk [vmem:[#allocation5 + $0x10] sm:$0xff] %vm304, 0.0
        %308 = vst.msk [vmem:[#allocation5 + $0x18] sm:$0xff] %vm304, 0.0
        %v309 = vld [vmem:[%s258] sm:$0xff]
        %310 = vst.msk [vmem:[#allocation2] sm:$0xff] %vm304, %v309
        %v311 = vld [vmem:[%s258] sm:$0xff]
        %313 = vrot.lane.b32.xlu0 %v311, 120
        %v314 = vpop.permute.xlu0 %313
        %s316 = scalar_lea.vmem [#allocation2], 8
        %317 = vst.msk [vmem:[%s316] sm:$0xff] %vm304, %v314
        %v318 = vld [vmem:[%s258] sm:$0xff]
        %320 = vrot.lane.b32.xlu0 %v318, 112
        %v321 = vpop.permute.xlu0 %320
        %s323 = scalar_lea.vmem [#allocation2], 16
        %324 = vst.msk [vmem:[%s323] sm:$0xff] %vm304, %v321
        %v325 = vld [vmem:[%s258] sm:$0xff]
        %327 = vrot.lane.b32.xlu0 %v325, 104
        %v328 = vpop.permute.xlu0 %327
        %s330 = scalar_lea.vmem [#allocation2], 24
        %331 = vst.msk [vmem:[%s330] sm:$0xff] %vm304, %v328
      $region36: #{causal_self_attention.4} parent=31 // pred_fallthru
        _
      %s332 = smul.u32 %s290, 8
      %s333 = sadd.s32 %s332, 7
      %s334 = smul.u32 %s289, 8
      %p335 = scmp.gt.s32.totalorder %s333, %s334
      // Predicated region
      $region37: #{causal_self_attention.4} parent=31 // pred_check
        %p336 = pneg %p335
      $region38: #{causal_self_attention.4} parent=31 // pred_check_branch
        %338 = sbr.rel (%p336) target = $region40
      $region39: #{causal_self_attention.4} parent=31 // pred_region
        %v339 = vlaneseq
        %v340 = vshrl.u32 %v339, 7
        %v341 = vstv %s334
        %v342 = vadd.s32 %v341, %v340
        %v343 = vlaneseq
        %v344 = vand.u32 %v343, 127
        %v345 = vstv %s332
        %v346 = vadd.s32 %v345, %v344
        %vm347 = vcmp.le.s32.totalorder %v346, %v342
        %v348 = vld [vmem:[%s268] sm:$0xff]
        %v349 = vld [vmem:[%s278] sm:$0xff]
        %v350 = vld [vmem:[#allocation2] sm:$0xff]
        %vm351 = vcmask 64512
        %v353 = vsel %vm351, %v350, 0
        %v356 = vsel %vm351, %v348, 0
        %358 = vmatprep.subr.mxu0 0.0
        %359 = vmatpush1.xpose.msra.mxu0 %v356
        %360 = vmatprep.subr.mxu0 0.0
        %361 = vmatpush1.xpose.msra.mxu0 0.0
        %362 = vmatprep.subr.mxu0 0.0
        %363 = vmatpush1.xpose.msra.mxu0 0.0
        %364 = vmatprep.subr.mxu0 0.0
        %365 = vmatpush1.xpose.msra.mxu0 0.0
        %366 = vmatprep.subr.mxu0 0.0
        %367 = vmatpush1.xpose.msra.mxu0 0.0
        %368 = vmatprep.subr.mxu0 0.0
        %369 = vmatpush1.xpose.msra.mxu0 0.0
        %370 = vmatprep.subr.mxu0 0.0
        %371 = vmatpush1.xpose.msra.mxu0 0.0
        %372 = vmatprep.subr.mxu0 0.0
        %373 = vmatpush1.xpose.msra.mxu0 0.0
        %374 = vmatprep.subr.mxu0 0.0
        %375 = vmatpush1.xpose.msra.mxu0 0.0
        %376 = vmatprep.subr.mxu0 0.0
        %377 = vmatpush1.xpose.msra.mxu0 0.0
        %378 = vmatprep.subr.mxu0 0.0
        %379 = vmatpush1.xpose.msra.mxu0 0.0
        %380 = vmatprep.subr.mxu0 0.0
        %381 = vmatpush1.xpose.msra.mxu0 0.0
        %382 = vmatprep.subr.mxu0 0.0
        %383 = vmatpush1.xpose.msra.mxu0 0.0
        %384 = vmatprep.subr.mxu0 0.0
        %385 = vmatpush1.xpose.msra.mxu0 0.0
        %386 = vmatprep.subr.mxu0 0.0
        %387 = vmatpush1.xpose.msra.mxu0 0.0
        %388 = vmatprep.subr.mxu0 0.0
        %389 = vmatpush1.xpose.msra.mxu0 0.0
        %390 = vmatprep.subr.mxu0 0.0
        %391 = vmatpush1.xpose.msra.mxu0 0.0
        %392 = vmatprep.subr.mxu0 0.0
        %393 = vmatpush1.xpose.msra.mxu0 0.0
        %394 = vmatprep.subr.mxu0 0.0
        %395 = vmatpush1.xpose.msra.mxu0 0.0
        %396 = vmatprep.subr.mxu0 0.0
        %397 = vmatpush1.xpose.msra.mxu0 0.0
        %398 = vmatprep.subr.mxu0 0.0
        %399 = vmatpush1.xpose.msra.mxu0 0.0
        %400 = vmatprep.subr.mxu0 0.0
        %401 = vmatpush1.xpose.msra.mxu0 0.0
        %402 = vmatprep.subr.mxu0 0.0
        %403 = vmatpush1.xpose.msra.mxu0 0.0
        %404 = vmatprep.subr.mxu0 0.0
        %405 = vmatpush1.xpose.msra.mxu0 0.0
        %406 = vmatprep.subr.mxu0 0.0
        %407 = vmatpush1.xpose.msra.mxu0 0.0
        %408 = vmatprep.subr.mxu0 0.0
        %409 = vmatpush1.xpose.msra.mxu0 0.0
        %410 = vmatprep.subr.mxu0 0.0
        %411 = vmatpush1.xpose.msra.mxu0 0.0
        %412 = vmatprep.subr.mxu0 0.0
        %413 = vmatpush1.xpose.msra.mxu0 0.0
        %414 = vmatprep.subr.mxu0 0.0
        %415 = vmatpush1.xpose.msra.mxu0 0.0
        %416 = vmatprep.subr.mxu0 0.0
        %417 = vmatpush1.xpose.msra.mxu0 0.0
        %418 = vmatprep.subr.mxu0 0.0
        %419 = vmatpush1.xpose.msra.mxu0 0.0
        %420 = vmatprep.subr.mxu0 0.0
        %421 = vmatpush1.xpose.msra.mxu0 0.0
        %422 = vmatprep.mubr.f32.mxu0 0.0
        %423 = vmatmul.mubr.f32.gmra.mrb[0].mxu0 %v353
        %v424 = vpop.f32.mrb[0].mxu0
        %v425 = vadd.f32 0.0, %v424
        %v426 = vpop.f32.mrb[0].mxu0
        %427 = vdwg.mxu0
        %v428 = vsel %vm347, %v425, -inf
        %v429 = vld [vmem:[#allocation3] sm:$0xff]
        %v430 = vsel %vm351, %v428, -inf
        %431 = vmax.xlane.f32.xlu0 %v430
        %v432 = vpop.xlane.xlu0 %431
        %v433 = vmax.f32 %v429, %v432
        %v434 = vsub.f32 %v429, %v433
        %v435 = vmul.f32 %v434, 1.442695
        %v436 = vpow.pop %v435
        %438 = vset.pattern.permute.xlu0 0
        %439 = vperm.xlu0 %438, %v433
        %v440 = vpop.permute.xlu0 %439
        %v442 = vsub.f32 %v428, %v440
        %v443 = vmul.f32 %v442, 1.442695
        %v444 = vpow.pop %v443
        %v445 = vld [vmem:[#allocation4] sm:$0xff]
        %v446 = vmul.f32 %v436, %v445
        %v447 = vsel %vm351, %v444, 0.0
        %448 = vadd.xlane.f32.xlu0 %v447
        %v449 = vpop.xlane.xlu0 %448
        %v450 = vadd.f32 %v446, %v449
        %vm451 = vcmask 7168
        %452 = vst.msk [vmem:[#allocation4] sm:$0xff] %vm451, %v450
        %v453 = vld [vmem:[#allocation5] sm:$0xff]
        %455 = vset.pattern.permute.xlu0 0
        %456 = vperm.xlu0 %455, %v436
        %v457 = vpop.permute.xlu0 %456
        %v459 = vmul.f32 %v457, %v453
        %v461 = vsel %vm351, %v444, 0
        %463 = vmatprep.subr.mxu0 0.0
        %464 = vmatpush1.msra.mxu0 %v349
        %465 = vmatprep.subr.mxu0 0.0
        %466 = vmatpush1.msra.mxu0 0.0
        %467 = vmatprep.subr.mxu0 0.0
        %468 = vmatpush1.msra.mxu0 0.0
        %469 = vmatprep.subr.mxu0 0.0
        %470 = vmatpush1.msra.mxu0 0.0
        %471 = vmatprep.subr.mxu0 0.0
        %472 = vmatpush1.msra.mxu0 0.0
        %473 = vmatprep.subr.mxu0 0.0
        %474 = vmatpush1.msra.mxu0 0.0
        %475 = vmatprep.subr.mxu0 0.0
        %476 = vmatpush1.msra.mxu0 0.0
        %477 = vmatprep.subr.mxu0 0.0
        %478 = vmatpush1.msra.mxu0 0.0
        %479 = vmatprep.subr.mxu0 0.0
        %480 = vmatpush1.msra.mxu0 0.0
        %481 = vmatprep.subr.mxu0 0.0
        %482 = vmatpush1.msra.mxu0 0.0
        %483 = vmatprep.subr.mxu0 0.0
        %484 = vmatpush1.msra.mxu0 0.0
        %485 = vmatprep.subr.mxu0 0.0
        %486 = vmatpush1.msra.mxu0 0.0
        %487 = vmatprep.subr.mxu0 0.0
        %488 = vmatpush1.msra.mxu0 0.0
        %489 = vmatprep.subr.mxu0 0.0
        %490 = vmatpush1.msra.mxu0 0.0
        %491 = vmatprep.subr.mxu0 0.0
        %492 = vmatpush1.msra.mxu0 0.0
        %493 = vmatprep.subr.mxu0 0.0
        %494 = vmatpush1.msra.mxu0 0.0
        %495 = vmatprep.subr.mxu0 0.0
        %496 = vmatpush1.msra.mxu0 0.0
        %497 = vmatprep.subr.mxu0 0.0
        %498 = vmatpush1.msra.mxu0 0.0
        %499 = vmatprep.subr.mxu0 0.0
        %500 = vmatpush1.msra.mxu0 0.0
        %501 = vmatprep.subr.mxu0 0.0
        %502 = vmatpush1.msra.mxu0 0.0
        %503 = vmatprep.subr.mxu0 0.0
        %504 = vmatpush1.msra.mxu0 0.0
        %505 = vmatprep.subr.mxu0 0.0
        %506 = vmatpush1.msra.mxu0 0.0
        %507 = vmatprep.subr.mxu0 0.0
        %508 = vmatpush1.msra.mxu0 0.0
        %509 = vmatprep.subr.mxu0 0.0
        %510 = vmatpush1.msra.mxu0 0.0
        %511 = vmatprep.subr.mxu0 0.0
        %512 = vmatpush1.msra.mxu0 0.0
        %513 = vmatprep.subr.mxu0 0.0
        %514 = vmatpush1.msra.mxu0 0.0
        %515 = vmatprep.subr.mxu0 0.0
        %516 = vmatpush1.msra.mxu0 0.0
        %517 = vmatprep.subr.mxu0 0.0
        %518 = vmatpush1.msra.mxu0 0.0
        %519 = vmatprep.subr.mxu0 0.0
        %520 = vmatpush1.msra.mxu0 0.0
        %521 = vmatprep.subr.mxu0 0.0
        %522 = vmatpush1.msra.mxu0 0.0
        %523 = vmatprep.subr.mxu0 0.0
        %524 = vmatpush1.msra.mxu0 0.0
        %525 = vmatprep.subr.mxu0 0.0
        %526 = vmatpush1.msra.mxu0 0.0
        %527 = vmatprep.mubr.f32.mxu0 0.0
        %528 = vmatmul.mubr.f32.gmra.mrb[0].mxu0 %v461
        %v529 = vpop.f32.mrb[0].mxu0
        %v530 = vadd.f32 0.0, %v529
        %v531 = vpop.f32.mrb[0].mxu0
        %532 = vdwg.mxu0
        %v533 = vadd.f32 %v459, %v530
        %534 = vst.msk [vmem:[#allocation5] sm:$0xff] %vm351, %v533
        %535 = vst.msk [vmem:[#allocation3] sm:$0xff] %vm451, %v433
        %v536 = vld [vmem:[%s268] sm:$0xff]
        %v537 = vld [vmem:[%s278] sm:$0xff]
        %s538 = scalar_lea.vmem [#allocation2], 8
        %v539 = vld [vmem:[%s538] sm:$0xff]
        %541 = vrot.lane.b32.xlu0 %v536, 120
        %v542 = vpop.permute.xlu0 %541
        %v544 = vsel %vm351, %v539, 0
        %v546 = vsel %vm351, %v542, 0
        %548 = vmatprep.subr.mxu0 0.0
        %549 = vmatpush1.xpose.msra.mxu0 %v546
        %550 = vmatprep.subr.mxu0 0.0
        %551 = vmatpush1.xpose.msra.mxu0 0.0
        %552 = vmatprep.subr.mxu0 0.0
        %553 = vmatpush1.xpose.msra.mxu0 0.0
        %554 = vmatprep.subr.mxu0 0.0
        %555 = vmatpush1.xpose.msra.mxu0 0.0
        %556 = vmatprep.subr.mxu0 0.0
        %557 = vmatpush1.xpose.msra.mxu0 0.0
        %558 = vmatprep.subr.mxu0 0.0
        %559 = vmatpush1.xpose.msra.mxu0 0.0
        %560 = vmatprep.subr.mxu0 0.0
        %561 = vmatpush1.xpose.msra.mxu0 0.0
        %562 = vmatprep.subr.mxu0 0.0
        %563 = vmatpush1.xpose.msra.mxu0 0.0
        %564 = vmatprep.subr.mxu0 0.0
        %565 = vmatpush1.xpose.msra.mxu0 0.0
        %566 = vmatprep.subr.mxu0 0.0
        %567 = vmatpush1.xpose.msra.mxu0 0.0
        %568 = vmatprep.subr.mxu0 0.0
        %569 = vmatpush1.xpose.msra.mxu0 0.0
        %570 = vmatprep.subr.mxu0 0.0
        %571 = vmatpush1.xpose.msra.mxu0 0.0
        %572 = vmatprep.subr.mxu0 0.0
        %573 = vmatpush1.xpose.msra.mxu0 0.0
        %574 = vmatprep.subr.mxu0 0.0
        %575 = vmatpush1.xpose.msra.mxu0 0.0
        %576 = vmatprep.subr.mxu0 0.0
        %577 = vmatpush1.xpose.msra.mxu0 0.0
        %578 = vmatprep.subr.mxu0 0.0
        %579 = vmatpush1.xpose.msra.mxu0 0.0
        %580 = vmatprep.subr.mxu0 0.0
        %581 = vmatpush1.xpose.msra.mxu0 0.0
        %582 = vmatprep.subr.mxu0 0.0
        %583 = vmatpush1.xpose.msra.mxu0 0.0
        %584 = vmatprep.subr.mxu0 0.0
        %585 = vmatpush1.xpose.msra.mxu0 0.0
        %586 = vmatprep.subr.mxu0 0.0
        %587 = vmatpush1.xpose.msra.mxu0 0.0
        %588 = vmatprep.subr.mxu0 0.0
        %589 = vmatpush1.xpose.msra.mxu0 0.0
        %590 = vmatprep.subr.mxu0 0.0
        %591 = vmatpush1.xpose.msra.mxu0 0.0
        %592 = vmatprep.subr.mxu0 0.0
        %593 = vmatpush1.xpose.msra.mxu0 0.0
        %594 = vmatprep.subr.mxu0 0.0
        %595 = vmatpush1.xpose.msra.mxu0 0.0
        %596 = vmatprep.subr.mxu0 0.0
        %597 = vmatpush1.xpose.msra.mxu0 0.0
        %598 = vmatprep.subr.mxu0 0.0
        %599 = vmatpush1.xpose.msra.mxu0 0.0
        %600 = vmatprep.subr.mxu0 0.0
        %601 = vmatpush1.xpose.msra.mxu0 0.0
        %602 = vmatprep.subr.mxu0 0.0
        %603 = vmatpush1.xpose.msra.mxu0 0.0
        %604 = vmatprep.subr.mxu0 0.0
        %605 = vmatpush1.xpose.msra.mxu0 0.0
        %606 = vmatprep.subr.mxu0 0.0
        %607 = vmatpush1.xpose.msra.mxu0 0.0
        %608 = vmatprep.subr.mxu0 0.0
        %609 = vmatpush1.xpose.msra.mxu0 0.0
        %610 = vmatprep.subr.mxu0 0.0
        %611 = vmatpush1.xpose.msra.mxu0 0.0
        %612 = vmatprep.mubr.f32.mxu0 0.0
        %613 = vmatmul.mubr.f32.gmra.mrb[0].mxu0 %v544
        %v614 = vpop.f32.mrb[0].mxu0
        %v615 = vadd.f32 0.0, %v614
        %v616 = vpop.f32.mrb[0].mxu0
        %617 = vdwg.mxu0
        %v618 = vsel %vm347, %v615, -inf
        %s619 = scalar_lea.vmem [#allocation3], 8
        %v620 = vld [vmem:[%s619] sm:$0xff]
        %v621 = vsel %vm351, %v618, -inf
        %622 = vmax.xlane.f32.xlu0 %v621
        %v623 = vpop.xlane.xlu0 %622
        %v624 = vmax.f32 %v620, %v623
        %v625 = vsub.f32 %v620, %v624
        %v626 = vmul.f32 %v625, 1.442695
        %v627 = vpow.pop %v626
        %629 = vset.pattern.permute.xlu0 0
        %630 = vperm.xlu0 %629, %v624
        %v631 = vpop.permute.xlu0 %630
        %v633 = vsub.f32 %v618, %v631
        %v634 = vmul.f32 %v633, 1.442695
        %v635 = vpow.pop %v634
        %s636 = scalar_lea.vmem [#allocation4], 8
        %v637 = vld [vmem:[%s636] sm:$0xff]
        %v638 = vmul.f32 %v627, %v637
        %v639 = vsel %vm351, %v635, 0.0
        %640 = vadd.xlane.f32.xlu0 %v639
        %v641 = vpop.xlane.xlu0 %640
        %v642 = vadd.f32 %v638, %v641
        %643 = vst.msk [vmem:[%s636] sm:$0xff] %vm451, %v642
        %s644 = scalar_lea.vmem [#allocation5], 8
        %v645 = vld [vmem:[%s644] sm:$0xff]
        %647 = vset.pattern.permute.xlu0 0
        %648 = vperm.xlu0 %647, %v627
        %v649 = vpop.permute.xlu0 %648
        %v651 = vmul.f32 %v649, %v645
        %653 = vrot.lane.b32.xlu0 %v537, 120
        %v654 = vpop.permute.xlu0 %653
        %v657 = vsel %vm351, %v635, 0
        %659 = vmatprep.subr.mxu0 0.0
        %660 = vmatpush1.msra.mxu0 %v654
        %661 = vmatprep.subr.mxu0 0.0
        %662 = vmatpush1.msra.mxu0 0.0
        %663 = vmatprep.subr.mxu0 0.0
        %664 = vmatpush1.msra.mxu0 0.0
        %665 = vmatprep.subr.mxu0 0.0
        %666 = vmatpush1.msra.mxu0 0.0
        %667 = vmatprep.subr.mxu0 0.0
        %668 = vmatpush1.msra.mxu0 0.0
        %669 = vmatprep.subr.mxu0 0.0
        %670 = vmatpush1.msra.mxu0 0.0
        %671 = vmatprep.subr.mxu0 0.0
        %672 = vmatpush1.msra.mxu0 0.0
        %673 = vmatprep.subr.mxu0 0.0
        %674 = vmatpush1.msra.mxu0 0.0
        %675 = vmatprep.subr.mxu0 0.0
        %676 = vmatpush1.msra.mxu0 0.0
        %677 = vmatprep.subr.mxu0 0.0
        %678 = vmatpush1.msra.mxu0 0.0
        %679 = vmatprep.subr.mxu0 0.0
        %680 = vmatpush1.msra.mxu0 0.0
        %681 = vmatprep.subr.mxu0 0.0
        %682 = vmatpush1.msra.mxu0 0.0
        %683 = vmatprep.subr.mxu0 0.0
        %684 = vmatpush1.msra.mxu0 0.0
        %685 = vmatprep.subr.mxu0 0.0
        %686 = vmatpush1.msra.mxu0 0.0
        %687 = vmatprep.subr.mxu0 0.0
        %688 = vmatpush1.msra.mxu0 0.0
        %689 = vmatprep.subr.mxu0 0.0
        %690 = vmatpush1.msra.mxu0 0.0
        %691 = vmatprep.subr.mxu0 0.0
        %692 = vmatpush1.msra.mxu0 0.0
        %693 = vmatprep.subr.mxu0 0.0
        %694 = vmatpush1.msra.mxu0 0.0
        %695 = vmatprep.subr.mxu0 0.0
        %696 = vmatpush1.msra.mxu0 0.0
        %697 = vmatprep.subr.mxu0 0.0
        %698 = vmatpush1.msra.mxu0 0.0
        %699 = vmatprep.subr.mxu0 0.0
        %700 = vmatpush1.msra.mxu0 0.0
        %701 = vmatprep.subr.mxu0 0.0
        %702 = vmatpush1.msra.mxu0 0.0
        %703 = vmatprep.subr.mxu0 0.0
        %704 = vmatpush1.msra.mxu0 0.0
        %705 = vmatprep.subr.mxu0 0.0
        %706 = vmatpush1.msra.mxu0 0.0
        %707 = vmatprep.subr.mxu0 0.0
        %708 = vmatpush1.msra.mxu0 0.0
        %709 = vmatprep.subr.mxu0 0.0
        %710 = vmatpush1.msra.mxu0 0.0
        %711 = vmatprep.subr.mxu0 0.0
        %712 = vmatpush1.msra.mxu0 0.0
        %713 = vmatprep.subr.mxu0 0.0
        %714 = vmatpush1.msra.mxu0 0.0
        %715 = vmatprep.subr.mxu0 0.0
        %716 = vmatpush1.msra.mxu0 0.0
        %717 = vmatprep.subr.mxu0 0.0
        %718 = vmatpush1.msra.mxu0 0.0
        %719 = vmatprep.subr.mxu0 0.0
        %720 = vmatpush1.msra.mxu0 0.0
        %721 = vmatprep.subr.mxu0 0.0
        %722 = vmatpush1.msra.mxu0 0.0
        %723 = vmatprep.mubr.f32.mxu0 0.0
        %724 = vmatmul.mubr.f32.gmra.mrb[0].mxu0 %v657
        %v725 = vpop.f32.mrb[0].mxu0
        %v726 = vadd.f32 0.0, %v725
        %v727 = vpop.f32.mrb[0].mxu0
        %728 = vdwg.mxu0
        %v729 = vadd.f32 %v651, %v726
        %730 = vst.msk [vmem:[%s644] sm:$0xff] %vm351, %v729
        %731 = vst.msk [vmem:[%s619] sm:$0xff] %vm451, %v624
        %v732 = vld [vmem:[%s268] sm:$0xff]
        %v733 = vld [vmem:[%s278] sm:$0xff]
        %s734 = scalar_lea.vmem [#allocation2], 16
        %v735 = vld [vmem:[%s734] sm:$0xff]
        %737 = vrot.lane.b32.xlu0 %v732, 112
        %v738 = vpop.permute.xlu0 %737
        %v740 = vsel %vm351, %v735, 0
        %v742 = vsel %vm351, %v738, 0
        %744 = vmatprep.subr.mxu0 0.0
        %745 = vmatpush1.xpose.msra.mxu0 %v742
        %746 = vmatprep.subr.mxu0 0.0
        %747 = vmatpush1.xpose.msra.mxu0 0.0
        %748 = vmatprep.subr.mxu0 0.0
        %749 = vmatpush1.xpose.msra.mxu0 0.0
        %750 = vmatprep.subr.mxu0 0.0
        %751 = vmatpush1.xpose.msra.mxu0 0.0
        %752 = vmatprep.subr.mxu0 0.0
        %753 = vmatpush1.xpose.msra.mxu0 0.0
        %754 = vmatprep.subr.mxu0 0.0
        %755 = vmatpush1.xpose.msra.mxu0 0.0
        %756 = vmatprep.subr.mxu0 0.0
        %757 = vmatpush1.xpose.msra.mxu0 0.0
        %758 = vmatprep.subr.mxu0 0.0
        %759 = vmatpush1.xpose.msra.mxu0 0.0
        %760 = vmatprep.subr.mxu0 0.0
        %761 = vmatpush1.xpose.msra.mxu0 0.0
        %762 = vmatprep.subr.mxu0 0.0
        %763 = vmatpush1.xpose.msra.mxu0 0.0
        %764 = vmatprep.subr.mxu0 0.0
        %765 = vmatpush1.xpose.msra.mxu0 0.0
        %766 = vmatprep.subr.mxu0 0.0
        %767 = vmatpush1.xpose.msra.mxu0 0.0
        %768 = vmatprep.subr.mxu0 0.0
        %769 = vmatpush1.xpose.msra.mxu0 0.0
        %770 = vmatprep.subr.mxu0 0.0
        %771 = vmatpush1.xpose.msra.mxu0 0.0
        %772 = vmatprep.subr.mxu0 0.0
        %773 = vmatpush1.xpose.msra.mxu0 0.0
        %774 = vmatprep.subr.mxu0 0.0
        %775 = vmatpush1.xpose.msra.mxu0 0.0
        %776 = vmatprep.subr.mxu0 0.0
        %777 = vmatpush1.xpose.msra.mxu0 0.0
        %778 = vmatprep.subr.mxu0 0.0
        %779 = vmatpush1.xpose.msra.mxu0 0.0
        %780 = vmatprep.subr.mxu0 0.0
        %781 = vmatpush1.xpose.msra.mxu0 0.0
        %782 = vmatprep.subr.mxu0 0.0
        %783 = vmatpush1.xpose.msra.mxu0 0.0
        %784 = vmatprep.subr.mxu0 0.0
        %785 = vmatpush1.xpose.msra.mxu0 0.0
        %786 = vmatprep.subr.mxu0 0.0
        %787 = vmatpush1.xpose.msra.mxu0 0.0
        %788 = vmatprep.subr.mxu0 0.0
        %789 = vmatpush1.xpose.msra.mxu0 0.0
        %790 = vmatprep.subr.mxu0 0.0
        %791 = vmatpush1.xpose.msra.mxu0 0.0
        %792 = vmatprep.subr.mxu0 0.0
        %793 = vmatpush1.xpose.msra.mxu0 0.0
        %794 = vmatprep.subr.mxu0 0.0
        %795 = vmatpush1.xpose.msra.mxu0 0.0
        %796 = vmatprep.subr.mxu0 0.0
        %797 = vmatpush1.xpose.msra.mxu0 0.0
        %798 = vmatprep.subr.mxu0 0.0
        %799 = vmatpush1.xpose.msra.mxu0 0.0
        %800 = vmatprep.subr.mxu0 0.0
        %801 = vmatpush1.xpose.msra.mxu0 0.0
        %802 = vmatprep.subr.mxu0 0.0
        %803 = vmatpush1.xpose.msra.mxu0 0.0
        %804 = vmatprep.subr.mxu0 0.0
        %805 = vmatpush1.xpose.msra.mxu0 0.0
        %806 = vmatprep.subr.mxu0 0.0
        %807 = vmatpush1.xpose.msra.mxu0 0.0
        %808 = vmatprep.mubr.f32.mxu0 0.0
        %809 = vmatmul.mubr.f32.gmra.mrb[0].mxu0 %v740
        %v810 = vpop.f32.mrb[0].mxu0
        %v811 = vadd.f32 0.0, %v810
        %v812 = vpop.f32.mrb[0].mxu0
        %813 = vdwg.mxu0
        %v814 = vsel %vm347, %v811, -inf
        %s815 = scalar_lea.vmem [#allocation3], 16
        %v816 = vld [vmem:[%s815] sm:$0xff]
        %v817 = vsel %vm351, %v814, -inf
        %818 = vmax.xlane.f32.xlu0 %v817
        %v819 = vpop.xlane.xlu0 %818
        %v820 = vmax.f32 %v816, %v819
        %v821 = vsub.f32 %v816, %v820
        %v822 = vmul.f32 %v821, 1.442695
        %v823 = vpow.pop %v822
        %825 = vset.pattern.permute.xlu0 0
        %826 = vperm.xlu0 %825, %v820
        %v827 = vpop.permute.xlu0 %826
        %v829 = vsub.f32 %v814, %v827
        %v830 = vmul.f32 %v829, 1.442695
        %v831 = vpow.pop %v830
        %s832 = scalar_lea.vmem [#allocation4], 16
        %v833 = vld [vmem:[%s832] sm:$0xff]
        %v834 = vmul.f32 %v823, %v833
        %v835 = vsel %vm351, %v831, 0.0
        %836 = vadd.xlane.f32.xlu0 %v835
        %v837 = vpop.xlane.xlu0 %836
        %v838 = vadd.f32 %v834, %v837
        %839 = vst.msk [vmem:[%s832] sm:$0xff] %vm451, %v838
        %s840 = scalar_lea.vmem [#allocation5], 16
        %v841 = vld [vmem:[%s840] sm:$0xff]
        %843 = vset.pattern.permute.xlu0 0
        %844 = vperm.xlu0 %843, %v823
        %v845 = vpop.permute.xlu0 %844
        %v847 = vmul.f32 %v845, %v841
        %849 = vrot.lane.b32.xlu0 %v733, 112
        %v850 = vpop.permute.xlu0 %849
        %v853 = vsel %vm351, %v831, 0
        %855 = vmatprep.subr.mxu0 0.0
        %856 = vmatpush1.msra.mxu0 %v850
        %857 = vmatprep.subr.mxu0 0.0
        %858 = vmatpush1.msra.mxu0 0.0
        %859 = vmatprep.subr.mxu0 0.0
        %860 = vmatpush1.msra.mxu0 0.0
        %861 = vmatprep.subr.mxu0 0.0
        %862 = vmatpush1.msra.mxu0 0.0
        %863 = vmatprep.subr.mxu0 0.0
        %864 = vmatpush1.msra.mxu0 0.0
        %865 = vmatprep.subr.mxu0 0.0
        %866 = vmatpush1.msra.mxu0 0.0
        %867 = vmatprep.subr.mxu0 0.0
        %868 = vmatpush1.msra.mxu0 0.0
        %869 = vmatprep.subr.mxu0 0.0
        %870 = vmatpush1.msra.mxu0 0.0
        %871 = vmatprep.subr.mxu0 0.0
        %872 = vmatpush1.msra.mxu0 0.0
        %873 = vmatprep.subr.mxu0 0.0
        %874 = vmatpush1.msra.mxu0 0.0
        %875 = vmatprep.subr.mxu0 0.0
        %876 = vmatpush1.msra.mxu0 0.0
        %877 = vmatprep.subr.mxu0 0.0
        %878 = vmatpush1.msra.mxu0 0.0
        %879 = vmatprep.subr.mxu0 0.0
        %880 = vmatpush1.msra.mxu0 0.0
        %881 = vmatprep.subr.mxu0 0.0
        %882 = vmatpush1.msra.mxu0 0.0
        %883 = vmatprep.subr.mxu0 0.0
        %884 = vmatpush1.msra.mxu0 0.0
        %885 = vmatprep.subr.mxu0 0.0
        %886 = vmatpush1.msra.mxu0 0.0
        %887 = vmatprep.subr.mxu0 0.0
        %888 = vmatpush1.msra.mxu0 0.0
        %889 = vmatprep.subr.mxu0 0.0
        %890 = vmatpush1.msra.mxu0 0.0
        %891 = vmatprep.subr.mxu0 0.0
        %892 = vmatpush1.msra.mxu0 0.0
        %893 = vmatprep.subr.mxu0 0.0
        %894 = vmatpush1.msra.mxu0 0.0
        %895 = vmatprep.subr.mxu0 0.0
        %896 = vmatpush1.msra.mxu0 0.0
        %897 = vmatprep.subr.mxu0 0.0
        %898 = vmatpush1.msra.mxu0 0.0
        %899 = vmatprep.subr.mxu0 0.0
        %900 = vmatpush1.msra.mxu0 0.0
        %901 = vmatprep.subr.mxu0 0.0
        %902 = vmatpush1.msra.mxu0 0.0
        %903 = vmatprep.subr.mxu0 0.0
        %904 = vmatpush1.msra.mxu0 0.0
        %905 = vmatprep.subr.mxu0 0.0
        %906 = vmatpush1.msra.mxu0 0.0
        %907 = vmatprep.subr.mxu0 0.0
        %908 = vmatpush1.msra.mxu0 0.0
        %909 = vmatprep.subr.mxu0 0.0
        %910 = vmatpush1.msra.mxu0 0.0
        %911 = vmatprep.subr.mxu0 0.0
        %912 = vmatpush1.msra.mxu0 0.0
        %913 = vmatprep.subr.mxu0 0.0
        %914 = vmatpush1.msra.mxu0 0.0
        %915 = vmatprep.subr.mxu0 0.0
        %916 = vmatpush1.msra.mxu0 0.0
        %917 = vmatprep.subr.mxu0 0.0
        %918 = vmatpush1.msra.mxu0 0.0
        %919 = vmatprep.mubr.f32.mxu0 0.0
        %920 = vmatmul.mubr.f32.gmra.mrb[0].mxu0 %v853
        %v921 = vpop.f32.mrb[0].mxu0
        %v922 = vadd.f32 0.0, %v921
        %v923 = vpop.f32.mrb[0].mxu0
        %924 = vdwg.mxu0
        %v925 = vadd.f32 %v847, %v922
        %926 = vst.msk [vmem:[%s840] sm:$0xff] %vm351, %v925
        %927 = vst.msk [vmem:[%s815] sm:$0xff] %vm451, %v820
        %v928 = vld [vmem:[%s268] sm:$0xff]
        %v929 = vld [vmem:[%s278] sm:$0xff]
        %s930 = scalar_lea.vmem [#allocation2], 24
        %v931 = vld [vmem:[%s930] sm:$0xff]
        %933 = vrot.lane.b32.xlu0 %v928, 104
        %v934 = vpop.permute.xlu0 %933
        %v936 = vsel %vm351, %v931, 0
        %v938 = vsel %vm351, %v934, 0
        %940 = vmatprep.subr.mxu0 0.0
        %941 = vmatpush1.xpose.msra.mxu0 %v938
        %942 = vmatprep.subr.mxu0 0.0
        %943 = vmatpush1.xpose.msra.mxu0 0.0
        %944 = vmatprep.subr.mxu0 0.0
        %945 = vmatpush1.xpose.msra.mxu0 0.0
        %946 = vmatprep.subr.mxu0 0.0
        %947 = vmatpush1.xpose.msra.mxu0 0.0
        %948 = vmatprep.subr.mxu0 0.0
        %949 = vmatpush1.xpose.msra.mxu0 0.0
        %950 = vmatprep.subr.mxu0 0.0
        %951 = vmatpush1.xpose.msra.mxu0 0.0
        %952 = vmatprep.subr.mxu0 0.0
        %953 = vmatpush1.xpose.msra.mxu0 0.0
        %954 = vmatprep.subr.mxu0 0.0
        %955 = vmatpush1.xpose.msra.mxu0 0.0
        %956 = vmatprep.subr.mxu0 0.0
        %957 = vmatpush1.xpose.msra.mxu0 0.0
        %958 = vmatprep.subr.mxu0 0.0
        %959 = vmatpush1.xpose.msra.mxu0 0.0
        %960 = vmatprep.subr.mxu0 0.0
        %961 = vmatpush1.xpose.msra.mxu0 0.0
        %962 = vmatprep.subr.mxu0 0.0
        %963 = vmatpush1.xpose.msra.mxu0 0.0
        %964 = vmatprep.subr.mxu0 0.0
        %965 = vmatpush1.xpose.msra.mxu0 0.0
        %966 = vmatprep.subr.mxu0 0.0
        %967 = vmatpush1.xpose.msra.mxu0 0.0
        %968 = vmatprep.subr.mxu0 0.0
        %969 = vmatpush1.xpose.msra.mxu0 0.0
        %970 = vmatprep.subr.mxu0 0.0
        %971 = vmatpush1.xpose.msra.mxu0 0.0
        %972 = vmatprep.subr.mxu0 0.0
        %973 = vmatpush1.xpose.msra.mxu0 0.0
        %974 = vmatprep.subr.mxu0 0.0
        %975 = vmatpush1.xpose.msra.mxu0 0.0
        %976 = vmatprep.subr.mxu0 0.0
        %977 = vmatpush1.xpose.msra.mxu0 0.0
        %978 = vmatprep.subr.mxu0 0.0
        %979 = vmatpush1.xpose.msra.mxu0 0.0
        %980 = vmatprep.subr.mxu0 0.0
        %981 = vmatpush1.xpose.msra.mxu0 0.0
        %982 = vmatprep.subr.mxu0 0.0
        %983 = vmatpush1.xpose.msra.mxu0 0.0
        %984 = vmatprep.subr.mxu0 0.0
        %985 = vmatpush1.xpose.msra.mxu0 0.0
        %986 = vmatprep.subr.mxu0 0.0
        %987 = vmatpush1.xpose.msra.mxu0 0.0
        %988 = vmatprep.subr.mxu0 0.0
        %989 = vmatpush1.xpose.msra.mxu0 0.0
        %990 = vmatprep.subr.mxu0 0.0
        %991 = vmatpush1.xpose.msra.mxu0 0.0
        %992 = vmatprep.subr.mxu0 0.0
        %993 = vmatpush1.xpose.msra.mxu0 0.0
        %994 = vmatprep.subr.mxu0 0.0
        %995 = vmatpush1.xpose.msra.mxu0 0.0
        %996 = vmatprep.subr.mxu0 0.0
        %997 = vmatpush1.xpose.msra.mxu0 0.0
        %998 = vmatprep.subr.mxu0 0.0
        %999 = vmatpush1.xpose.msra.mxu0 0.0
        %1000 = vmatprep.subr.mxu0 0.0
        %1001 = vmatpush1.xpose.msra.mxu0 0.0
        %1002 = vmatprep.subr.mxu0 0.0
        %1003 = vmatpush1.xpose.msra.mxu0 0.0
        %1004 = vmatprep.mubr.f32.mxu0 0.0
        %1005 = vmatmul.mubr.f32.gmra.mrb[0].mxu0 %v936
        %v1006 = vpop.f32.mrb[0].mxu0
        %v1007 = vadd.f32 0.0, %v1006
        %v1008 = vpop.f32.mrb[0].mxu0
        %1009 = vdwg.mxu0
        %v1010 = vsel %vm347, %v1007, -inf
        %s1011 = scalar_lea.vmem [#allocation3], 24
        %v1012 = vld [vmem:[%s1011] sm:$0xff]
        %v1013 = vsel %vm351, %v1010, -inf
        %1014 = vmax.xlane.f32.xlu0 %v1013
        %v1015 = vpop.xlane.xlu0 %1014
        %v1016 = vmax.f32 %v1012, %v1015
        %v1017 = vsub.f32 %v1012, %v1016
        %v1018 = vmul.f32 %v1017, 1.442695
        %v1019 = vpow.pop %v1018
        %1021 = vset.pattern.permute.xlu0 0
        %1022 = vperm.xlu0 %1021, %v1016
        %v1023 = vpop.permute.xlu0 %1022
        %v1025 = vsub.f32 %v1010, %v1023
        %v1026 = vmul.f32 %v1025, 1.442695
        %v1027 = vpow.pop %v1026
        %s1028 = scalar_lea.vmem [#allocation4], 24
        %v1029 = vld [vmem:[%s1028] sm:$0xff]
        %v1030 = vmul.f32 %v1019, %v1029
        %v1031 = vsel %vm351, %v1027, 0.0
        %1032 = vadd.xlane.f32.xlu0 %v1031
        %v1033 = vpop.xlane.xlu0 %1032
        %v1034 = vadd.f32 %v1030, %v1033
        %1035 = vst.msk [vmem:[%s1028] sm:$0xff] %vm451, %v1034
        %s1036 = scalar_lea.vmem [#allocation5], 24
        %v1037 = vld [vmem:[%s1036] sm:$0xff]
        %1039 = vset.pattern.permute.xlu0 0
        %1040 = vperm.xlu0 %1039, %v1019
        %v1041 = vpop.permute.xlu0 %1040
        %v1043 = vmul.f32 %v1041, %v1037
        %1045 = vrot.lane.b32.xlu0 %v929, 104
        %v1046 = vpop.permute.xlu0 %1045
        %v1049 = vsel %vm351, %v1027, 0
        %1051 = vmatprep.subr.mxu0 0.0
        %1052 = vmatpush1.msra.mxu0 %v1046
        %1053 = vmatprep.subr.mxu0 0.0
        %1054 = vmatpush1.msra.mxu0 0.0
        %1055 = vmatprep.subr.mxu0 0.0
        %1056 = vmatpush1.msra.mxu0 0.0
        %1057 = vmatprep.subr.mxu0 0.0
        %1058 = vmatpush1.msra.mxu0 0.0
        %1059 = vmatprep.subr.mxu0 0.0
        %1060 = vmatpush1.msra.mxu0 0.0
        %1061 = vmatprep.subr.mxu0 0.0
        %1062 = vmatpush1.msra.mxu0 0.0
        %1063 = vmatprep.subr.mxu0 0.0
        %1064 = vmatpush1.msra.mxu0 0.0
        %1065 = vmatprep.subr.mxu0 0.0
        %1066 = vmatpush1.msra.mxu0 0.0
        %1067 = vmatprep.subr.mxu0 0.0
        %1068 = vmatpush1.msra.mxu0 0.0
        %1069 = vmatprep.subr.mxu0 0.0
        %1070 = vmatpush1.msra.mxu0 0.0
        %1071 = vmatprep.subr.mxu0 0.0
        %1072 = vmatpush1.msra.mxu0 0.0
        %1073 = vmatprep.subr.mxu0 0.0
        %1074 = vmatpush1.msra.mxu0 0.0
        %1075 = vmatprep.subr.mxu0 0.0
        %1076 = vmatpush1.msra.mxu0 0.0
        %1077 = vmatprep.subr.mxu0 0.0
        %1078 = vmatpush1.msra.mxu0 0.0
        %1079 = vmatprep.subr.mxu0 0.0
        %1080 = vmatpush1.msra.mxu0 0.0
        %1081 = vmatprep.subr.mxu0 0.0
        %1082 = vmatpush1.msra.mxu0 0.0
        %1083 = vmatprep.subr.mxu0 0.0
        %1084 = vmatpush1.msra.mxu0 0.0
        %1085 = vmatprep.subr.mxu0 0.0
        %1086 = vmatpush1.msra.mxu0 0.0
        %1087 = vmatprep.subr.mxu0 0.0
        %1088 = vmatpush1.msra.mxu0 0.0
        %1089 = vmatprep.subr.mxu0 0.0
        %1090 = vmatpush1.msra.mxu0 0.0
        %1091 = vmatprep.subr.mxu0 0.0
        %1092 = vmatpush1.msra.mxu0 0.0
        %1093 = vmatprep.subr.mxu0 0.0
        %1094 = vmatpush1.msra.mxu0 0.0
        %1095 = vmatprep.subr.mxu0 0.0
        %1096 = vmatpush1.msra.mxu0 0.0
        %1097 = vmatprep.subr.mxu0 0.0
        %1098 = vmatpush1.msra.mxu0 0.0
        %1099 = vmatprep.subr.mxu0 0.0
        %1100 = vmatpush1.msra.mxu0 0.0
        %1101 = vmatprep.subr.mxu0 0.0
        %1102 = vmatpush1.msra.mxu0 0.0
        %1103 = vmatprep.subr.mxu0 0.0
        %1104 = vmatpush1.msra.mxu0 0.0
        %1105 = vmatprep.subr.mxu0 0.0
        %1106 = vmatpush1.msra.mxu0 0.0
        %1107 = vmatprep.subr.mxu0 0.0
        %1108 = vmatpush1.msra.mxu0 0.0
        %1109 = vmatprep.subr.mxu0 0.0
        %1110 = vmatpush1.msra.mxu0 0.0
        %1111 = vmatprep.subr.mxu0 0.0
        %1112 = vmatpush1.msra.mxu0 0.0
        %1113 = vmatprep.subr.mxu0 0.0
        %1114 = vmatpush1.msra.mxu0 0.0
        %1115 = vmatprep.mubr.f32.mxu0 0.0
        %1116 = vmatmul.mubr.f32.gmra.mrb[0].mxu0 %v1049
        %v1117 = vpop.f32.mrb[0].mxu0
        %v1118 = vadd.f32 0.0, %v1117
        %v1119 = vpop.f32.mrb[0].mxu0
        %1120 = vdwg.mxu0
        %v1121 = vadd.f32 %v1043, %v1118
        %1122 = vst.msk [vmem:[%s1036] sm:$0xff] %vm351, %v1121
        %1123 = vst.msk [vmem:[%s1011] sm:$0xff] %vm451, %v1016
      $region40: #{causal_self_attention.4} parent=31 // pred_fallthru
        _
      %p1124 = scmp.le.s32.totalorder %s333, %s334
      // Predicated region
      $region41: #{causal_self_attention.4} parent=31 // pred_check
        %p1125 = pneg %p1124
      $region42: #{causal_self_attention.4} parent=31 // pred_check_branch
        %1127 = sbr.rel (%p1125) target = $region44
      $region43: #{causal_self_attention.4} parent=31 // pred_region
        %v1128 = vld [vmem:[%s268] sm:$0xff]
        %v1129 = vld [vmem:[%s278] sm:$0xff]
        %v1130 = vld [vmem:[#allocation2] sm:$0xff]
        %vm1131 = vcmask 64512
        %v1133 = vsel %vm1131, %v1130, 0
        %v1136 = vsel %vm1131, %v1128, 0
        %1138 = vmatprep.subr.mxu0 0.0
        %1139 = vmatpush1.xpose.msra.mxu0 %v1136
        %1140 = vmatprep.subr.mxu0 0.0
        %1141 = vmatpush1.xpose.msra.mxu0 0.0
        %1142 = vmatprep.subr.mxu0 0.0
        %1143 = vmatpush1.xpose.msra.mxu0 0.0
        %1144 = vmatprep.subr.mxu0 0.0
        %1145 = vmatpush1.xpose.msra.mxu0 0.0
        %1146 = vmatprep.subr.mxu0 0.0
        %1147 = vmatpush1.xpose.msra.mxu0 0.0
        %1148 = vmatprep.subr.mxu0 0.0
        %1149 = vmatpush1.xpose.msra.mxu0 0.0
        %1150 = vmatprep.subr.mxu0 0.0
        %1151 = vmatpush1.xpose.msra.mxu0 0.0
        %1152 = vmatprep.subr.mxu0 0.0
        %1153 = vmatpush1.xpose.msra.mxu0 0.0
        %1154 = vmatprep.subr.mxu0 0.0
        %1155 = vmatpush1.xpose.msra.mxu0 0.0
        %1156 = vmatprep.subr.mxu0 0.0
        %1157 = vmatpush1.xpose.msra.mxu0 0.0
        %1158 = vmatprep.subr.mxu0 0.0
        %1159 = vmatpush1.xpose.msra.mxu0 0.0
        %1160 = vmatprep.subr.mxu0 0.0
        %1161 = vmatpush1.xpose.msra.mxu0 0.0
        %1162 = vmatprep.subr.mxu0 0.0
        %1163 = vmatpush1.xpose.msra.mxu0 0.0
        %1164 = vmatprep.subr.mxu0 0.0
        %1165 = vmatpush1.xpose.msra.mxu0 0.0
        %1166 = vmatprep.subr.mxu0 0.0
        %1167 = vmatpush1.xpose.msra.mxu0 0.0
        %1168 = vmatprep.subr.mxu0 0.0
        %1169 = vmatpush1.xpose.msra.mxu0 0.0
        %1170 = vmatprep.subr.mxu0 0.0
        %1171 = vmatpush1.xpose.msra.mxu0 0.0
        %1172 = vmatprep.subr.mxu0 0.0
        %1173 = vmatpush1.xpose.msra.mxu0 0.0
        %1174 = vmatprep.subr.mxu0 0.0
        %1175 = vmatpush1.xpose.msra.mxu0 0.0
        %1176 = vmatprep.subr.mxu0 0.0
        %1177 = vmatpush1.xpose.msra.mxu0 0.0
        %1178 = vmatprep.subr.mxu0 0.0
        %1179 = vmatpush1.xpose.msra.mxu0 0.0
        %1180 = vmatprep.subr.mxu0 0.0
        %1181 = vmatpush1.xpose.msra.mxu0 0.0
        %1182 = vmatprep.subr.mxu0 0.0
        %1183 = vmatpush1.xpose.msra.mxu0 0.0
        %1184 = vmatprep.subr.mxu0 0.0
        %1185 = vmatpush1.xpose.msra.mxu0 0.0
        %1186 = vmatprep.subr.mxu0 0.0
        %1187 = vmatpush1.xpose.msra.mxu0 0.0
        %1188 = vmatprep.subr.mxu0 0.0
        %1189 = vmatpush1.xpose.msra.mxu0 0.0
        %1190 = vmatprep.subr.mxu0 0.0
        %1191 = vmatpush1.xpose.msra.mxu0 0.0
        %1192 = vmatprep.subr.mxu0 0.0
        %1193 = vmatpush1.xpose.msra.mxu0 0.0
        %1194 = vmatprep.subr.mxu0 0.0
        %1195 = vmatpush1.xpose.msra.mxu0 0.0
        %1196 = vmatprep.subr.mxu0 0.0
        %1197 = vmatpush1.xpose.msra.mxu0 0.0
        %1198 = vmatprep.subr.mxu0 0.0
        %1199 = vmatpush1.xpose.msra.mxu0 0.0
        %1200 = vmatprep.subr.mxu0 0.0
        %1201 = vmatpush1.xpose.msra.mxu0 0.0
        %1202 = vmatprep.mubr.f32.mxu0 0.0
        %1203 = vmatmul.mubr.f32.gmra.mrb[0].mxu0 %v1133
        %v1204 = vpop.f32.mrb[0].mxu0
        %v1205 = vadd.f32 0.0, %v1204
        %v1206 = vpop.f32.mrb[0].mxu0
        %1207 = vdwg.mxu0
        %v1208 = vld [vmem:[#allocation3] sm:$0xff]
        %v1209 = vsel %vm1131, %v1205, -inf
        %1210 = vmax.xlane.f32.xlu0 %v1209
        %v1211 = vpop.xlane.xlu0 %1210
        %v1212 = vmax.f32 %v1208, %v1211
        %v1213 = vsub.f32 %v1208, %v1212
        %v1214 = vmul.f32 %v1213, 1.442695
        %v1215 = vpow.pop %v1214
        %1217 = vset.pattern.permute.xlu0 0
        %1218 = vperm.xlu0 %1217, %v1212
        %v1219 = vpop.permute.xlu0 %1218
        %v1221 = vsub.f32 %v1205, %v1219
        %v1222 = vmul.f32 %v1221, 1.442695
        %v1223 = vpow.pop %v1222
        %v1224 = vld [vmem:[#allocation4] sm:$0xff]
        %v1225 = vmul.f32 %v1215, %v1224
        %v1226 = vsel %vm1131, %v1223, 0.0
        %1227 = vadd.xlane.f32.xlu0 %v1226
        %v1228 = vpop.xlane.xlu0 %1227
        %v1229 = vadd.f32 %v1225, %v1228
        %vm1230 = vcmask 7168
        %1231 = vst.msk [vmem:[#allocation4] sm:$0xff] %vm1230, %v1229
        %v1232 = vld [vmem:[#allocation5] sm:$0xff]
        %1234 = vset.pattern.permute.xlu0 0
        %1235 = vperm.xlu0 %1234, %v1215
        %v1236 = vpop.permute.xlu0 %1235
        %v1238 = vmul.f32 %v1236, %v1232
        %v1240 = vsel %vm1131, %v1223, 0
        %1242 = vmatprep.subr.mxu0 0.0
        %1243 = vmatpush1.msra.mxu0 %v1129
        %1244 = vmatprep.subr.mxu0 0.0
        %1245 = vmatpush1.msra.mxu0 0.0
        %1246 = vmatprep.subr.mxu0 0.0
        %1247 = vmatpush1.msra.mxu0 0.0
        %1248 = vmatprep.subr.mxu0 0.0
        %1249 = vmatpush1.msra.mxu0 0.0
        %1250 = vmatprep.subr.mxu0 0.0
        %1251 = vmatpush1.msra.mxu0 0.0
        %1252 = vmatprep.subr.mxu0 0.0
        %1253 = vmatpush1.msra.mxu0 0.0
        %1254 = vmatprep.subr.mxu0 0.0
        %1255 = vmatpush1.msra.mxu0 0.0
        %1256 = vmatprep.subr.mxu0 0.0
        %1257 = vmatpush1.msra.mxu0 0.0
        %1258 = vmatprep.subr.mxu0 0.0
        %1259 = vmatpush1.msra.mxu0 0.0
        %1260 = vmatprep.subr.mxu0 0.0
        %1261 = vmatpush1.msra.mxu0 0.0
        %1262 = vmatprep.subr.mxu0 0.0
        %1263 = vmatpush1.msra.mxu0 0.0
        %1264 = vmatprep.subr.mxu0 0.0
        %1265 = vmatpush1.msra.mxu0 0.0
        %1266 = vmatprep.subr.mxu0 0.0
        %1267 = vmatpush1.msra.mxu0 0.0
        %1268 = vmatprep.subr.mxu0 0.0
        %1269 = vmatpush1.msra.mxu0 0.0
        %1270 = vmatprep.subr.mxu0 0.0
        %1271 = vmatpush1.msra.mxu0 0.0
        %1272 = vmatprep.subr.mxu0 0.0
        %1273 = vmatpush1.msra.mxu0 0.0
        %1274 = vmatprep.subr.mxu0 0.0
        %1275 = vmatpush1.msra.mxu0 0.0
        %1276 = vmatprep.subr.mxu0 0.0
        %1277 = vmatpush1.msra.mxu0 0.0
        %1278 = vmatprep.subr.mxu0 0.0
        %1279 = vmatpush1.msra.mxu0 0.0
        %1280 = vmatprep.subr.mxu0 0.0
        %1281 = vmatpush1.msra.mxu0 0.0
        %1282 = vmatprep.subr.mxu0 0.0
        %1283 = vmatpush1.msra.mxu0 0.0
        %1284 = vmatprep.subr.mxu0 0.0
        %1285 = vmatpush1.msra.mxu0 0.0
        %1286 = vmatprep.subr.mxu0 0.0
        %1287 = vmatpush1.msra.mxu0 0.0
        %1288 = vmatprep.subr.mxu0 0.0
        %1289 = vmatpush1.msra.mxu0 0.0
        %1290 = vmatprep.subr.mxu0 0.0
        %1291 = vmatpush1.msra.mxu0 0.0
        %1292 = vmatprep.subr.mxu0 0.0
        %1293 = vmatpush1.msra.mxu0 0.0
        %1294 = vmatprep.subr.mxu0 0.0
        %1295 = vmatpush1.msra.mxu0 0.0
        %1296 = vmatprep.subr.mxu0 0.0
        %1297 = vmatpush1.msra.mxu0 0.0
        %1298 = vmatprep.subr.mxu0 0.0
        %1299 = vmatpush1.msra.mxu0 0.0
        %1300 = vmatprep.subr.mxu0 0.0
        %1301 = vmatpush1.msra.mxu0 0.0
        %1302 = vmatprep.subr.mxu0 0.0
        %1303 = vmatpush1.msra.mxu0 0.0
        %1304 = vmatprep.subr.mxu0 0.0
        %1305 = vmatpush1.msra.mxu0 0.0
        %1306 = vmatprep.mubr.f32.mxu0 0.0
        %1307 = vmatmul.mubr.f32.gmra.mrb[0].mxu0 %v1240
        %v1308 = vpop.f32.mrb[0].mxu0
        %v1309 = vadd.f32 0.0, %v1308
        %v1310 = vpop.f32.mrb[0].mxu0
        %1311 = vdwg.mxu0
        %v1312 = vadd.f32 %v1238, %v1309
        %1313 = vst.msk [vmem:[#allocation5] sm:$0xff] %vm1131, %v1312
        %1314 = vst.msk [vmem:[#allocation3] sm:$0xff] %vm1230, %v1212
        %v1315 = vld [vmem:[%s268] sm:$0xff]
        %v1316 = vld [vmem:[%s278] sm:$0xff]
        %s1317 = scalar_lea.vmem [#allocation2], 8
        %v1318 = vld [vmem:[%s1317] sm:$0xff]
        %1320 = vrot.lane.b32.xlu0 %v1315, 120
        %v1321 = vpop.permute.xlu0 %1320
        %v1323 = vsel %vm1131, %v1318, 0
        %v1325 = vsel %vm1131, %v1321, 0
        %1327 = vmatprep.subr.mxu0 0.0
        %1328 = vmatpush1.xpose.msra.mxu0 %v1325
        %1329 = vmatprep.subr.mxu0 0.0
        %1330 = vmatpush1.xpose.msra.mxu0 0.0
        %1331 = vmatprep.subr.mxu0 0.0
        %1332 = vmatpush1.xpose.msra.mxu0 0.0
        %1333 = vmatprep.subr.mxu0 0.0
        %1334 = vmatpush1.xpose.msra.mxu0 0.0
        %1335 = vmatprep.subr.mxu0 0.0
        %1336 = vmatpush1.xpose.msra.mxu0 0.0
        %1337 = vmatprep.subr.mxu0 0.0
        %1338 = vmatpush1.xpose.msra.mxu0 0.0
        %1339 = vmatprep.subr.mxu0 0.0
        %1340 = vmatpush1.xpose.msra.mxu0 0.0
        %1341 = vmatprep.subr.mxu0 0.0
        %1342 = vmatpush1.xpose.msra.mxu0 0.0
        %1343 = vmatprep.subr.mxu0 0.0
        %1344 = vmatpush1.xpose.msra.mxu0 0.0
        %1345 = vmatprep.subr.mxu0 0.0
        %1346 = vmatpush1.xpose.msra.mxu0 0.0
        %1347 = vmatprep.subr.mxu0 0.0
        %1348 = vmatpush1.xpose.msra.mxu0 0.0
        %1349 = vmatprep.subr.mxu0 0.0
        %1350 = vmatpush1.xpose.msra.mxu0 0.0
        %1351 = vmatprep.subr.mxu0 0.0
        %1352 = vmatpush1.xpose.msra.mxu0 0.0
        %1353 = vmatprep.subr.mxu0 0.0
        %1354 = vmatpush1.xpose.msra.mxu0 0.0
        %1355 = vmatprep.subr.mxu0 0.0
        %1356 = vmatpush1.xpose.msra.mxu0 0.0
        %1357 = vmatprep.subr.mxu0 0.0
        %1358 = vmatpush1.xpose.msra.mxu0 0.0
        %1359 = vmatprep.subr.mxu0 0.0
        %1360 = vmatpush1.xpose.msra.mxu0 0.0
        %1361 = vmatprep.subr.mxu0 0.0
        %1362 = vmatpush1.xpose.msra.mxu0 0.0
        %1363 = vmatprep.subr.mxu0 0.0
        %1364 = vmatpush1.xpose.msra.mxu0 0.0
        %1365 = vmatprep.subr.mxu0 0.0
        %1366 = vmatpush1.xpose.msra.mxu0 0.0
        %1367 = vmatprep.subr.mxu0 0.0
        %1368 = vmatpush1.xpose.msra.mxu0 0.0
        %1369 = vmatprep.subr.mxu0 0.0
        %1370 = vmatpush1.xpose.msra.mxu0 0.0
        %1371 = vmatprep.subr.mxu0 0.0
        %1372 = vmatpush1.xpose.msra.mxu0 0.0
        %1373 = vmatprep.subr.mxu0 0.0
        %1374 = vmatpush1.xpose.msra.mxu0 0.0
        %1375 = vmatprep.subr.mxu0 0.0
        %1376 = vmatpush1.xpose.msra.mxu0 0.0
        %1377 = vmatprep.subr.mxu0 0.0
        %1378 = vmatpush1.xpose.msra.mxu0 0.0
        %1379 = vmatprep.subr.mxu0 0.0
        %1380 = vmatpush1.xpose.msra.mxu0 0.0
        %1381 = vmatprep.subr.mxu0 0.0
        %1382 = vmatpush1.xpose.msra.mxu0 0.0
        %1383 = vmatprep.subr.mxu0 0.0
        %1384 = vmatpush1.xpose.msra.mxu0 0.0
        %1385 = vmatprep.subr.mxu0 0.0
        %1386 = vmatpush1.xpose.msra.mxu0 0.0
        %1387 = vmatprep.subr.mxu0 0.0
        %1388 = vmatpush1.xpose.msra.mxu0 0.0
        %1389 = vmatprep.subr.mxu0 0.0
        %1390 = vmatpush1.xpose.msra.mxu0 0.0
        %1391 = vmatprep.mubr.f32.mxu0 0.0
        %1392 = vmatmul.mubr.f32.gmra.mrb[0].mxu0 %v1323
        %v1393 = vpop.f32.mrb[0].mxu0
        %v1394 = vadd.f32 0.0, %v1393
        %v1395 = vpop.f32.mrb[0].mxu0
        %1396 = vdwg.mxu0
        %s1397 = scalar_lea.vmem [#allocation3], 8
        %v1398 = vld [vmem:[%s1397] sm:$0xff]
        %v1399 = vsel %vm1131, %v1394, -inf
        %1400 = vmax.xlane.f32.xlu0 %v1399
        %v1401 = vpop.xlane.xlu0 %1400
        %v1402 = vmax.f32 %v1398, %v1401
        %v1403 = vsub.f32 %v1398, %v1402
        %v1404 = vmul.f32 %v1403, 1.442695
        %v1405 = vpow.pop %v1404
        %1407 = vset.pattern.permute.xlu0 0
        %1408 = vperm.xlu0 %1407, %v1402
        %v1409 = vpop.permute.xlu0 %1408
        %v1411 = vsub.f32 %v1394, %v1409
        %v1412 = vmul.f32 %v1411, 1.442695
        %v1413 = vpow.pop %v1412
        %s1414 = scalar_lea.vmem [#allocation4], 8
        %v1415 = vld [vmem:[%s1414] sm:$0xff]
        %v1416 = vmul.f32 %v1405, %v1415
        %v1417 = vsel %vm1131, %v1413, 0.0
        %1418 = vadd.xlane.f32.xlu0 %v1417
        %v1419 = vpop.xlane.xlu0 %1418
        %v1420 = vadd.f32 %v1416, %v1419
        %1421 = vst.msk [vmem:[%s1414] sm:$0xff] %vm1230, %v1420
        %s1422 = scalar_lea.vmem [#allocation5], 8
        %v1423 = vld [vmem:[%s1422] sm:$0xff]
        %1425 = vset.pattern.permute.xlu0 0
        %1426 = vperm.xlu0 %1425, %v1405
        %v1427 = vpop.permute.xlu0 %1426
        %v1429 = vmul.f32 %v1427, %v1423
        %1431 = vrot.lane.b32.xlu0 %v1316, 120
        %v1432 = vpop.permute.xlu0 %1431
        %v1435 = vsel %vm1131, %v1413, 0
        %1437 = vmatprep.subr.mxu0 0.0
        %1438 = vmatpush1.msra.mxu0 %v1432
        %1439 = vmatprep.subr.mxu0 0.0
        %1440 = vmatpush1.msra.mxu0 0.0
        %1441 = vmatprep.subr.mxu0 0.0
        %1442 = vmatpush1.msra.mxu0 0.0
        %1443 = vmatprep.subr.mxu0 0.0
        %1444 = vmatpush1.msra.mxu0 0.0
        %1445 = vmatprep.subr.mxu0 0.0
        %1446 = vmatpush1.msra.mxu0 0.0
        %1447 = vmatprep.subr.mxu0 0.0
        %1448 = vmatpush1.msra.mxu0 0.0
        %1449 = vmatprep.subr.mxu0 0.0
        %1450 = vmatpush1.msra.mxu0 0.0
        %1451 = vmatprep.subr.mxu0 0.0
        %1452 = vmatpush1.msra.mxu0 0.0
        %1453 = vmatprep.subr.mxu0 0.0
        %1454 = vmatpush1.msra.mxu0 0.0
        %1455 = vmatprep.subr.mxu0 0.0
        %1456 = vmatpush1.msra.mxu0 0.0
        %1457 = vmatprep.subr.mxu0 0.0
        %1458 = vmatpush1.msra.mxu0 0.0
        %1459 = vmatprep.subr.mxu0 0.0
        %1460 = vmatpush1.msra.mxu0 0.0
        %1461 = vmatprep.subr.mxu0 0.0
        %1462 = vmatpush1.msra.mxu0 0.0
        %1463 = vmatprep.subr.mxu0 0.0
        %1464 = vmatpush1.msra.mxu0 0.0
        %1465 = vmatprep.subr.mxu0 0.0
        %1466 = vmatpush1.msra.mxu0 0.0
        %1467 = vmatprep.subr.mxu0 0.0
        %1468 = vmatpush1.msra.mxu0 0.0
        %1469 = vmatprep.subr.mxu0 0.0
        %1470 = vmatpush1.msra.mxu0 0.0
        %1471 = vmatprep.subr.mxu0 0.0
        %1472 = vmatpush1.msra.mxu0 0.0
        %1473 = vmatprep.subr.mxu0 0.0
        %1474 = vmatpush1.msra.mxu0 0.0
        %1475 = vmatprep.subr.mxu0 0.0
        %1476 = vmatpush1.msra.mxu0 0.0
        %1477 = vmatprep.subr.mxu0 0.0
        %1478 = vmatpush1.msra.mxu0 0.0
        %1479 = vmatprep.subr.mxu0 0.0
        %1480 = vmatpush1.msra.mxu0 0.0
        %1481 = vmatprep.subr.mxu0 0.0
        %1482 = vmatpush1.msra.mxu0 0.0
        %1483 = vmatprep.subr.mxu0 0.0
        %1484 = vmatpush1.msra.mxu0 0.0
        %1485 = vmatprep.subr.mxu0 0.0
        %1486 = vmatpush1.msra.mxu0 0.0
        %1487 = vmatprep.subr.mxu0 0.0
        %1488 = vmatpush1.msra.mxu0 0.0
        %1489 = vmatprep.subr.mxu0 0.0
        %1490 = vmatpush1.msra.mxu0 0.0
        %1491 = vmatprep.subr.mxu0 0.0
        %1492 = vmatpush1.msra.mxu0 0.0
        %1493 = vmatprep.subr.mxu0 0.0
        %1494 = vmatpush1.msra.mxu0 0.0
        %1495 = vmatprep.subr.mxu0 0.0
        %1496 = vmatpush1.msra.mxu0 0.0
        %1497 = vmatprep.subr.mxu0 0.0
        %1498 = vmatpush1.msra.mxu0 0.0
        %1499 = vmatprep.subr.mxu0 0.0
        %1500 = vmatpush1.msra.mxu0 0.0
        %1501 = vmatprep.mubr.f32.mxu0 0.0
        %1502 = vmatmul.mubr.f32.gmra.mrb[0].mxu0 %v1435
        %v1503 = vpop.f32.mrb[0].mxu0
        %v1504 = vadd.f32 0.0, %v1503
        %v1505 = vpop.f32.mrb[0].mxu0
        %1506 = vdwg.mxu0
        %v1507 = vadd.f32 %v1429, %v1504
        %1508 = vst.msk [vmem:[%s1422] sm:$0xff] %vm1131, %v1507
        %1509 = vst.msk [vmem:[%s1397] sm:$0xff] %vm1230, %v1402
        %v1510 = vld [vmem:[%s268] sm:$0xff]
        %v1511 = vld [vmem:[%s278] sm:$0xff]
        %s1512 = scalar_lea.vmem [#allocation2], 16
        %v1513 = vld [vmem:[%s1512] sm:$0xff]
        %1515 = vrot.lane.b32.xlu0 %v1510, 112
        %v1516 = vpop.permute.xlu0 %1515
        %v1518 = vsel %vm1131, %v1513, 0
        %v1520 = vsel %vm1131, %v1516, 0
        %1522 = vmatprep.subr.mxu0 0.0
        %1523 = vmatpush1.xpose.msra.mxu0 %v1520
        %1524 = vmatprep.subr.mxu0 0.0
        %1525 = vmatpush1.xpose.msra.mxu0 0.0
        %1526 = vmatprep.subr.mxu0 0.0
        %1527 = vmatpush1.xpose.msra.mxu0 0.0
        %1528 = vmatprep.subr.mxu0 0.0
        %1529 = vmatpush1.xpose.msra.mxu0 0.0
        %1530 = vmatprep.subr.mxu0 0.0
        %1531 = vmatpush1.xpose.msra.mxu0 0.0
        %1532 = vmatprep.subr.mxu0 0.0
        %1533 = vmatpush1.xpose.msra.mxu0 0.0
        %1534 = vmatprep.subr.mxu0 0.0
        %1535 = vmatpush1.xpose.msra.mxu0 0.0
        %1536 = vmatprep.subr.mxu0 0.0
        %1537 = vmatpush1.xpose.msra.mxu0 0.0
        %1538 = vmatprep.subr.mxu0 0.0
        %1539 = vmatpush1.xpose.msra.mxu0 0.0
        %1540 = vmatprep.subr.mxu0 0.0
        %1541 = vmatpush1.xpose.msra.mxu0 0.0
        %1542 = vmatprep.subr.mxu0 0.0
        %1543 = vmatpush1.xpose.msra.mxu0 0.0
        %1544 = vmatprep.subr.mxu0 0.0
        %1545 = vmatpush1.xpose.msra.mxu0 0.0
        %1546 = vmatprep.subr.mxu0 0.0
        %1547 = vmatpush1.xpose.msra.mxu0 0.0
        %1548 = vmatprep.subr.mxu0 0.0
        %1549 = vmatpush1.xpose.msra.mxu0 0.0
        %1550 = vmatprep.subr.mxu0 0.0
        %1551 = vmatpush1.xpose.msra.mxu0 0.0
        %1552 = vmatprep.subr.mxu0 0.0
        %1553 = vmatpush1.xpose.msra.mxu0 0.0
        %1554 = vmatprep.subr.mxu0 0.0
        %1555 = vmatpush1.xpose.msra.mxu0 0.0
        %1556 = vmatprep.subr.mxu0 0.0
        %1557 = vmatpush1.xpose.msra.mxu0 0.0
        %1558 = vmatprep.subr.mxu0 0.0
        %1559 = vmatpush1.xpose.msra.mxu0 0.0
        %1560 = vmatprep.subr.mxu0 0.0
        %1561 = vmatpush1.xpose.msra.mxu0 0.0
        %1562 = vmatprep.subr.mxu0 0.0
        %1563 = vmatpush1.xpose.msra.mxu0 0.0
        %1564 = vmatprep.subr.mxu0 0.0
        %1565 = vmatpush1.xpose.msra.mxu0 0.0
        %1566 = vmatprep.subr.mxu0 0.0
        %1567 = vmatpush1.xpose.msra.mxu0 0.0
        %1568 = vmatprep.subr.mxu0 0.0
        %1569 = vmatpush1.xpose.msra.mxu0 0.0
        %1570 = vmatprep.subr.mxu0 0.0
        %1571 = vmatpush1.xpose.msra.mxu0 0.0
        %1572 = vmatprep.subr.mxu0 0.0
        %1573 = vmatpush1.xpose.msra.mxu0 0.0
        %1574 = vmatprep.subr.mxu0 0.0
        %1575 = vmatpush1.xpose.msra.mxu0 0.0
        %1576 = vmatprep.subr.mxu0 0.0
        %1577 = vmatpush1.xpose.msra.mxu0 0.0
        %1578 = vmatprep.subr.mxu0 0.0
        %1579 = vmatpush1.xpose.msra.mxu0 0.0
        %1580 = vmatprep.subr.mxu0 0.0
        %1581 = vmatpush1.xpose.msra.mxu0 0.0
        %1582 = vmatprep.subr.mxu0 0.0
        %1583 = vmatpush1.xpose.msra.mxu0 0.0
        %1584 = vmatprep.subr.mxu0 0.0
        %1585 = vmatpush1.xpose.msra.mxu0 0.0
        %1586 = vmatprep.mubr.f32.mxu0 0.0
        %1587 = vmatmul.mubr.f32.gmra.mrb[0].mxu0 %v1518
        %v1588 = vpop.f32.mrb[0].mxu0
        %v1589 = vadd.f32 0.0, %v1588
        %v1590 = vpop.f32.mrb[0].mxu0
        %1591 = vdwg.mxu0
        %s1592 = scalar_lea.vmem [#allocation3], 16
        %v1593 = vld [vmem:[%s1592] sm:$0xff]
        %v1594 = vsel %vm1131, %v1589, -inf
        %1595 = vmax.xlane.f32.xlu0 %v1594
        %v1596 = vpop.xlane.xlu0 %1595
        %v1597 = vmax.f32 %v1593, %v1596
        %v1598 = vsub.f32 %v1593, %v1597
        %v1599 = vmul.f32 %v1598, 1.442695
        %v1600 = vpow.pop %v1599
        %1602 = vset.pattern.permute.xlu0 0
        %1603 = vperm.xlu0 %1602, %v1597
        %v1604 = vpop.permute.xlu0 %1603
        %v1606 = vsub.f32 %v1589, %v1604
        %v1607 = vmul.f32 %v1606, 1.442695
        %v1608 = vpow.pop %v1607
        %s1609 = scalar_lea.vmem [#allocation4], 16
        %v1610 = vld [vmem:[%s1609] sm:$0xff]
        %v1611 = vmul.f32 %v1600, %v1610
        %v1612 = vsel %vm1131, %v1608, 0.0
        %1613 = vadd.xlane.f32.xlu0 %v1612
        %v1614 = vpop.xlane.xlu0 %1613
        %v1615 = vadd.f32 %v1611, %v1614
        %1616 = vst.msk [vmem:[%s1609] sm:$0xff] %vm1230, %v1615
        %s1617 = scalar_lea.vmem [#allocation5], 16
        %v1618 = vld [vmem:[%s1617] sm:$0xff]
        %1620 = vset.pattern.permute.xlu0 0
        %1621 = vperm.xlu0 %1620, %v1600
        %v1622 = vpop.permute.xlu0 %1621
        %v1624 = vmul.f32 %v1622, %v1618
        %1626 = vrot.lane.b32.xlu0 %v1511, 112
        %v1627 = vpop.permute.xlu0 %1626
        %v1630 = vsel %vm1131, %v1608, 0
        %1632 = vmatprep.subr.mxu0 0.0
        %1633 = vmatpush1.msra.mxu0 %v1627
        %1634 = vmatprep.subr.mxu0 0.0
        %1635 = vmatpush1.msra.mxu0 0.0
        %1636 = vmatprep.subr.mxu0 0.0
        %1637 = vmatpush1.msra.mxu0 0.0
        %1638 = vmatprep.subr.mxu0 0.0
        %1639 = vmatpush1.msra.mxu0 0.0
        %1640 = vmatprep.subr.mxu0 0.0
        %1641 = vmatpush1.msra.mxu0 0.0
        %1642 = vmatprep.subr.mxu0 0.0
        %1643 = vmatpush1.msra.mxu0 0.0
        %1644 = vmatprep.subr.mxu0 0.0
        %1645 = vmatpush1.msra.mxu0 0.0
        %1646 = vmatprep.subr.mxu0 0.0
        %1647 = vmatpush1.msra.mxu0 0.0
        %1648 = vmatprep.subr.mxu0 0.0
        %1649 = vmatpush1.msra.mxu0 0.0
        %1650 = vmatprep.subr.mxu0 0.0
        %1651 = vmatpush1.msra.mxu0 0.0
        %1652 = vmatprep.subr.mxu0 0.0
        %1653 = vmatpush1.msra.mxu0 0.0
        %1654 = vmatprep.subr.mxu0 0.0
        %1655 = vmatpush1.msra.mxu0 0.0
        %1656 = vmatprep.subr.mxu0 0.0
        %1657 = vmatpush1.msra.mxu0 0.0
        %1658 = vmatprep.subr.mxu0 0.0
        %1659 = vmatpush1.msra.mxu0 0.0
        %1660 = vmatprep.subr.mxu0 0.0
        %1661 = vmatpush1.msra.mxu0 0.0
        %1662 = vmatprep.subr.mxu0 0.0
        %1663 = vmatpush1.msra.mxu0 0.0
        %1664 = vmatprep.subr.mxu0 0.0
        %1665 = vmatpush1.msra.mxu0 0.0
        %1666 = vmatprep.subr.mxu0 0.0
        %1667 = vmatpush1.msra.mxu0 0.0
        %1668 = vmatprep.subr.mxu0 0.0
        %1669 = vmatpush1.msra.mxu0 0.0
        %1670 = vmatprep.subr.mxu0 0.0
        %1671 = vmatpush1.msra.mxu0 0.0
        %1672 = vmatprep.subr.mxu0 0.0
        %1673 = vmatpush1.msra.mxu0 0.0
        %1674 = vmatprep.subr.mxu0 0.0
        %1675 = vmatpush1.msra.mxu0 0.0
        %1676 = vmatprep.subr.mxu0 0.0
        %1677 = vmatpush1.msra.mxu0 0.0
        %1678 = vmatprep.subr.mxu0 0.0
        %1679 = vmatpush1.msra.mxu0 0.0
        %1680 = vmatprep.subr.mxu0 0.0
        %1681 = vmatpush1.msra.mxu0 0.0
        %1682 = vmatprep.subr.mxu0 0.0
        %1683 = vmatpush1.msra.mxu0 0.0
        %1684 = vmatprep.subr.mxu0 0.0
        %1685 = vmatpush1.msra.mxu0 0.0
        %1686 = vmatprep.subr.mxu0 0.0
        %1687 = vmatpush1.msra.mxu0 0.0
        %1688 = vmatprep.subr.mxu0 0.0
        %1689 = vmatpush1.msra.mxu0 0.0
        %1690 = vmatprep.subr.mxu0 0.0
        %1691 = vmatpush1.msra.mxu0 0.0
        %1692 = vmatprep.subr.mxu0 0.0
        %1693 = vmatpush1.msra.mxu0 0.0
        %1694 = vmatprep.subr.mxu0 0.0
        %1695 = vmatpush1.msra.mxu0 0.0
        %1696 = vmatprep.mubr.f32.mxu0 0.0
        %1697 = vmatmul.mubr.f32.gmra.mrb[0].mxu0 %v1630
        %v1698 = vpop.f32.mrb[0].mxu0
        %v1699 = vadd.f32 0.0, %v1698
        %v1700 = vpop.f32.mrb[0].mxu0
        %1701 = vdwg.mxu0
        %v1702 = vadd.f32 %v1624, %v1699
        %1703 = vst.msk [vmem:[%s1617] sm:$0xff] %vm1131, %v1702
        %1704 = vst.msk [vmem:[%s1592] sm:$0xff] %vm1230, %v1597
        %v1705 = vld [vmem:[%s268] sm:$0xff]
        %v1706 = vld [vmem:[%s278] sm:$0xff]
        %s1707 = scalar_lea.vmem [#allocation2], 24
        %v1708 = vld [vmem:[%s1707] sm:$0xff]
        %1710 = vrot.lane.b32.xlu0 %v1705, 104
        %v1711 = vpop.permute.xlu0 %1710
        %v1713 = vsel %vm1131, %v1708, 0
        %v1715 = vsel %vm1131, %v1711, 0
        %1717 = vmatprep.subr.mxu0 0.0
        %1718 = vmatpush1.xpose.msra.mxu0 %v1715
        %1719 = vmatprep.subr.mxu0 0.0
        %1720 = vmatpush1.xpose.msra.mxu0 0.0
        %1721 = vmatprep.subr.mxu0 0.0
        %1722 = vmatpush1.xpose.msra.mxu0 0.0
        %1723 = vmatprep.subr.mxu0 0.0
        %1724 = vmatpush1.xpose.msra.mxu0 0.0
        %1725 = vmatprep.subr.mxu0 0.0
        %1726 = vmatpush1.xpose.msra.mxu0 0.0
        %1727 = vmatprep.subr.mxu0 0.0
        %1728 = vmatpush1.xpose.msra.mxu0 0.0
        %1729 = vmatprep.subr.mxu0 0.0
        %1730 = vmatpush1.xpose.msra.mxu0 0.0
        %1731 = vmatprep.subr.mxu0 0.0
        %1732 = vmatpush1.xpose.msra.mxu0 0.0
        %1733 = vmatprep.subr.mxu0 0.0
        %1734 = vmatpush1.xpose.msra.mxu0 0.0
        %1735 = vmatprep.subr.mxu0 0.0
        %1736 = vmatpush1.xpose.msra.mxu0 0.0
        %1737 = vmatprep.subr.mxu0 0.0
        %1738 = vmatpush1.xpose.msra.mxu0 0.0
        %1739 = vmatprep.subr.mxu0 0.0
        %1740 = vmatpush1.xpose.msra.mxu0 0.0
        %1741 = vmatprep.subr.mxu0 0.0
        %1742 = vmatpush1.xpose.msra.mxu0 0.0
        %1743 = vmatprep.subr.mxu0 0.0
        %1744 = vmatpush1.xpose.msra.mxu0 0.0
        %1745 = vmatprep.subr.mxu0 0.0
        %1746 = vmatpush1.xpose.msra.mxu0 0.0
        %1747 = vmatprep.subr.mxu0 0.0
        %1748 = vmatpush1.xpose.msra.mxu0 0.0
        %1749 = vmatprep.subr.mxu0 0.0
        %1750 = vmatpush1.xpose.msra.mxu0 0.0
        %1751 = vmatprep.subr.mxu0 0.0
        %1752 = vmatpush1.xpose.msra.mxu0 0.0
        %1753 = vmatprep.subr.mxu0 0.0
        %1754 = vmatpush1.xpose.msra.mxu0 0.0
        %1755 = vmatprep.subr.mxu0 0.0
        %1756 = vmatpush1.xpose.msra.mxu0 0.0
        %1757 = vmatprep.subr.mxu0 0.0
        %1758 = vmatpush1.xpose.msra.mxu0 0.0
        %1759 = vmatprep.subr.mxu0 0.0
        %1760 = vmatpush1.xpose.msra.mxu0 0.0
        %1761 = vmatprep.subr.mxu0 0.0
        %1762 = vmatpush1.xpose.msra.mxu0 0.0
        %1763 = vmatprep.subr.mxu0 0.0
        %1764 = vmatpush1.xpose.msra.mxu0 0.0
        %1765 = vmatprep.subr.mxu0 0.0
        %1766 = vmatpush1.xpose.msra.mxu0 0.0
        %1767 = vmatprep.subr.mxu0 0.0
        %1768 = vmatpush1.xpose.msra.mxu0 0.0
        %1769 = vmatprep.subr.mxu0 0.0
        %1770 = vmatpush1.xpose.msra.mxu0 0.0
        %1771 = vmatprep.subr.mxu0 0.0
        %1772 = vmatpush1.xpose.msra.mxu0 0.0
        %1773 = vmatprep.subr.mxu0 0.0
        %1774 = vmatpush1.xpose.msra.mxu0 0.0
        %1775 = vmatprep.subr.mxu0 0.0
        %1776 = vmatpush1.xpose.msra.mxu0 0.0
        %1777 = vmatprep.subr.mxu0 0.0
        %1778 = vmatpush1.xpose.msra.mxu0 0.0
        %1779 = vmatprep.subr.mxu0 0.0
        %1780 = vmatpush1.xpose.msra.mxu0 0.0
        %1781 = vmatprep.mubr.f32.mxu0 0.0
        %1782 = vmatmul.mubr.f32.gmra.mrb[0].mxu0 %v1713
        %v1783 = vpop.f32.mrb[0].mxu0
        %v1784 = vadd.f32 0.0, %v1783
        %v1785 = vpop.f32.mrb[0].mxu0
        %1786 = vdwg.mxu0
        %s1787 = scalar_lea.vmem [#allocation3], 24
        %v1788 = vld [vmem:[%s1787] sm:$0xff]
        %v1789 = vsel %vm1131, %v1784, -inf
        %1790 = vmax.xlane.f32.xlu0 %v1789
        %v1791 = vpop.xlane.xlu0 %1790
        %v1792 = vmax.f32 %v1788, %v1791
        %v1793 = vsub.f32 %v1788, %v1792
        %v1794 = vmul.f32 %v1793, 1.442695
        %v1795 = vpow.pop %v1794
        %1797 = vset.pattern.permute.xlu0 0
        %1798 = vperm.xlu0 %1797, %v1792
        %v1799 = vpop.permute.xlu0 %1798
        %v1801 = vsub.f32 %v1784, %v1799
        %v1802 = vmul.f32 %v1801, 1.442695
        %v1803 = vpow.pop %v1802
        %s1804 = scalar_lea.vmem [#allocation4], 24
        %v1805 = vld [vmem:[%s1804] sm:$0xff]
        %v1806 = vmul.f32 %v1795, %v1805
        %v1807 = vsel %vm1131, %v1803, 0.0
        %1808 = vadd.xlane.f32.xlu0 %v1807
        %v1809 = vpop.xlane.xlu0 %1808
        %v1810 = vadd.f32 %v1806, %v1809
        %1811 = vst.msk [vmem:[%s1804] sm:$0xff] %vm1230, %v1810
        %s1812 = scalar_lea.vmem [#allocation5], 24
        %v1813 = vld [vmem:[%s1812] sm:$0xff]
        %1815 = vset.pattern.permute.xlu0 0
        %1816 = vperm.xlu0 %1815, %v1795
        %v1817 = vpop.permute.xlu0 %1816
        %v1819 = vmul.f32 %v1817, %v1813
        %1821 = vrot.lane.b32.xlu0 %v1706, 104
        %v1822 = vpop.permute.xlu0 %1821
        %v1825 = vsel %vm1131, %v1803, 0
        %1827 = vmatprep.subr.mxu0 0.0
        %1828 = vmatpush1.msra.mxu0 %v1822
        %1829 = vmatprep.subr.mxu0 0.0
        %1830 = vmatpush1.msra.mxu0 0.0
        %1831 = vmatprep.subr.mxu0 0.0
        %1832 = vmatpush1.msra.mxu0 0.0
        %1833 = vmatprep.subr.mxu0 0.0
        %1834 = vmatpush1.msra.mxu0 0.0
        %1835 = vmatprep.subr.mxu0 0.0
        %1836 = vmatpush1.msra.mxu0 0.0
        %1837 = vmatprep.subr.mxu0 0.0
        %1838 = vmatpush1.msra.mxu0 0.0
        %1839 = vmatprep.subr.mxu0 0.0
        %1840 = vmatpush1.msra.mxu0 0.0
        %1841 = vmatprep.subr.mxu0 0.0
        %1842 = vmatpush1.msra.mxu0 0.0
        %1843 = vmatprep.subr.mxu0 0.0
        %1844 = vmatpush1.msra.mxu0 0.0
        %1845 = vmatprep.subr.mxu0 0.0
        %1846 = vmatpush1.msra.mxu0 0.0
        %1847 = vmatprep.subr.mxu0 0.0
        %1848 = vmatpush1.msra.mxu0 0.0
        %1849 = vmatprep.subr.mxu0 0.0
        %1850 = vmatpush1.msra.mxu0 0.0
        %1851 = vmatprep.subr.mxu0 0.0
        %1852 = vmatpush1.msra.mxu0 0.0
        %1853 = vmatprep.subr.mxu0 0.0
        %1854 = vmatpush1.msra.mxu0 0.0
        %1855 = vmatprep.subr.mxu0 0.0
        %1856 = vmatpush1.msra.mxu0 0.0
        %1857 = vmatprep.subr.mxu0 0.0
        %1858 = vmatpush1.msra.mxu0 0.0
        %1859 = vmatprep.subr.mxu0 0.0
        %1860 = vmatpush1.msra.mxu0 0.0
        %1861 = vmatprep.subr.mxu0 0.0
        %1862 = vmatpush1.msra.mxu0 0.0
        %1863 = vmatprep.subr.mxu0 0.0
        %1864 = vmatpush1.msra.mxu0 0.0
        %1865 = vmatprep.subr.mxu0 0.0
        %1866 = vmatpush1.msra.mxu0 0.0
        %1867 = vmatprep.subr.mxu0 0.0
        %1868 = vmatpush1.msra.mxu0 0.0
        %1869 = vmatprep.subr.mxu0 0.0
        %1870 = vmatpush1.msra.mxu0 0.0
        %1871 = vmatprep.subr.mxu0 0.0
        %1872 = vmatpush1.msra.mxu0 0.0
        %1873 = vmatprep.subr.mxu0 0.0
        %1874 = vmatpush1.msra.mxu0 0.0
        %1875 = vmatprep.subr.mxu0 0.0
        %1876 = vmatpush1.msra.mxu0 0.0
        %1877 = vmatprep.subr.mxu0 0.0
        %1878 = vmatpush1.msra.mxu0 0.0
        %1879 = vmatprep.subr.mxu0 0.0
        %1880 = vmatpush1.msra.mxu0 0.0
        %1881 = vmatprep.subr.mxu0 0.0
        %1882 = vmatpush1.msra.mxu0 0.0
        %1883 = vmatprep.subr.mxu0 0.0
        %1884 = vmatpush1.msra.mxu0 0.0
        %1885 = vmatprep.subr.mxu0 0.0
        %1886 = vmatpush1.msra.mxu0 0.0
        %1887 = vmatprep.subr.mxu0 0.0
        %1888 = vmatpush1.msra.mxu0 0.0
        %1889 = vmatprep.subr.mxu0 0.0
        %1890 = vmatpush1.msra.mxu0 0.0
        %1891 = vmatprep.mubr.f32.mxu0 0.0
        %1892 = vmatmul.mubr.f32.gmra.mrb[0].mxu0 %v1825
        %v1893 = vpop.f32.mrb[0].mxu0
        %v1894 = vadd.f32 0.0, %v1893
        %v1895 = vpop.f32.mrb[0].mxu0
        %1896 = vdwg.mxu0
        %v1897 = vadd.f32 %v1819, %v1894
        %1898 = vst.msk [vmem:[%s1812] sm:$0xff] %vm1131, %v1897
        %1899 = vst.msk [vmem:[%s1787] sm:$0xff] %vm1230, %v1792
      $region44: #{causal_self_attention.4} parent=31 // pred_fallthru
        _
      %p1900 = scmp.eq.s32.totalorder %s290, %s289
      // Predicated region
      $region45: #{causal_self_attention.4} parent=31 // pred_check
        %p1901 = pneg %p1900
      $region46: #{causal_self_attention.4} parent=31 // pred_check_branch
        %1903 = sbr.rel (%p1901) target = $region48
      $region47: #{causal_self_attention.4} parent=31 // pred_region
        %v1904 = vld [vmem:[#allocation4] sm:$0xff]
        %v1905 = vrcp.pop %v1904
        %v1906 = vld [vmem:[#allocation5] sm:$0xff]
        %1908 = vset.pattern.permute.xlu0 0
        %1909 = vperm.xlu0 %1908, %v1905
        %v1910 = vpop.permute.xlu0 %1909
        %v1912 = vmul.f32 %v1906, %v1910
        %s1913 = scalar_lea.vmem [#allocation4], 8
        %v1914 = vld [vmem:[%s1913] sm:$0xff]
        %v1915 = vrcp.pop %v1914
        %s1916 = scalar_lea.vmem [#allocation5], 8
        %v1917 = vld [vmem:[%s1916] sm:$0xff]
        %1919 = vset.pattern.permute.xlu0 0
        %1920 = vperm.xlu0 %1919, %v1915
        %v1921 = vpop.permute.xlu0 %1920
        %v1923 = vmul.f32 %v1917, %v1921
        %s1924 = scalar_lea.vmem [#allocation4], 16
        %v1925 = vld [vmem:[%s1924] sm:$0xff]
        %v1926 = vrcp.pop %v1925
        %s1927 = scalar_lea.vmem [#allocation5], 16
        %v1928 = vld [vmem:[%s1927] sm:$0xff]
        %1930 = vset.pattern.permute.xlu0 0
        %1931 = vperm.xlu0 %1930, %v1926
        %v1932 = vpop.permute.xlu0 %1931
        %v1934 = vmul.f32 %v1928, %v1932
        %s1935 = scalar_lea.vmem [#allocation4], 24
        %v1936 = vld [vmem:[%s1935] sm:$0xff]
        %v1937 = vrcp.pop %v1936
        %s1938 = scalar_lea.vmem [#allocation5], 24
        %v1939 = vld [vmem:[%s1938] sm:$0xff]
        %1941 = vset.pattern.permute.xlu0 0
        %1942 = vperm.xlu0 %1941, %v1937
        %v1943 = vpop.permute.xlu0 %1942
        %v1945 = vmul.f32 %v1939, %v1943
        %1947 = vrot.lane.b32.xlu0 %v1923, 8
        %v1948 = vpop.permute.xlu0 %1947
        %1951 = vrot.lane.b32.xlu0 %v1934, 16
        %v1952 = vpop.permute.xlu0 %1951
        %1955 = vrot.lane.b32.xlu0 %v1945, 24
        %v1956 = vpop.permute.xlu0 %1955
        %vm1958 = vcmask 64512
        %v1959 = vsel %vm1958, %v1912, %v1948
        %vm1960 = vcmask 130048
        %v1961 = vsel %vm1960, %v1959, %v1952
        %vm1962 = vcmask 195584
        %v1963 = vsel %vm1962, %v1961, %v1956
        %vm1964 = vcmask 261120
        %1965 = vst.msk [vmem:[%s287] sm:$0xff] %vm1964, %v1963
      $region48: #{causal_self_attention.4} parent=31 // pred_fallthru
        _
      %s1966 = sld [smem:[#allocation7 + %s23]]
      %p1967 = scmp.lt.s32.totalorder %s22, 1
      %s1968 = scalar_select %p1967, %s22, 1
      %p1969 = scmp.lt.s32.totalorder %s1966, 0
      %s1970 = scalar_select %p1969, %s1966, 0
      %s1971 = sadd.s32 %s1970, %s1968
      %s1972 = smul.addr %s1971, 8
      %s1973 = scalar_lea.vmem %s5, %s1972
      // Predicated region
      $region49: #{causal_self_attention.4} parent=31 // pred_check
        %p1974 = pneg %p142
      $region50: #{causal_self_attention.4} parent=31 // pred_check_branch
        %1976 = sbr.rel (%p1974) target = $region52
      $region51: #{causal_self_attention.4} parent=31 // pred_region
        %s1977 = sld [smem:[#allocation7 + %s23]]
      $region52: #{causal_self_attention.4} parent=31 // pred_fallthru
        _
    $region32: #{causal_self_attention.4} parent=5 // pred_fallthru
      _
    %p1978 = scmp.le.s32.totalorder 2, %s13
    // Predicated region
    $region53: #{causal_self_attention.4} parent=5 // pred_check
      %p1979 = pneg %p1978
    $region54: #{causal_self_attention.4} parent=5 // pred_check_branch
      %1981 = sbr.rel (%p1979) target = $region56
    $region55: #{causal_self_attention.4} parent=5 // pred_region
      %s1982 = ssub.s32 %s13, 2
      // Predicated region
      $region57: #{causal_self_attention.4} parent=55 // pred_check
        %p1983 = pneg %p148
      $region58: #{causal_self_attention.4} parent=55 // pred_check_branch
        %1985 = sbr.rel (%p1983) target = $region60
      $region59: #{causal_self_attention.4} parent=55 // pred_region
        %s1986 = sld [smem:[#allocation7 + %s25]]
        %p1987 = scmp.lt.s32.totalorder %s24, 1
        %s1988 = scalar_select %p1987, %s24, 1
        %p1989 = scmp.lt.s32.totalorder %s1986, 0
        %s1990 = scalar_select %p1989, %s1986, 0
        %s1991 = sadd.s32 %s1990, %s1988
        %s1992 = smul.addr %s1991, 8
        %s1993 = scalar_lea.vmem %s5, %s1992
      $region60: #{causal_self_attention.4} parent=55 // pred_fallthru
        _
    $region56: #{causal_self_attention.4} parent=5 // pred_fallthru
      _
  $region6: #{causal_self_attention.4} parent=0 // loop_footer
    %s17 = sadd.s32 1, %s13
  $region7: #{causal_self_attention.4} parent=0 // loop_footer_branch
    %12 = sbr.rel target = $region3
  $region8: #{causal_self_attention.4} parent=0 // loop_exit
    _

</llo_original>
